<compile_context>
chip_gen: v6e
topology: v6e:2x2x1
jax: 0.10.0
libtpu: 0.0.40
codegen_flags: <defaults>
</compile_context>

<pallas_src>
import jax
import jax.numpy as jnp
from jax.experimental import pallas as pl
from jax.experimental.pallas import tpu as pltpu

# ----------------------------- config ---------------------------------------
LATENT_DIM = 32
CHANNELS = 4
IMG_SIZE = 16
IMG_FLAT = CHANNELS * IMG_SIZE * IMG_SIZE  # 1024
BN_EPS = 0.8
LEAKY_SLOPE = 0.2
TILE_N = 256                               # output-feature tile of the last Linear
HIDDEN = (128, 256, 512, 1024)


# ----------------------------- kernel ---------------------------------------
def _leaky_relu(x):
    return jnp.where(x > 0, x, LEAKY_SLOPE * x)


def generator_kernel(
    z_ref,
    w1_ref, b1_ref,
    w2_ref, b2_ref, g2_ref, be2_ref,
    w3_ref, b3_ref, g3_ref, be3_ref,
    w4_ref, b4_ref, g4_ref, be4_ref,
    w5_ref, b5_ref,
    out_ref,
):
    def dense(x_f32, w_ref, b_ref):
        # bf16 weights on the MXU, f32 accumulation; bias add in f32.
        return (
            jnp.dot(x_f32.astype(jnp.bfloat16), w_ref[...],
                    preferred_element_type=jnp.float32)
            + b_ref[...]
        )

    def bn_leaky(x, g_ref, be_ref):
        # Fused train-mode BatchNorm1d (biased variance) + LeakyReLU:
        # one pass for sum / sum-of-squares, gamma folded into the rsqrt scale.
        inv_n = 1.0 / x.shape[0]
        s1 = jnp.sum(x, axis=0, keepdims=True)
        s2 = jnp.sum(x * x, axis=0, keepdims=True)
        mean = s1 * inv_n
        var = s2 * inv_n - mean * mean
        scale = jax.lax.rsqrt(var + BN_EPS) * g_ref[...]
        shift = be_ref[...] - mean * scale
        return _leaky_relu(x * scale + shift)

    # Layers 1-4 (recomputed per output tile; cheap at B=8 and keeps every grid
    # step independent so the grid axis can be "parallel" on v7x megacore).
    h = _leaky_relu(dense(z_ref[...], w1_ref, b1_ref))          # (B, 128)
    h = bn_leaky(dense(h, w2_ref, b2_ref), g2_ref, be2_ref)     # (B, 256)
    h = bn_leaky(dense(h, w3_ref, b3_ref), g3_ref, be3_ref)     # (B, 512)
    h = bn_leaky(dense(h, w4_ref, b4_ref), g4_ref, be4_ref)     # (B, 1024)

    # Final Linear -> Tanh on the current output-feature tile (streamed w5/b5).
    out_ref[...] = jnp.tanh(dense(h, w5_ref, b5_ref))           # (B, TILE_N)


# ----------------------------- wrapper ---------------------------------------
def generator_forward(z, params):
    """z: (B, LATENT_DIM) float32 -> img: (B, CHANNELS, IMG_SIZE, IMG_SIZE) float32."""
    B = z.shape[0]
    n_tiles = IMG_FLAT // TILE_N

    args = (
        z,
        params["w1"], params["b1"],
        params["w2"], params["b2"], params["g2"], params["be2"],
        params["w3"], params["b3"], params["g3"], params["be3"],
        params["w4"], params["b4"], params["g4"], params["be4"],
        params["w5"], params["b5"],
    )

    def const_spec(shape):
        # Resident block (fetched once, constant block index across the grid).
        return pl.BlockSpec(shape, lambda n: tuple(0 for _ in shape))

    in_specs = [
        const_spec((B, LATENT_DIM)),                             # z
        const_spec((LATENT_DIM, HIDDEN[0])), const_spec((1, HIDDEN[0])),           # w1,b1
        const_spec((HIDDEN[0], HIDDEN[1])), const_spec((1, HIDDEN[1])),            # w2,b2
        const_spec((1, HIDDEN[1])), const_spec((1, HIDDEN[1])),                    # g2,be2
        const_spec((HIDDEN[1], HIDDEN[2])), const_spec((1, HIDDEN[2])),            # w3,b3
        const_spec((1, HIDDEN[2])), const_spec((1, HIDDEN[2])),                    # g3,be3
        const_spec((HIDDEN[2], HIDDEN[3])), const_spec((1, HIDDEN[3])),            # w4,b4
        const_spec((1, HIDDEN[3])), const_spec((1, HIDDEN[3])),                    # g4,be4
        pl.BlockSpec((HIDDEN[3], TILE_N), lambda n: (0, n)),                       # w5 (streamed)
        pl.BlockSpec((1, TILE_N), lambda n: (0, n)),                               # b5 (streamed)
    ]
    out_spec = pl.BlockSpec((B, TILE_N), lambda n: (0, n))

    # Advisory cost model for XLA scheduling around the custom call.
    matmul_flops = 2 * B * (
        LATENT_DIM * HIDDEN[0] + HIDDEN[0] * HIDDEN[1] + HIDDEN[1] * HIDDEN[2]
        + HIDDEN[2] * HIDDEN[3] + HIDDEN[3] * IMG_FLAT
    )
    weight_bytes = 2 * (  # bf16 weights
        LATENT_DIM * HIDDEN[0] + HIDDEN[0] * HIDDEN[1] + HIDDEN[1] * HIDDEN[2]
        + HIDDEN[2] * HIDDEN[3] + HIDDEN[3] * IMG_FLAT
    )
    small_bytes = 4 * (sum(HIDDEN) + IMG_FLAT + 2 * (HIDDEN[1] + HIDDEN[2] + HIDDEN[3]))
    io_bytes = 4 * B * (LATENT_DIM + IMG_FLAT)
    cost = pl.CostEstimate(
        flops=matmul_flops,
        transcendentals=B * IMG_FLAT + (HIDDEN[1] + HIDDEN[2] + HIDDEN[3]),
        bytes_accessed=weight_bytes + small_bytes + io_bytes,
    )

    flat = pl.pallas_call(
        generator_kernel,
        out_shape=jax.ShapeDtypeStruct((B, IMG_FLAT), jnp.float32),
        grid=(n_tiles,),
        in_specs=in_specs,
        out_specs=out_spec,
        compiler_params=pltpu.CompilerParams(
            dimension_semantics=("parallel",),
            vmem_limit_bytes=24 << 20,
        ),
        cost_estimate=cost,
    )(*args)

    # img.view(B, C, H, W)  (NCHW, same as PyTorch)
    return flat.reshape(B, CHANNELS, IMG_SIZE, IMG_SIZE)


def init_params(key):
    """Deterministic init. Linear weights stored (in, out) in bf16; biases/BN in f32."""
    dims = [LATENT_DIM, *HIDDEN, IMG_FLAT]
    keys = jax.random.split(key, 10)
    params = {}

    def linear(kw, kb, fan_in, fan_out):
        # PyTorch default: U(-1/sqrt(fan_in), 1/sqrt(fan_in))
        bound = 1.0 / jnp.sqrt(jnp.float32(fan_in))
        w = jax.random.uniform(kw, (fan_in, fan_out), jnp.float32, -bound, bound)
        b = jax.random.uniform(kb, (1, fan_out), jnp.float32, -bound, bound)
        return w.astype(jnp.bfloat16), b  # weights bf16 (bandwidth), bias f32

    params["w1"], params["b1"] = linear(keys[0], keys[1], dims[0], dims[1])
    params["w2"], params["b2"] = linear(keys[2], keys[3], dims[1], dims[2])
    params["w3"], params["b3"] = linear(keys[4], keys[5], dims[2], dims[3])
    params["w4"], params["b4"] = linear(keys[6], keys[7], dims[3], dims[4])
    params["w5"], params["b5"] = linear(keys[8], keys[9], dims[4], dims[5])

    # BatchNorm affine params (PyTorch default init: gamma=1, beta=0)
    for name, n in (("2", HIDDEN[1]), ("3", HIDDEN[2]), ("4", HIDDEN[3])):
        params["g" + name] = jnp.ones((1, n), jnp.float32)
        params["be" + name] = jnp.zeros((1, n), jnp.float32)
    return params


if __name__ == "__main__":
    key = jax.random.PRNGKey(0)
    k_params, k_z = jax.random.split(key)
    params = init_params(k_params)

    B = 8  # batch > 1 required for meaningful train-mode BatchNorm; 8 = f32 sublane tile
    z = jax.random.normal(k_z, (B, LATENT_DIM), jnp.float32)

    img = generator_forward(z, params)
    img = jax.block_until_ready(img)

    assert img.shape == (B, CHANNELS, IMG_SIZE, IMG_SIZE), img.shape
    assert img.dtype == jnp.float32
    assert bool(jnp.all(jnp.isfinite(img)))
    assert bool(jnp.all(jnp.abs(img) <= 1.0))  # tanh output range

    print("KERNEL_OK")
</pallas_src>

<mosaic_0001>
module attributes {stable_mosaic.version = 11 : i64} {
  func.func @generator_kernel(%arg0: i32, %arg1: memref<8x32xf32, #tpu.memory_space<vmem>>, %arg2: memref<32x128xbf16, #tpu.memory_space<vmem>>, %arg3: memref<1x128xf32, #tpu.memory_space<vmem>>, %arg4: memref<128x256xbf16, #tpu.memory_space<vmem>>, %arg5: memref<1x256xf32, #tpu.memory_space<vmem>>, %arg6: memref<1x256xf32, #tpu.memory_space<vmem>>, %arg7: memref<1x256xf32, #tpu.memory_space<vmem>>, %arg8: memref<256x512xbf16, #tpu.memory_space<vmem>>, %arg9: memref<1x512xf32, #tpu.memory_space<vmem>>, %arg10: memref<1x512xf32, #tpu.memory_space<vmem>>, %arg11: memref<1x512xf32, #tpu.memory_space<vmem>>, %arg12: memref<512x1024xbf16, #tpu.memory_space<vmem>>, %arg13: memref<1x1024xf32, #tpu.memory_space<vmem>>, %arg14: memref<1x1024xf32, #tpu.memory_space<vmem>>, %arg15: memref<1x1024xf32, #tpu.memory_space<vmem>>, %arg16: memref<1024x256xbf16, #tpu.memory_space<vmem>>, %arg17: memref<1x256xf32, #tpu.memory_space<vmem>>, %arg18: memref<8x256xf32, #tpu.memory_space<vmem>>) attributes {dimension_semantics = [#tpu.dimension_semantics<parallel>], iteration_bounds = array<i64: 4>, scalar_prefetch = 0 : i64, scratch_operands = 0 : i64, tpu.core_type = #tpu.core_type<tc>, window_params = [{pipeline_mode = #tpu.pipeline_mode<synchronous>, transform_indices = @transform_0, window_bounds = array<i64: 8, 32>}, {pipeline_mode = #tpu.pipeline_mode<synchronous>, transform_indices = @transform_1, window_bounds = array<i64: 32, 128>}, {pipeline_mode = #tpu.pipeline_mode<synchronous>, transform_indices = @transform_2, window_bounds = array<i64: 1, 128>}, {pipeline_mode = #tpu.pipeline_mode<synchronous>, transform_indices = @transform_3, window_bounds = array<i64: 128, 256>}, {pipeline_mode = #tpu.pipeline_mode<synchronous>, transform_indices = @transform_4, window_bounds = array<i64: 1, 256>}, {pipeline_mode = #tpu.pipeline_mode<synchronous>, transform_indices = @transform_5, window_bounds = array<i64: 1, 256>}, {pipeline_mode = #tpu.pipeline_mode<synchronous>, transform_indices = @transform_6, window_bounds = array<i64: 1, 256>}, {pipeline_mode = #tpu.pipeline_mode<synchronous>, transform_indices = @transform_7, window_bounds = array<i64: 256, 512>}, {pipeline_mode = #tpu.pipeline_mode<synchronous>, transform_indices = @transform_8, window_bounds = array<i64: 1, 512>}, {pipeline_mode = #tpu.pipeline_mode<synchronous>, transform_indices = @transform_9, window_bounds = array<i64: 1, 512>}, {pipeline_mode = #tpu.pipeline_mode<synchronous>, transform_indices = @transform_10, window_bounds = array<i64: 1, 512>}, {pipeline_mode = #tpu.pipeline_mode<synchronous>, transform_indices = @transform_11, window_bounds = array<i64: 512, 1024>}, {pipeline_mode = #tpu.pipeline_mode<synchronous>, transform_indices = @transform_12, window_bounds = array<i64: 1, 1024>}, {pipeline_mode = #tpu.pipeline_mode<synchronous>, transform_indices = @transform_13, window_bounds = array<i64: 1, 1024>}, {pipeline_mode = #tpu.pipeline_mode<synchronous>, transform_indices = @transform_14, window_bounds = array<i64: 1, 1024>}, {transform_indices = @transform_15, window_bounds = array<i64: 1024, 256>}, {transform_indices = @transform_16, window_bounds = array<i64: 1, 256>}, {transform_indices = @transform_17, window_bounds = array<i64: 8, 256>}]} {
    %c0 = arith.constant 0 : index
    %c0_0 = arith.constant 0 : index
    %0 = vector.load %arg1[%c0, %c0_0] : memref<8x32xf32, #tpu.memory_space<vmem>>, vector<8x32xf32>
    %1 = arith.truncf %0 : vector<8x32xf32> to vector<8x32xbf16>
    %c0_1 = arith.constant 0 : index
    %c0_2 = arith.constant 0 : index
    %2 = vector.load %arg2[%c0_1, %c0_2] : memref<32x128xbf16, #tpu.memory_space<vmem>>, vector<32x128xbf16>
    %cst = arith.constant dense<0.000000e+00> : vector<8x128xf32>
    %3 = tpu.matmul %1, %2, %cst {dimension_numbers = #tpu.dot_dimension_numbers<[1], [0], [0], [1], [0, 0, 1, 1], [], []>} : vector<8x32xbf16>, vector<32x128xbf16>, vector<8x128xf32> -> vector<8x128xf32>
    %c0_3 = arith.constant 0 : index
    %c0_4 = arith.constant 0 : index
    %4 = vector.load %arg3[%c0_3, %c0_4] : memref<1x128xf32, #tpu.memory_space<vmem>>, vector<1x128xf32>
    %5 = vector.broadcast %4 : vector<1x128xf32> to vector<8x128xf32>
    %6 = arith.addf %3, %5 : vector<8x128xf32>
    %cst_5 = arith.constant 0.000000e+00 : f32
    %7 = vector.broadcast %cst_5 : f32 to vector<8x128xf32>
    %8 = arith.cmpf ogt, %6, %7 : vector<8x128xf32>
    %cst_6 = arith.constant 2.000000e-01 : f32
    %9 = vector.broadcast %cst_6 : f32 to vector<8x128xf32>
    %10 = arith.mulf %9, %6 : vector<8x128xf32>
    %11 = arith.select %8, %6, %10 : vector<8x128xi1>, vector<8x128xf32>
    %12 = arith.truncf %11 : vector<8x128xf32> to vector<8x128xbf16>
    %c0_7 = arith.constant 0 : index
    %c0_8 = arith.constant 0 : index
    %13 = vector.load %arg4[%c0_7, %c0_8] : memref<128x256xbf16, #tpu.memory_space<vmem>>, vector<128x256xbf16>
    %cst_9 = arith.constant dense<0.000000e+00> : vector<8x256xf32>
    %14 = tpu.matmul %12, %13, %cst_9 {dimension_numbers = #tpu.dot_dimension_numbers<[1], [0], [0], [1], [0, 0, 1, 1], [], []>} : vector<8x128xbf16>, vector<128x256xbf16>, vector<8x256xf32> -> vector<8x256xf32>
    %c0_10 = arith.constant 0 : index
    %c0_11 = arith.constant 0 : index
    %15 = vector.load %arg5[%c0_10, %c0_11] : memref<1x256xf32, #tpu.memory_space<vmem>>, vector<1x256xf32>
    %16 = vector.broadcast %15 : vector<1x256xf32> to vector<8x256xf32>
    %17 = arith.addf %14, %16 : vector<8x256xf32>
    %cst_12 = arith.constant dense<0.000000e+00> : vector<256xf32>
    %18 = vector.multi_reduction <add>, %17, %cst_12 [0] : vector<8x256xf32> to vector<256xf32>
    %19 = vector.shape_cast %18 : vector<256xf32> to vector<1x256xf32>
    %20 = arith.mulf %17, %17 : vector<8x256xf32>
    %cst_13 = arith.constant dense<0.000000e+00> : vector<256xf32>
    %21 = vector.multi_reduction <add>, %20, %cst_13 [0] : vector<8x256xf32> to vector<256xf32>
    %22 = vector.shape_cast %21 : vector<256xf32> to vector<1x256xf32>
    %cst_14 = arith.constant 1.250000e-01 : f32
    %23 = vector.broadcast %cst_14 : f32 to vector<1x256xf32>
    %24 = arith.mulf %19, %23 : vector<1x256xf32>
    %cst_15 = arith.constant 1.250000e-01 : f32
    %25 = vector.broadcast %cst_15 : f32 to vector<1x256xf32>
    %26 = arith.mulf %22, %25 : vector<1x256xf32>
    %27 = arith.mulf %24, %24 : vector<1x256xf32>
    %28 = arith.subf %26, %27 : vector<1x256xf32>
    %cst_16 = arith.constant 8.000000e-01 : f32
    %29 = vector.broadcast %cst_16 : f32 to vector<1x256xf32>
    %30 = arith.addf %28, %29 : vector<1x256xf32>
    %31 = math.rsqrt %30 : vector<1x256xf32>
    %c0_17 = arith.constant 0 : index
    %c0_18 = arith.constant 0 : index
    %32 = vector.load %arg6[%c0_17, %c0_18] : memref<1x256xf32, #tpu.memory_space<vmem>>, vector<1x256xf32>
    %33 = arith.mulf %31, %32 : vector<1x256xf32>
    %c0_19 = arith.constant 0 : index
    %c0_20 = arith.constant 0 : index
    %34 = vector.load %arg7[%c0_19, %c0_20] : memref<1x256xf32, #tpu.memory_space<vmem>>, vector<1x256xf32>
    %35 = arith.mulf %24, %33 : vector<1x256xf32>
    %36 = arith.subf %34, %35 : vector<1x256xf32>
    %37 = vector.broadcast %33 : vector<1x256xf32> to vector<8x256xf32>
    %38 = arith.mulf %17, %37 : vector<8x256xf32>
    %39 = vector.broadcast %36 : vector<1x256xf32> to vector<8x256xf32>
    %40 = arith.addf %38, %39 : vector<8x256xf32>
    %cst_21 = arith.constant 0.000000e+00 : f32
    %41 = vector.broadcast %cst_21 : f32 to vector<8x256xf32>
    %42 = arith.cmpf ogt, %40, %41 : vector<8x256xf32>
    %cst_22 = arith.constant 2.000000e-01 : f32
    %43 = vector.broadcast %cst_22 : f32 to vector<8x256xf32>
    %44 = arith.mulf %43, %40 : vector<8x256xf32>
    %45 = arith.select %42, %40, %44 : vector<8x256xi1>, vector<8x256xf32>
    %46 = arith.truncf %45 : vector<8x256xf32> to vector<8x256xbf16>
    %c0_23 = arith.constant 0 : index
    %c0_24 = arith.constant 0 : index
    %47 = vector.load %arg8[%c0_23, %c0_24] : memref<256x512xbf16, #tpu.memory_space<vmem>>, vector<256x512xbf16>
    %cst_25 = arith.constant dense<0.000000e+00> : vector<8x512xf32>
    %48 = tpu.matmul %46, %47, %cst_25 {dimension_numbers = #tpu.dot_dimension_numbers<[1], [0], [0], [1], [0, 0, 1, 1], [], []>} : vector<8x256xbf16>, vector<256x512xbf16>, vector<8x512xf32> -> vector<8x512xf32>
    %c0_26 = arith.constant 0 : index
    %c0_27 = arith.constant 0 : index
    %49 = vector.load %arg9[%c0_26, %c0_27] : memref<1x512xf32, #tpu.memory_space<vmem>>, vector<1x512xf32>
    %50 = vector.broadcast %49 : vector<1x512xf32> to vector<8x512xf32>
    %51 = arith.addf %48, %50 : vector<8x512xf32>
    %cst_28 = arith.constant dense<0.000000e+00> : vector<512xf32>
    %52 = vector.multi_reduction <add>, %51, %cst_28 [0] : vector<8x512xf32> to vector<512xf32>
    %53 = vector.shape_cast %52 : vector<512xf32> to vector<1x512xf32>
    %54 = arith.mulf %51, %51 : vector<8x512xf32>
    %cst_29 = arith.constant dense<0.000000e+00> : vector<512xf32>
    %55 = vector.multi_reduction <add>, %54, %cst_29 [0] : vector<8x512xf32> to vector<512xf32>
    %56 = vector.shape_cast %55 : vector<512xf32> to vector<1x512xf32>
    %cst_30 = arith.constant 1.250000e-01 : f32
    %57 = vector.broadcast %cst_30 : f32 to vector<1x512xf32>
    %58 = arith.mulf %53, %57 : vector<1x512xf32>
    %cst_31 = arith.constant 1.250000e-01 : f32
    %59 = vector.broadcast %cst_31 : f32 to vector<1x512xf32>
    %60 = arith.mulf %56, %59 : vector<1x512xf32>
    %61 = arith.mulf %58, %58 : vector<1x512xf32>
    %62 = arith.subf %60, %61 : vector<1x512xf32>
    %cst_32 = arith.constant 8.000000e-01 : f32
    %63 = vector.broadcast %cst_32 : f32 to vector<1x512xf32>
    %64 = arith.addf %62, %63 : vector<1x512xf32>
    %65 = math.rsqrt %64 : vector<1x512xf32>
    %c0_33 = arith.constant 0 : index
    %c0_34 = arith.constant 0 : index
    %66 = vector.load %arg10[%c0_33, %c0_34] : memref<1x512xf32, #tpu.memory_space<vmem>>, vector<1x512xf32>
    %67 = arith.mulf %65, %66 : vector<1x512xf32>
    %c0_35 = arith.constant 0 : index
    %c0_36 = arith.constant 0 : index
    %68 = vector.load %arg11[%c0_35, %c0_36] : memref<1x512xf32, #tpu.memory_space<vmem>>, vector<1x512xf32>
    %69 = arith.mulf %58, %67 : vector<1x512xf32>
    %70 = arith.subf %68, %69 : vector<1x512xf32>
    %71 = vector.broadcast %67 : vector<1x512xf32> to vector<8x512xf32>
    %72 = arith.mulf %51, %71 : vector<8x512xf32>
    %73 = vector.broadcast %70 : vector<1x512xf32> to vector<8x512xf32>
    %74 = arith.addf %72, %73 : vector<8x512xf32>
    %cst_37 = arith.constant 0.000000e+00 : f32
    %75 = vector.broadcast %cst_37 : f32 to vector<8x512xf32>
    %76 = arith.cmpf ogt, %74, %75 : vector<8x512xf32>
    %cst_38 = arith.constant 2.000000e-01 : f32
    %77 = vector.broadcast %cst_38 : f32 to vector<8x512xf32>
    %78 = arith.mulf %77, %74 : vector<8x512xf32>
    %79 = arith.select %76, %74, %78 : vector<8x512xi1>, vector<8x512xf32>
    %80 = arith.truncf %79 : vector<8x512xf32> to vector<8x512xbf16>
    %c0_39 = arith.constant 0 : index
    %c0_40 = arith.constant 0 : index
    %81 = vector.load %arg12[%c0_39, %c0_40] : memref<512x1024xbf16, #tpu.memory_space<vmem>>, vector<512x1024xbf16>
    %cst_41 = arith.constant dense<0.000000e+00> : vector<8x1024xf32>
    %82 = tpu.matmul %80, %81, %cst_41 {dimension_numbers = #tpu.dot_dimension_numbers<[1], [0], [0], [1], [0, 0, 1, 1], [], []>} : vector<8x512xbf16>, vector<512x1024xbf16>, vector<8x1024xf32> -> vector<8x1024xf32>
    %c0_42 = arith.constant 0 : index
    %c0_43 = arith.constant 0 : index
    %83 = vector.load %arg13[%c0_42, %c0_43] : memref<1x1024xf32, #tpu.memory_space<vmem>>, vector<1x1024xf32>
    %84 = vector.broadcast %83 : vector<1x1024xf32> to vector<8x1024xf32>
    %85 = arith.addf %82, %84 : vector<8x1024xf32>
    %cst_44 = arith.constant dense<0.000000e+00> : vector<1024xf32>
    %86 = vector.multi_reduction <add>, %85, %cst_44 [0] : vector<8x1024xf32> to vector<1024xf32>
    %87 = vector.shape_cast %86 : vector<1024xf32> to vector<1x1024xf32>
    %88 = arith.mulf %85, %85 : vector<8x1024xf32>
    %cst_45 = arith.constant dense<0.000000e+00> : vector<1024xf32>
    %89 = vector.multi_reduction <add>, %88, %cst_45 [0] : vector<8x1024xf32> to vector<1024xf32>
    %90 = vector.shape_cast %89 : vector<1024xf32> to vector<1x1024xf32>
    %cst_46 = arith.constant 1.250000e-01 : f32
    %91 = vector.broadcast %cst_46 : f32 to vector<1x1024xf32>
    %92 = arith.mulf %87, %91 : vector<1x1024xf32>
    %cst_47 = arith.constant 1.250000e-01 : f32
    %93 = vector.broadcast %cst_47 : f32 to vector<1x1024xf32>
    %94 = arith.mulf %90, %93 : vector<1x1024xf32>
    %95 = arith.mulf %92, %92 : vector<1x1024xf32>
    %96 = arith.subf %94, %95 : vector<1x1024xf32>
    %cst_48 = arith.constant 8.000000e-01 : f32
    %97 = vector.broadcast %cst_48 : f32 to vector<1x1024xf32>
    %98 = arith.addf %96, %97 : vector<1x1024xf32>
    %99 = math.rsqrt %98 : vector<1x1024xf32>
    %c0_49 = arith.constant 0 : index
    %c0_50 = arith.constant 0 : index
    %100 = vector.load %arg14[%c0_49, %c0_50] : memref<1x1024xf32, #tpu.memory_space<vmem>>, vector<1x1024xf32>
    %101 = arith.mulf %99, %100 : vector<1x1024xf32>
    %c0_51 = arith.constant 0 : index
    %c0_52 = arith.constant 0 : index
    %102 = vector.load %arg15[%c0_51, %c0_52] : memref<1x1024xf32, #tpu.memory_space<vmem>>, vector<1x1024xf32>
    %103 = arith.mulf %92, %101 : vector<1x1024xf32>
    %104 = arith.subf %102, %103 : vector<1x1024xf32>
    %105 = vector.broadcast %101 : vector<1x1024xf32> to vector<8x1024xf32>
    %106 = arith.mulf %85, %105 : vector<8x1024xf32>
    %107 = vector.broadcast %104 : vector<1x1024xf32> to vector<8x1024xf32>
    %108 = arith.addf %106, %107 : vector<8x1024xf32>
    %cst_53 = arith.constant 0.000000e+00 : f32
    %109 = vector.broadcast %cst_53 : f32 to vector<8x1024xf32>
    %110 = arith.cmpf ogt, %108, %109 : vector<8x1024xf32>
    %cst_54 = arith.constant 2.000000e-01 : f32
    %111 = vector.broadcast %cst_54 : f32 to vector<8x1024xf32>
    %112 = arith.mulf %111, %108 : vector<8x1024xf32>
    %113 = arith.select %110, %108, %112 : vector<8x1024xi1>, vector<8x1024xf32>
    %114 = arith.truncf %113 : vector<8x1024xf32> to vector<8x1024xbf16>
    %c0_55 = arith.constant 0 : index
    %c0_56 = arith.constant 0 : index
    %115 = vector.load %arg16[%c0_55, %c0_56] : memref<1024x256xbf16, #tpu.memory_space<vmem>>, vector<1024x256xbf16>
    %cst_57 = arith.constant dense<0.000000e+00> : vector<8x256xf32>
    %116 = tpu.matmul %114, %115, %cst_57 {dimension_numbers = #tpu.dot_dimension_numbers<[1], [0], [0], [1], [0, 0, 1, 1], [], []>} : vector<8x1024xbf16>, vector<1024x256xbf16>, vector<8x256xf32> -> vector<8x256xf32>
    %c0_58 = arith.constant 0 : index
    %c0_59 = arith.constant 0 : index
    %117 = vector.load %arg17[%c0_58, %c0_59] : memref<1x256xf32, #tpu.memory_space<vmem>>, vector<1x256xf32>
    %118 = vector.broadcast %117 : vector<1x256xf32> to vector<8x256xf32>
    %119 = arith.addf %116, %118 : vector<8x256xf32>
    %120 = math.tanh %119 : vector<8x256xf32>
    %c0_60 = arith.constant 0 : index
    %c0_61 = arith.constant 0 : index
    %121 = vector.load %arg18[%c0_60, %c0_61] : memref<8x256xf32, #tpu.memory_space<vmem>>, vector<8x256xf32>
    tpu.vector_store %arg18[%c0_60, %c0_61], %120 {strides = array<i32>} : memref<8x256xf32, #tpu.memory_space<vmem>>, vector<8x256xf32>,
    return
  }
  func.func @transform_0(%arg0: i32) -> (i32, i32) {
    %c0_i32 = arith.constant 0 : i32
    %c0_i32_0 = arith.constant 0 : i32
    %c0_i32_1 = arith.constant 0 : i32
    return %c0_i32, %c0_i32_0 : i32, i32
  }
  func.func @transform_1(%arg0: i32) -> (i32, i32) {
    %c0_i32 = arith.constant 0 : i32
    %c0_i32_0 = arith.constant 0 : i32
    %c0_i32_1 = arith.constant 0 : i32
    return %c0_i32, %c0_i32_0 : i32, i32
  }
  func.func @transform_2(%arg0: i32) -> (i32, i32) {
    %c0_i32 = arith.constant 0 : i32
    %c0_i32_0 = arith.constant 0 : i32
    %c0_i32_1 = arith.constant 0 : i32
    return %c0_i32, %c0_i32_0 : i32, i32
  }
  func.func @transform_3(%arg0: i32) -> (i32, i32) {
    %c0_i32 = arith.constant 0 : i32
    %c0_i32_0 = arith.constant 0 : i32
    %c0_i32_1 = arith.constant 0 : i32
    return %c0_i32, %c0_i32_0 : i32, i32
  }
  func.func @transform_4(%arg0: i32) -> (i32, i32) {
    %c0_i32 = arith.constant 0 : i32
    %c0_i32_0 = arith.constant 0 : i32
    %c0_i32_1 = arith.constant 0 : i32
    return %c0_i32, %c0_i32_0 : i32, i32
  }
  func.func @transform_5(%arg0: i32) -> (i32, i32) {
    %c0_i32 = arith.constant 0 : i32
    %c0_i32_0 = arith.constant 0 : i32
    %c0_i32_1 = arith.constant 0 : i32
    return %c0_i32, %c0_i32_0 : i32, i32
  }
  func.func @transform_6(%arg0: i32) -> (i32, i32) {
    %c0_i32 = arith.constant 0 : i32
    %c0_i32_0 = arith.constant 0 : i32
    %c0_i32_1 = arith.constant 0 : i32
    return %c0_i32, %c0_i32_0 : i32, i32
  }
  func.func @transform_7(%arg0: i32) -> (i32, i32) {
    %c0_i32 = arith.constant 0 : i32
    %c0_i32_0 = arith.constant 0 : i32
    %c0_i32_1 = arith.constant 0 : i32
    return %c0_i32, %c0_i32_0 : i32, i32
  }
  func.func @transform_8(%arg0: i32) -> (i32, i32) {
    %c0_i32 = arith.constant 0 : i32
    %c0_i32_0 = arith.constant 0 : i32
    %c0_i32_1 = arith.constant 0 : i32
    return %c0_i32, %c0_i32_0 : i32, i32
  }
  func.func @transform_9(%arg0: i32) -> (i32, i32) {
    %c0_i32 = arith.constant 0 : i32
    %c0_i32_0 = arith.constant 0 : i32
    %c0_i32_1 = arith.constant 0 : i32
    return %c0_i32, %c0_i32_0 : i32, i32
  }
  func.func @transform_10(%arg0: i32) -> (i32, i32) {
    %c0_i32 = arith.constant 0 : i32
    %c0_i32_0 = arith.constant 0 : i32
    %c0_i32_1 = arith.constant 0 : i32
    return %c0_i32, %c0_i32_0 : i32, i32
  }
  func.func @transform_11(%arg0: i32) -> (i32, i32) {
    %c0_i32 = arith.constant 0 : i32
    %c0_i32_0 = arith.constant 0 : i32
    %c0_i32_1 = arith.constant 0 : i32
    return %c0_i32, %c0_i32_0 : i32, i32
  }
  func.func @transform_12(%arg0: i32) -> (i32, i32) {
    %c0_i32 = arith.constant 0 : i32
    %c0_i32_0 = arith.constant 0 : i32
    %c0_i32_1 = arith.constant 0 : i32
    return %c0_i32, %c0_i32_0 : i32, i32
  }
  func.func @transform_13(%arg0: i32) -> (i32, i32) {
    %c0_i32 = arith.constant 0 : i32
    %c0_i32_0 = arith.constant 0 : i32
    %c0_i32_1 = arith.constant 0 : i32
    return %c0_i32, %c0_i32_0 : i32, i32
  }
  func.func @transform_14(%arg0: i32) -> (i32, i32) {
    %c0_i32 = arith.constant 0 : i32
    %c0_i32_0 = arith.constant 0 : i32
    %c0_i32_1 = arith.constant 0 : i32
    return %c0_i32, %c0_i32_0 : i32, i32
  }
  func.func @transform_15(%arg0: i32) -> (i32, i32) {
    %c0_i32 = arith.constant 0 : i32
    %c0_i32_0 = arith.constant 0 : i32
    return %c0_i32, %arg0 : i32, i32
  }
  func.func @transform_16(%arg0: i32) -> (i32, i32) {
    %c0_i32 = arith.constant 0 : i32
    %c0_i32_0 = arith.constant 0 : i32
    return %c0_i32, %arg0 : i32, i32
  }
  func.func @transform_17(%arg0: i32) -> (i32, i32) {
    %c0_i32 = arith.constant 0 : i32
    %c0_i32_0 = arith.constant 0 : i32
    return %c0_i32, %arg0 : i32, i32
  }
}

</mosaic_0001>

<llo_original>
// kernel: tpu_custom_call.1
$region0: #{tpu_custom_call.1}
  #allocation0 [shape = 'u32[]', space=smem, size = 0x4, offset = 0x4, fixed_abs, tag = 'smem constant byte address 0x4 - core index']
  #allocation1 [shape = 'u32[144,128]{1,0:T(1,128)}', space=vmem, size = 0x12000, scoped, tag = 'internal scratch']
  %s0 = inlined_call_operand.hbm [shape: f32[8,32], index: 0, kind: input, shape index: {}]
  %s1 = inlined_call_operand.hbm [shape: bf16[32,128], index: 1, kind: input, shape index: {}]
  %s2 = inlined_call_operand.hbm [shape: f32[1,128], index: 2, kind: input, shape index: {}]
  %s3 = inlined_call_operand.hbm [shape: bf16[128,256], index: 3, kind: input, shape index: {}]
  %s4 = inlined_call_operand.hbm [shape: f32[1,256], index: 4, kind: input, shape index: {}]
  %s5 = inlined_call_operand.hbm [shape: f32[1,256], index: 5, kind: input, shape index: {}]
  %s6 = inlined_call_operand.hbm [shape: f32[1,256], index: 6, kind: input, shape index: {}]
  %s7 = inlined_call_operand.hbm [shape: bf16[256,512], index: 7, kind: input, shape index: {}]
  %s8 = inlined_call_operand.hbm [shape: f32[1,512], index: 8, kind: input, shape index: {}]
  %s9 = inlined_call_operand.hbm [shape: f32[1,512], index: 9, kind: input, shape index: {}]
  %s10 = inlined_call_operand.hbm [shape: f32[1,512], index: 10, kind: input, shape index: {}]
  %s11 = inlined_call_operand.hbm [shape: bf16[512,1024], index: 11, kind: input, shape index: {}]
  %s12 = inlined_call_operand.hbm [shape: f32[1,1024], index: 12, kind: input, shape index: {}]
  %s13 = inlined_call_operand.hbm [shape: f32[1,1024], index: 13, kind: input, shape index: {}]
  %s14 = inlined_call_operand.hbm [shape: f32[1,1024], index: 14, kind: input, shape index: {}]
  %s15 = inlined_call_operand.hbm [shape: bf16[1024,1024], index: 15, kind: input, shape index: {}]
  %s16 = inlined_call_operand.hbm [shape: f32[1,1024], index: 16, kind: input, shape index: {}]
  %s17 = inlined_call_operand.hbm [shape: f32[8,1024], index: 17, kind: output, shape index: {}]
  %s18 = sld [smem:[#allocation0]]
  $region169: #{tpu_custom_call.1} parent=0
    _
  %s20 = ssub.s32 1, %s18
  %s21 = scalar_select 0, %s20, %s18
  $region1: #{tpu_custom_call.1} parent=0
    #allocation2 [shape = 'u8[4096]{0}', space=vmem, size = 0x1000, scoped, tag = 'input window, operand 0, single buffered']
    #allocation3 [shape = 's32[2]{0}', space=sflag, size = 0x8, scoped, tag = 'scoped memory for tpu_custom_call.1']
    #allocation4 [shape = 's32[2]{0}', space=sflag, size = 0x8, scoped, tag = 'scoped memory for tpu_custom_call.1']
    #allocation5 [shape = 'u8[8192]{0}', space=vmem, size = 0x2000, scoped, tag = 'input window, operand 1, single buffered']
    #allocation6 [shape = 's32[1]{0}', space=sflag, size = 0x4, scoped, tag = 'scoped memory for tpu_custom_call.1']
    #allocation7 [shape = 'u8[512]{0}', space=vmem, size = 0x400, scoped, tag = 'input window, operand 2, single buffered']
    #allocation8 [shape = 'u8[65536]{0}', space=vmem, size = 0x10000, scoped, tag = 'input window, operand 3, single buffered']
    #allocation9 [shape = 's32[1]{0}', space=sflag, size = 0x4, scoped, tag = 'scoped memory for tpu_custom_call.1']
    #allocation10 [shape = 'u8[1024]{0}', space=vmem, size = 0x400, scoped, tag = 'input window, operand 4, single buffered']
    #allocation11 [shape = 'u8[1024]{0}', space=vmem, size = 0x400, scoped, tag = 'input window, operand 5, single buffered']
    #allocation12 [shape = 's32[1]{0}', space=sflag, size = 0x4, scoped, tag = 'scoped memory for tpu_custom_call.1']
    #allocation13 [shape = 'u8[1024]{0}', space=vmem, size = 0x400, scoped, tag = 'input window, operand 6, single buffered']
    #allocation14 [shape = 'u8[262144]{0}', space=vmem, size = 0x40000, scoped, tag = 'input window, operand 7, single buffered']
    #allocation15 [shape = 's32[1]{0}', space=sflag, size = 0x4, scoped, tag = 'scoped memory for tpu_custom_call.1']
    #allocation16 [shape = 'u8[2048]{0}', space=vmem, size = 0x800, scoped, tag = 'input window, operand 8, single buffered']
    #allocation17 [shape = 'u8[2048]{0}', space=vmem, size = 0x800, scoped, tag = 'input window, operand 9, single buffered']
    #allocation18 [shape = 's32[1]{0}', space=sflag, size = 0x4, scoped, tag = 'scoped memory for tpu_custom_call.1']
    #allocation19 [shape = 'u8[2048]{0}', space=vmem, size = 0x800, scoped, tag = 'input window, operand 10, single buffered']
    #allocation20 [shape = 'u8[1048576]{0}', space=vmem, size = 0x100000, scoped, tag = 'input window, operand 11, single buffered']
    #allocation21 [shape = 's32[1]{0}', space=sflag, size = 0x4, scoped, tag = 'scoped memory for tpu_custom_call.1']
    #allocation22 [shape = 'u8[4096]{0}', space=vmem, size = 0x1000, scoped, tag = 'input window, operand 12, single buffered']
    #allocation23 [shape = 'u8[4096]{0}', space=vmem, size = 0x1000, scoped, tag = 'input window, operand 13, single buffered']
    #allocation24 [shape = 's32[1]{0}', space=sflag, size = 0x4, scoped, tag = 'scoped memory for tpu_custom_call.1']
    #allocation25 [shape = 'u8[4096]{0}', space=vmem, size = 0x1000, scoped, tag = 'input window, operand 14, single buffered']
    #allocation26 [shape = 'u8[1048576]{0}', space=vmem, size = 0x100000, scoped, tag = 'input window, operand 15']
    #allocation27 [shape = 's32[2]{0}', space=sflag, size = 0x8, scoped, tag = 'scoped memory for tpu_custom_call.1']
    #allocation28 [shape = 'u8[2048]{0}', space=vmem, size = 0x800, scoped, tag = 'input window, operand 16']
    #allocation29 [shape = 'u8[16384]{0}', space=vmem, size = 0x4000, scoped, tag = 'output window, operand 0']
    %22 = vsyncpa [#allocation3], 0
    %23 = vsyncpa [#allocation6], 0
    %24 = vsyncpa [#allocation9], 0
    %25 = vsyncpa [#allocation12], 0
    %26 = vsyncpa [#allocation15], 0
    %27 = vsyncpa [#allocation18], 0
    %28 = vsyncpa [#allocation21], 0
    %29 = vsyncpa [#allocation24], 0
    %30 = vsyncpa [#allocation27], 0
    %s31 = scalar_lea.sflag [#allocation27], 1
    %32 = vsyncpa %s31, 0
    %33 = vsyncpa [#allocation4], 0
    %s34 = scalar_lea.sflag [#allocation4], 1
    %35 = vsyncpa %s34, 0
    loop: start=0, step=1, limit=6
    $region2: #{tpu_custom_call.1} parent=1 // loop_pre_header
      _
    $region3: #{tpu_custom_call.1} parent=1 // loop_header
      %s37 = sphi 0, %s41
      %p38 = scmp.ge.s32.totalorder %s37, 6
      %s45 = sphi 0, %s45
      %s47 = sphi 0, %s45
      %s48 = sphi 0, %s47
      %s62 = sphi 0, %s48
      %s66 = sphi 0, %s66
      %s68 = sphi 0, %s66
      %s69 = sphi 0, %s68
      %s83 = sphi 0, %s69
      %s87 = sphi 0, %s87
      %s89 = sphi 0, %s87
      %s90 = sphi 0, %s89
      %s104 = sphi 0, %s90
      %s108 = sphi 0, %s108
      %s110 = sphi 0, %s108
      %s111 = sphi 0, %s110
      %s125 = sphi 0, %s111
      %s129 = sphi 0, %s129
      %s131 = sphi 0, %s129
      %s132 = sphi 0, %s131
      %s146 = sphi 0, %s132
      %s150 = sphi 0, %s150
      %s152 = sphi 0, %s150
      %s153 = sphi 0, %s152
      %s167 = sphi 0, %s153
      %s171 = sphi 0, %s171
      %s173 = sphi 0, %s171
      %s174 = sphi 0, %s173
      %s188 = sphi 0, %s174
      %s192 = sphi 0, %s192
      %s194 = sphi 0, %s192
      %s195 = sphi 0, %s194
      %s209 = sphi 0, %s195
      %s213 = sphi 0, %s213
      %s215 = sphi 0, %s213
      %s216 = sphi 0, %s215
      %s230 = sphi 0, %s216
      %s234 = sphi 0, %s234
      %s236 = sphi 0, %s234
      %s237 = sphi 0, %s236
      %s251 = sphi 0, %s237
      %s255 = sphi 0, %s255
      %s257 = sphi 0, %s255
      %s258 = sphi 0, %s257
      %s272 = sphi 0, %s258
      %s276 = sphi 0, %s276
      %s278 = sphi 0, %s276
      %s279 = sphi 0, %s278
      %s293 = sphi 0, %s279
      %s297 = sphi 0, %s297
      %s299 = sphi 0, %s297
      %s300 = sphi 0, %s299
      %s314 = sphi 0, %s300
      %s318 = sphi 0, %s318
      %s320 = sphi 0, %s318
      %s321 = sphi 0, %s320
      %s335 = sphi 0, %s321
      %s339 = sphi 0, %s339
      %s341 = sphi 0, %s339
      %s342 = sphi 0, %s341
      %s356 = sphi 0, %s342
      %s362 = sphi 0, %s364
      %s365 = sphi 0, %s362
      %s366 = sphi 0, %s365
      %s382 = sphi 0, %s366
      %s388 = sphi 0, %s390
      %s391 = sphi 0, %s388
      %s392 = sphi 0, %s391
      %s408 = sphi 0, %s392
      %s414 = sphi 0, %s416
      %s417 = sphi 0, %s414
      %s418 = sphi 0, %s417
      %s434 = sphi 0, %s418
    $region4: #{tpu_custom_call.1} parent=1 // loop_header_branch
      %40 = sbr.rel (%p38) target = $region8
    $region5: #{tpu_custom_call.1} parent=1 // loop_body
      %s42 = ssub.s32 %s37, 1
      %s43 = ssub.s32 %s37, 2
      %s44 = sadd.s32 %s37, 1
      %s46 = sadd.s32 %s45, 1
      %p49 = scmp.eq.s32.totalorder %s37, 3
      %p50 = scmp.ne.s32.totalorder %s45, %s47
      %p51 = scmp.eq.s32.totalorder %s37, 0
      %p52 = por %p50, %p51
      %p53 = scmp.ne.s32.totalorder %s45, %s47
      %p54 = scmp.eq.s32.totalorder %s42, 3
      %p55 = por %p53, %p54
      %p56 = scmp.ne.s32.totalorder %s47, %s48
      %p57 = scmp.eq.s32.totalorder %s42, 0
      %p58 = por %p56, %p57
      %p59 = scmp.ne.s32.totalorder %s47, %s48
      %p60 = scmp.eq.s32.totalorder %s43, 3
      %p61 = por %p59, %p60
      %p63 = scmp.ne.s32.totalorder %s48, %s62
      %p64 = scmp.eq.s32.totalorder %s43, 0
      %p65 = por %p63, %p64
      %s67 = sadd.s32 %s66, 1
      %p70 = scmp.eq.s32.totalorder %s37, 3
      %p71 = scmp.ne.s32.totalorder %s66, %s68
      %p72 = scmp.eq.s32.totalorder %s37, 0
      %p73 = por %p71, %p72
      %p74 = scmp.ne.s32.totalorder %s66, %s68
      %p75 = scmp.eq.s32.totalorder %s42, 3
      %p76 = por %p74, %p75
      %p77 = scmp.ne.s32.totalorder %s68, %s69
      %p78 = scmp.eq.s32.totalorder %s42, 0
      %p79 = por %p77, %p78
      %p80 = scmp.ne.s32.totalorder %s68, %s69
      %p81 = scmp.eq.s32.totalorder %s43, 3
      %p82 = por %p80, %p81
      %p84 = scmp.ne.s32.totalorder %s69, %s83
      %p85 = scmp.eq.s32.totalorder %s43, 0
      %p86 = por %p84, %p85
      %s88 = sadd.s32 %s87, 1
      %p91 = scmp.eq.s32.totalorder %s37, 3
      %p92 = scmp.ne.s32.totalorder %s87, %s89
      %p93 = scmp.eq.s32.totalorder %s37, 0
      %p94 = por %p92, %p93
      %p95 = scmp.ne.s32.totalorder %s87, %s89
      %p96 = scmp.eq.s32.totalorder %s42, 3
      %p97 = por %p95, %p96
      %p98 = scmp.ne.s32.totalorder %s89, %s90
      %p99 = scmp.eq.s32.totalorder %s42, 0
      %p100 = por %p98, %p99
      %p101 = scmp.ne.s32.totalorder %s89, %s90
      %p102 = scmp.eq.s32.totalorder %s43, 3
      %p103 = por %p101, %p102
      %p105 = scmp.ne.s32.totalorder %s90, %s104
      %p106 = scmp.eq.s32.totalorder %s43, 0
      %p107 = por %p105, %p106
      %s109 = sadd.s32 %s108, 1
      %p112 = scmp.eq.s32.totalorder %s37, 3
      %p113 = scmp.ne.s32.totalorder %s108, %s110
      %p114 = scmp.eq.s32.totalorder %s37, 0
      %p115 = por %p113, %p114
      %p116 = scmp.ne.s32.totalorder %s108, %s110
      %p117 = scmp.eq.s32.totalorder %s42, 3
      %p118 = por %p116, %p117
      %p119 = scmp.ne.s32.totalorder %s110, %s111
      %p120 = scmp.eq.s32.totalorder %s42, 0
      %p121 = por %p119, %p120
      %p122 = scmp.ne.s32.totalorder %s110, %s111
      %p123 = scmp.eq.s32.totalorder %s43, 3
      %p124 = por %p122, %p123
      %p126 = scmp.ne.s32.totalorder %s111, %s125
      %p127 = scmp.eq.s32.totalorder %s43, 0
      %p128 = por %p126, %p127
      %s130 = sadd.s32 %s129, 1
      %p133 = scmp.eq.s32.totalorder %s37, 3
      %p134 = scmp.ne.s32.totalorder %s129, %s131
      %p135 = scmp.eq.s32.totalorder %s37, 0
      %p136 = por %p134, %p135
      %p137 = scmp.ne.s32.totalorder %s129, %s131
      %p138 = scmp.eq.s32.totalorder %s42, 3
      %p139 = por %p137, %p138
      %p140 = scmp.ne.s32.totalorder %s131, %s132
      %p141 = scmp.eq.s32.totalorder %s42, 0
      %p142 = por %p140, %p141
      %p143 = scmp.ne.s32.totalorder %s131, %s132
      %p144 = scmp.eq.s32.totalorder %s43, 3
      %p145 = por %p143, %p144
      %p147 = scmp.ne.s32.totalorder %s132, %s146
      %p148 = scmp.eq.s32.totalorder %s43, 0
      %p149 = por %p147, %p148
      %s151 = sadd.s32 %s150, 1
      %p154 = scmp.eq.s32.totalorder %s37, 3
      %p155 = scmp.ne.s32.totalorder %s150, %s152
      %p156 = scmp.eq.s32.totalorder %s37, 0
      %p157 = por %p155, %p156
      %p158 = scmp.ne.s32.totalorder %s150, %s152
      %p159 = scmp.eq.s32.totalorder %s42, 3
      %p160 = por %p158, %p159
      %p161 = scmp.ne.s32.totalorder %s152, %s153
      %p162 = scmp.eq.s32.totalorder %s42, 0
      %p163 = por %p161, %p162
      %p164 = scmp.ne.s32.totalorder %s152, %s153
      %p165 = scmp.eq.s32.totalorder %s43, 3
      %p166 = por %p164, %p165
      %p168 = scmp.ne.s32.totalorder %s153, %s167
      %p169 = scmp.eq.s32.totalorder %s43, 0
      %p170 = por %p168, %p169
      %s172 = sadd.s32 %s171, 1
      %p175 = scmp.eq.s32.totalorder %s37, 3
      %p176 = scmp.ne.s32.totalorder %s171, %s173
      %p177 = scmp.eq.s32.totalorder %s37, 0
      %p178 = por %p176, %p177
      %p179 = scmp.ne.s32.totalorder %s171, %s173
      %p180 = scmp.eq.s32.totalorder %s42, 3
      %p181 = por %p179, %p180
      %p182 = scmp.ne.s32.totalorder %s173, %s174
      %p183 = scmp.eq.s32.totalorder %s42, 0
      %p184 = por %p182, %p183
      %p185 = scmp.ne.s32.totalorder %s173, %s174
      %p186 = scmp.eq.s32.totalorder %s43, 3
      %p187 = por %p185, %p186
      %p189 = scmp.ne.s32.totalorder %s174, %s188
      %p190 = scmp.eq.s32.totalorder %s43, 0
      %p191 = por %p189, %p190
      %s193 = sadd.s32 %s192, 1
      %p196 = scmp.eq.s32.totalorder %s37, 3
      %p197 = scmp.ne.s32.totalorder %s192, %s194
      %p198 = scmp.eq.s32.totalorder %s37, 0
      %p199 = por %p197, %p198
      %p200 = scmp.ne.s32.totalorder %s192, %s194
      %p201 = scmp.eq.s32.totalorder %s42, 3
      %p202 = por %p200, %p201
      %p203 = scmp.ne.s32.totalorder %s194, %s195
      %p204 = scmp.eq.s32.totalorder %s42, 0
      %p205 = por %p203, %p204
      %p206 = scmp.ne.s32.totalorder %s194, %s195
      %p207 = scmp.eq.s32.totalorder %s43, 3
      %p208 = por %p206, %p207
      %p210 = scmp.ne.s32.totalorder %s195, %s209
      %p211 = scmp.eq.s32.totalorder %s43, 0
      %p212 = por %p210, %p211
      %s214 = sadd.s32 %s213, 1
      %p217 = scmp.eq.s32.totalorder %s37, 3
      %p218 = scmp.ne.s32.totalorder %s213, %s215
      %p219 = scmp.eq.s32.totalorder %s37, 0
      %p220 = por %p218, %p219
      %p221 = scmp.ne.s32.totalorder %s213, %s215
      %p222 = scmp.eq.s32.totalorder %s42, 3
      %p223 = por %p221, %p222
      %p224 = scmp.ne.s32.totalorder %s215, %s216
      %p225 = scmp.eq.s32.totalorder %s42, 0
      %p226 = por %p224, %p225
      %p227 = scmp.ne.s32.totalorder %s215, %s216
      %p228 = scmp.eq.s32.totalorder %s43, 3
      %p229 = por %p227, %p228
      %p231 = scmp.ne.s32.totalorder %s216, %s230
      %p232 = scmp.eq.s32.totalorder %s43, 0
      %p233 = por %p231, %p232
      %s235 = sadd.s32 %s234, 1
      %p238 = scmp.eq.s32.totalorder %s37, 3
      %p239 = scmp.ne.s32.totalorder %s234, %s236
      %p240 = scmp.eq.s32.totalorder %s37, 0
      %p241 = por %p239, %p240
      %p242 = scmp.ne.s32.totalorder %s234, %s236
      %p243 = scmp.eq.s32.totalorder %s42, 3
      %p244 = por %p242, %p243
      %p245 = scmp.ne.s32.totalorder %s236, %s237
      %p246 = scmp.eq.s32.totalorder %s42, 0
      %p247 = por %p245, %p246
      %p248 = scmp.ne.s32.totalorder %s236, %s237
      %p249 = scmp.eq.s32.totalorder %s43, 3
      %p250 = por %p248, %p249
      %p252 = scmp.ne.s32.totalorder %s237, %s251
      %p253 = scmp.eq.s32.totalorder %s43, 0
      %p254 = por %p252, %p253
      %s256 = sadd.s32 %s255, 1
      %p259 = scmp.eq.s32.totalorder %s37, 3
      %p260 = scmp.ne.s32.totalorder %s255, %s257
      %p261 = scmp.eq.s32.totalorder %s37, 0
      %p262 = por %p260, %p261
      %p263 = scmp.ne.s32.totalorder %s255, %s257
      %p264 = scmp.eq.s32.totalorder %s42, 3
      %p265 = por %p263, %p264
      %p266 = scmp.ne.s32.totalorder %s257, %s258
      %p267 = scmp.eq.s32.totalorder %s42, 0
      %p268 = por %p266, %p267
      %p269 = scmp.ne.s32.totalorder %s257, %s258
      %p270 = scmp.eq.s32.totalorder %s43, 3
      %p271 = por %p269, %p270
      %p273 = scmp.ne.s32.totalorder %s258, %s272
      %p274 = scmp.eq.s32.totalorder %s43, 0
      %p275 = por %p273, %p274
      %s277 = sadd.s32 %s276, 1
      %p280 = scmp.eq.s32.totalorder %s37, 3
      %p281 = scmp.ne.s32.totalorder %s276, %s278
      %p282 = scmp.eq.s32.totalorder %s37, 0
      %p283 = por %p281, %p282
      %p284 = scmp.ne.s32.totalorder %s276, %s278
      %p285 = scmp.eq.s32.totalorder %s42, 3
      %p286 = por %p284, %p285
      %p287 = scmp.ne.s32.totalorder %s278, %s279
      %p288 = scmp.eq.s32.totalorder %s42, 0
      %p289 = por %p287, %p288
      %p290 = scmp.ne.s32.totalorder %s278, %s279
      %p291 = scmp.eq.s32.totalorder %s43, 3
      %p292 = por %p290, %p291
      %p294 = scmp.ne.s32.totalorder %s279, %s293
      %p295 = scmp.eq.s32.totalorder %s43, 0
      %p296 = por %p294, %p295
      %s298 = sadd.s32 %s297, 1
      %p301 = scmp.eq.s32.totalorder %s37, 3
      %p302 = scmp.ne.s32.totalorder %s297, %s299
      %p303 = scmp.eq.s32.totalorder %s37, 0
      %p304 = por %p302, %p303
      %p305 = scmp.ne.s32.totalorder %s297, %s299
      %p306 = scmp.eq.s32.totalorder %s42, 3
      %p307 = por %p305, %p306
      %p308 = scmp.ne.s32.totalorder %s299, %s300
      %p309 = scmp.eq.s32.totalorder %s42, 0
      %p310 = por %p308, %p309
      %p311 = scmp.ne.s32.totalorder %s299, %s300
      %p312 = scmp.eq.s32.totalorder %s43, 3
      %p313 = por %p311, %p312
      %p315 = scmp.ne.s32.totalorder %s300, %s314
      %p316 = scmp.eq.s32.totalorder %s43, 0
      %p317 = por %p315, %p316
      %s319 = sadd.s32 %s318, 1
      %p322 = scmp.eq.s32.totalorder %s37, 3
      %p323 = scmp.ne.s32.totalorder %s318, %s320
      %p324 = scmp.eq.s32.totalorder %s37, 0
      %p325 = por %p323, %p324
      %p326 = scmp.ne.s32.totalorder %s318, %s320
      %p327 = scmp.eq.s32.totalorder %s42, 3
      %p328 = por %p326, %p327
      %p329 = scmp.ne.s32.totalorder %s320, %s321
      %p330 = scmp.eq.s32.totalorder %s42, 0
      %p331 = por %p329, %p330
      %p332 = scmp.ne.s32.totalorder %s320, %s321
      %p333 = scmp.eq.s32.totalorder %s43, 3
      %p334 = por %p332, %p333
      %p336 = scmp.ne.s32.totalorder %s321, %s335
      %p337 = scmp.eq.s32.totalorder %s43, 0
      %p338 = por %p336, %p337
      %s340 = sadd.s32 %s339, 1
      %p343 = scmp.eq.s32.totalorder %s37, 3
      %p344 = scmp.ne.s32.totalorder %s339, %s341
      %p345 = scmp.eq.s32.totalorder %s37, 0
      %p346 = por %p344, %p345
      %p347 = scmp.ne.s32.totalorder %s339, %s341
      %p348 = scmp.eq.s32.totalorder %s42, 3
      %p349 = por %p347, %p348
      %p350 = scmp.ne.s32.totalorder %s341, %s342
      %p351 = scmp.eq.s32.totalorder %s42, 0
      %p352 = por %p350, %p351
      %p353 = scmp.ne.s32.totalorder %s341, %s342
      %p354 = scmp.eq.s32.totalorder %s43, 3
      %p355 = por %p353, %p354
      %p357 = scmp.ne.s32.totalorder %s342, %s356
      %p358 = scmp.eq.s32.totalorder %s43, 0
      %p359 = por %p357, %p358
      %s360 = ssub.s32 %s37, %s44
      %p361 = scmp.eq.s32.totalorder %s360, 0
      %s363 = sadd.s32 %s362, 1
      %s364 = scalar_select %p361, %s362, %s363
      %p367 = pneg %p361
      %p368 = scmp.eq.s32.totalorder %s37, 3
      %p369 = por %p367, %p368
      %p370 = scmp.ne.s32.totalorder %s362, %s365
      %p371 = scmp.eq.s32.totalorder %s37, 0
      %p372 = por %p370, %p371
      %p373 = scmp.ne.s32.totalorder %s362, %s365
      %p374 = scmp.eq.s32.totalorder %s42, 3
      %p375 = por %p373, %p374
      %p376 = scmp.ne.s32.totalorder %s365, %s366
      %p377 = scmp.eq.s32.totalorder %s42, 0
      %p378 = por %p376, %p377
      %p379 = scmp.ne.s32.totalorder %s365, %s366
      %p380 = scmp.eq.s32.totalorder %s43, 3
      %p381 = por %p379, %p380
      %p383 = scmp.ne.s32.totalorder %s366, %s382
      %p384 = scmp.eq.s32.totalorder %s43, 0
      %p385 = por %p383, %p384
      %s386 = ssub.s32 %s37, %s44
      %p387 = scmp.eq.s32.totalorder %s386, 0
      %s389 = sadd.s32 %s388, 1
      %s390 = scalar_select %p387, %s388, %s389
      %p393 = pneg %p387
      %p394 = scmp.eq.s32.totalorder %s37, 3
      %p395 = por %p393, %p394
      %p396 = scmp.ne.s32.totalorder %s388, %s391
      %p397 = scmp.eq.s32.totalorder %s37, 0
      %p398 = por %p396, %p397
      %p399 = scmp.ne.s32.totalorder %s388, %s391
      %p400 = scmp.eq.s32.totalorder %s42, 3
      %p401 = por %p399, %p400
      %p402 = scmp.ne.s32.totalorder %s391, %s392
      %p403 = scmp.eq.s32.totalorder %s42, 0
      %p404 = por %p402, %p403
      %p405 = scmp.ne.s32.totalorder %s391, %s392
      %p406 = scmp.eq.s32.totalorder %s43, 3
      %p407 = por %p405, %p406
      %p409 = scmp.ne.s32.totalorder %s392, %s408
      %p410 = scmp.eq.s32.totalorder %s43, 0
      %p411 = por %p409, %p410
      %s412 = ssub.s32 %s37, %s44
      %p413 = scmp.eq.s32.totalorder %s412, 0
      %s415 = sadd.s32 %s414, 1
      %s416 = scalar_select %p413, %s414, %s415
      %p419 = pneg %p413
      %p420 = scmp.eq.s32.totalorder %s37, 3
      %p421 = por %p419, %p420
      %p422 = scmp.ne.s32.totalorder %s414, %s417
      %p423 = scmp.eq.s32.totalorder %s37, 0
      %p424 = por %p422, %p423
      %p425 = scmp.ne.s32.totalorder %s414, %s417
      %p426 = scmp.eq.s32.totalorder %s42, 3
      %p427 = por %p425, %p426
      %p428 = scmp.ne.s32.totalorder %s417, %s418
      %p429 = scmp.eq.s32.totalorder %s42, 0
      %p430 = por %p428, %p429
      %p431 = scmp.ne.s32.totalorder %s417, %s418
      %p432 = scmp.eq.s32.totalorder %s43, 3
      %p433 = por %p431, %p432
      %p435 = scmp.ne.s32.totalorder %s418, %s434
      %p436 = scmp.eq.s32.totalorder %s43, 0
      %p437 = por %p435, %p436
      %p438 = scmp.le.s32.totalorder 1, %s37
      %p439 = scmp.lt.s32.totalorder %s37, 5
      %p440 = pnand %p438, %p439
      %p441 = pneg %p440
      // Predicated region
      $region9: #{tpu_custom_call.1} parent=5 // pred_check
        _
      $region10: #{tpu_custom_call.1} parent=5 // pred_check_branch
        %443 = sbr.rel (%p440) target = $region12
      $region11: #{tpu_custom_call.1} parent=5 // pred_region
        %s444 = ssub.s32 %s37, 1
        // Predicated region
        $region13: #{tpu_custom_call.1} parent=11 // pred_check
          %p445 = pneg %p58
        $region14: #{tpu_custom_call.1} parent=11 // pred_check_branch
          %447 = sbr.rel (%p445) target = $region16
        $region15: #{tpu_custom_call.1} parent=11 // pred_region
          %s449 = ssub.s32 128, 128
          %450 = vsyncadd [#allocation3], %s449
          %s452 = sshll.u32 [#allocation2], 4
          %s453 = int_to_ptr.vmem [resolvable:$true] %s452
          %455 = dma.hbm_to_vmem [thread:$0]  %s0, 128, %s453, [#allocation3]
        $region16: #{tpu_custom_call.1} parent=11 // pred_fallthru
          _
        // Predicated region
        $region17: #{tpu_custom_call.1} parent=11 // pred_check
          %p456 = pneg %p79
        $region18: #{tpu_custom_call.1} parent=11 // pred_check_branch
          %458 = sbr.rel (%p456) target = $region20
        $region19: #{tpu_custom_call.1} parent=11 // pred_region
          %s460 = ssub.s32 256, 256
          %461 = vsyncadd [#allocation6], %s460
          %s462 = sshll.u32 [#allocation5], 4
          %s463 = int_to_ptr.vmem [resolvable:$true] %s462
          %468 = dma.hbm_to_vmem [thread:$0]  %s1, 256, %s463, [#allocation6], 64, 64, 4
        $region20: #{tpu_custom_call.1} parent=11 // pred_fallthru
          _
        // Predicated region
        $region21: #{tpu_custom_call.1} parent=11 // pred_check
          %p469 = pneg %p100
        $region22: #{tpu_custom_call.1} parent=11 // pred_check_branch
          %471 = sbr.rel (%p469) target = $region24
        $region23: #{tpu_custom_call.1} parent=11 // pred_region
          %s473 = ssub.s32 16, 16
          %474 = vsyncadd [#allocation6], %s473
          %s476 = sshll.u32 [#allocation7], 4
          %s477 = int_to_ptr.vmem [resolvable:$true] %s476
          %479 = dma.hbm_to_vmem [thread:$0]  %s2, 16, %s477, [#allocation6]
        $region24: #{tpu_custom_call.1} parent=11 // pred_fallthru
          _
        // Predicated region
        $region25: #{tpu_custom_call.1} parent=11 // pred_check
          %p480 = pneg %p121
        $region26: #{tpu_custom_call.1} parent=11 // pred_check_branch
          %482 = sbr.rel (%p480) target = $region28
        $region27: #{tpu_custom_call.1} parent=11 // pred_region
          %s484 = ssub.s32 2048, 2048
          %485 = vsyncadd [#allocation9], %s484
          %s486 = sshll.u32 [#allocation8], 4
          %s487 = int_to_ptr.vmem [resolvable:$true] %s486
          %492 = dma.hbm_to_vmem [thread:$0]  %s3, 2048, %s487, [#allocation9], 128, 128, 8
        $region28: #{tpu_custom_call.1} parent=11 // pred_fallthru
          _
        // Predicated region
        $region29: #{tpu_custom_call.1} parent=11 // pred_check
          %p493 = pneg %p142
        $region30: #{tpu_custom_call.1} parent=11 // pred_check_branch
          %495 = sbr.rel (%p493) target = $region32
        $region31: #{tpu_custom_call.1} parent=11 // pred_region
          %s497 = ssub.s32 32, 32
          %498 = vsyncadd [#allocation9], %s497
          %s500 = sshll.u32 [#allocation10], 4
          %s501 = int_to_ptr.vmem [resolvable:$true] %s500
          %503 = dma.hbm_to_vmem [thread:$0]  %s4, 32, %s501, [#allocation9]
        $region32: #{tpu_custom_call.1} parent=11 // pred_fallthru
          _
        // Predicated region
        $region33: #{tpu_custom_call.1} parent=11 // pred_check
          %p504 = pneg %p163
        $region34: #{tpu_custom_call.1} parent=11 // pred_check_branch
          %506 = sbr.rel (%p504) target = $region36
        $region35: #{tpu_custom_call.1} parent=11 // pred_region
          %s508 = ssub.s32 32, 32
          %509 = vsyncadd [#allocation12], %s508
          %s511 = sshll.u32 [#allocation11], 4
          %s512 = int_to_ptr.vmem [resolvable:$true] %s511
          %514 = dma.hbm_to_vmem [thread:$0]  %s5, 32, %s512, [#allocation12]
        $region36: #{tpu_custom_call.1} parent=11 // pred_fallthru
          _
        // Predicated region
        $region37: #{tpu_custom_call.1} parent=11 // pred_check
          %p515 = pneg %p184
        $region38: #{tpu_custom_call.1} parent=11 // pred_check_branch
          %517 = sbr.rel (%p515) target = $region40
        $region39: #{tpu_custom_call.1} parent=11 // pred_region
          %s519 = ssub.s32 32, 32
          %520 = vsyncadd [#allocation12], %s519
          %s522 = sshll.u32 [#allocation13], 4
          %s523 = int_to_ptr.vmem [resolvable:$true] %s522
          %525 = dma.hbm_to_vmem [thread:$0]  %s6, 32, %s523, [#allocation12]
        $region40: #{tpu_custom_call.1} parent=11 // pred_fallthru
          _
        // Predicated region
        $region41: #{tpu_custom_call.1} parent=11 // pred_check
          %p526 = pneg %p205
        $region42: #{tpu_custom_call.1} parent=11 // pred_check_branch
          %528 = sbr.rel (%p526) target = $region44
        $region43: #{tpu_custom_call.1} parent=11 // pred_region
          %s530 = ssub.s32 8192, 8192
          %531 = vsyncadd [#allocation15], %s530
          %s532 = sshll.u32 [#allocation14], 4
          %s533 = int_to_ptr.vmem [resolvable:$true] %s532
          %538 = dma.hbm_to_vmem [thread:$0]  %s7, 8192, %s533, [#allocation15], 256, 256, 16
        $region44: #{tpu_custom_call.1} parent=11 // pred_fallthru
          _
        // Predicated region
        $region45: #{tpu_custom_call.1} parent=11 // pred_check
          %p539 = pneg %p226
        $region46: #{tpu_custom_call.1} parent=11 // pred_check_branch
          %541 = sbr.rel (%p539) target = $region48
        $region47: #{tpu_custom_call.1} parent=11 // pred_region
          %s543 = ssub.s32 64, 64
          %544 = vsyncadd [#allocation15], %s543
          %s546 = sshll.u32 [#allocation16], 4
          %s547 = int_to_ptr.vmem [resolvable:$true] %s546
          %549 = dma.hbm_to_vmem [thread:$0]  %s8, 64, %s547, [#allocation15]
        $region48: #{tpu_custom_call.1} parent=11 // pred_fallthru
          _
        // Predicated region
        $region49: #{tpu_custom_call.1} parent=11 // pred_check
          %p550 = pneg %p247
        $region50: #{tpu_custom_call.1} parent=11 // pred_check_branch
          %552 = sbr.rel (%p550) target = $region52
        $region51: #{tpu_custom_call.1} parent=11 // pred_region
          %s554 = ssub.s32 64, 64
          %555 = vsyncadd [#allocation18], %s554
          %s557 = sshll.u32 [#allocation17], 4
          %s558 = int_to_ptr.vmem [resolvable:$true] %s557
          %560 = dma.hbm_to_vmem [thread:$0]  %s9, 64, %s558, [#allocation18]
        $region52: #{tpu_custom_call.1} parent=11 // pred_fallthru
          _
        // Predicated region
        $region53: #{tpu_custom_call.1} parent=11 // pred_check
          %p561 = pneg %p268
        $region54: #{tpu_custom_call.1} parent=11 // pred_check_branch
          %563 = sbr.rel (%p561) target = $region56
        $region55: #{tpu_custom_call.1} parent=11 // pred_region
          %s565 = ssub.s32 64, 64
          %566 = vsyncadd [#allocation18], %s565
          %s568 = sshll.u32 [#allocation19], 4
          %s569 = int_to_ptr.vmem [resolvable:$true] %s568
          %571 = dma.hbm_to_vmem [thread:$0]  %s10, 64, %s569, [#allocation18]
        $region56: #{tpu_custom_call.1} parent=11 // pred_fallthru
          _
        // Predicated region
        $region57: #{tpu_custom_call.1} parent=11 // pred_check
          %p572 = pneg %p289
        $region58: #{tpu_custom_call.1} parent=11 // pred_check_branch
          %574 = sbr.rel (%p572) target = $region60
        $region59: #{tpu_custom_call.1} parent=11 // pred_region
          %s576 = ssub.s32 32768, 32768
          %577 = vsyncadd [#allocation21], %s576
          %s578 = sshll.u32 [#allocation20], 4
          %s579 = int_to_ptr.vmem [resolvable:$true] %s578
          %584 = dma.hbm_to_vmem [thread:$0]  %s11, 32768, %s579, [#allocation21], 512, 512, 32
        $region60: #{tpu_custom_call.1} parent=11 // pred_fallthru
          _
        // Predicated region
        $region61: #{tpu_custom_call.1} parent=11 // pred_check
          %p585 = pneg %p310
        $region62: #{tpu_custom_call.1} parent=11 // pred_check_branch
          %587 = sbr.rel (%p585) target = $region64
        $region63: #{tpu_custom_call.1} parent=11 // pred_region
          %s589 = ssub.s32 128, 128
          %590 = vsyncadd [#allocation21], %s589
          %s592 = sshll.u32 [#allocation22], 4
          %s593 = int_to_ptr.vmem [resolvable:$true] %s592
          %595 = dma.hbm_to_vmem [thread:$0]  %s12, 128, %s593, [#allocation21]
        $region64: #{tpu_custom_call.1} parent=11 // pred_fallthru
          _
        // Predicated region
        $region65: #{tpu_custom_call.1} parent=11 // pred_check
          %p596 = pneg %p331
        $region66: #{tpu_custom_call.1} parent=11 // pred_check_branch
          %598 = sbr.rel (%p596) target = $region68
        $region67: #{tpu_custom_call.1} parent=11 // pred_region
          %s600 = ssub.s32 128, 128
          %601 = vsyncadd [#allocation24], %s600
          %s603 = sshll.u32 [#allocation23], 4
          %s604 = int_to_ptr.vmem [resolvable:$true] %s603
          %606 = dma.hbm_to_vmem [thread:$0]  %s13, 128, %s604, [#allocation24]
        $region68: #{tpu_custom_call.1} parent=11 // pred_fallthru
          _
        // Predicated region
        $region69: #{tpu_custom_call.1} parent=11 // pred_check
          %p607 = pneg %p352
        $region70: #{tpu_custom_call.1} parent=11 // pred_check_branch
          %609 = sbr.rel (%p607) target = $region72
        $region71: #{tpu_custom_call.1} parent=11 // pred_region
          %s611 = ssub.s32 128, 128
          %612 = vsyncadd [#allocation24], %s611
          %s614 = sshll.u32 [#allocation25], 4
          %s615 = int_to_ptr.vmem [resolvable:$true] %s614
          %617 = dma.hbm_to_vmem [thread:$0]  %s14, 128, %s615, [#allocation24]
        $region72: #{tpu_custom_call.1} parent=11 // pred_fallthru
          _
      $region12: #{tpu_custom_call.1} parent=5 // pred_fallthru
        _
      %p618 = scmp.lt.s32.totalorder %s37, 4
      // Predicated region
      $region73: #{tpu_custom_call.1} parent=5 // pred_check
        %p619 = pneg %p618
      $region74: #{tpu_custom_call.1} parent=5 // pred_check_branch
        %621 = sbr.rel (%p619) target = $region76
      $region75: #{tpu_custom_call.1} parent=5 // pred_region
        // Predicated region
        $region77: #{tpu_custom_call.1} parent=75 // pred_check
          %p622 = pneg %p372
        $region78: #{tpu_custom_call.1} parent=75 // pred_check_branch
          %624 = sbr.rel (%p622) target = $region80
        $region79: #{tpu_custom_call.1} parent=75 // pred_region
          %s625 = sand.u32 %s37, 1
          %s626 = scalar_lea.sflag [#allocation27], %s625
          %s627 = sand.u32 %s362, 1
          %s628 = smul.addr %s627, 1024
          %s629 = scalar_lea.vmem [#allocation26], %s628
          %s630 = smul.u32 2, %s37
          %s632 = ssub.s32 16384, 16384
          %633 = vsyncadd %s626, %s632
          %s634 = smul.addr %s630, 64
          %s635 = scalar_lea.hbm %s15, %s634
          %s636 = sshll.u32 %s629, 4
          %s637 = int_to_ptr.vmem [resolvable:$true] %s636
          %642 = dma.hbm_to_vmem [thread:$0]  %s635, 16384, %s637, %s626, 512, 128, 8
        $region80: #{tpu_custom_call.1} parent=75 // pred_fallthru
          _
        // Predicated region
        $region81: #{tpu_custom_call.1} parent=75 // pred_check
          %p643 = pneg %p398
        $region82: #{tpu_custom_call.1} parent=75 // pred_check_branch
          %645 = sbr.rel (%p643) target = $region84
        $region83: #{tpu_custom_call.1} parent=75 // pred_region
          %s646 = sand.u32 %s37, 1
          %s647 = scalar_lea.sflag [#allocation27], %s646
          %s648 = sand.u32 %s388, 1
          %s649 = smul.addr %s648, 2
          %s650 = scalar_lea.vmem [#allocation28], %s649
          %s651 = smul.u32 2, %s37
          %s653 = ssub.s32 32, 32
          %654 = vsyncadd %s647, %s653
          %s655 = smul.addr %s651, 16
          %s656 = scalar_lea.hbm %s16, %s655
          %s658 = sshll.u32 %s650, 4
          %s659 = int_to_ptr.vmem [resolvable:$true] %s658
          %661 = dma.hbm_to_vmem [thread:$0]  %s656, 32, %s659, %s647
        $region84: #{tpu_custom_call.1} parent=75 // pred_fallthru
          _
      $region76: #{tpu_custom_call.1} parent=5 // pred_fallthru
        _
      %p662 = scmp.le.s32.totalorder 1, %s37
      %p663 = scmp.lt.s32.totalorder %s37, 5
      %p664 = pnand %p662, %p663
      %p665 = pneg %p664
      // Predicated region
      $region85: #{tpu_custom_call.1} parent=5 // pred_check
        _
      $region86: #{tpu_custom_call.1} parent=5 // pred_check_branch
        %667 = sbr.rel (%p664) target = $region88
      $region87: #{tpu_custom_call.1} parent=5 // pred_region
        %s668 = ssub.s32 %s37, 1
        // Predicated region
        $region89: #{tpu_custom_call.1} parent=87 // pred_check
          %p669 = pneg %p58
        $region90: #{tpu_custom_call.1} parent=87 // pred_check_branch
          %671 = sbr.rel (%p669) target = $region92
        $region91: #{tpu_custom_call.1} parent=87 // pred_region
          %672 = dma.done [#allocation3], 128
        $region92: #{tpu_custom_call.1} parent=87 // pred_fallthru
          _
        // Predicated region
        $region93: #{tpu_custom_call.1} parent=87 // pred_check
          %p673 = pneg %p79
        $region94: #{tpu_custom_call.1} parent=87 // pred_check_branch
          %675 = sbr.rel (%p673) target = $region96
        $region95: #{tpu_custom_call.1} parent=87 // pred_region
          %676 = dma.done [#allocation6], 256
        $region96: #{tpu_custom_call.1} parent=87 // pred_fallthru
          _
        // Predicated region
        $region97: #{tpu_custom_call.1} parent=87 // pred_check
          %p677 = pneg %p100
        $region98: #{tpu_custom_call.1} parent=87 // pred_check_branch
          %679 = sbr.rel (%p677) target = $region100
        $region99: #{tpu_custom_call.1} parent=87 // pred_region
          %680 = dma.done [#allocation6], 16
        $region100: #{tpu_custom_call.1} parent=87 // pred_fallthru
          _
        // Predicated region
        $region101: #{tpu_custom_call.1} parent=87 // pred_check
          %p681 = pneg %p121
        $region102: #{tpu_custom_call.1} parent=87 // pred_check_branch
          %683 = sbr.rel (%p681) target = $region104
        $region103: #{tpu_custom_call.1} parent=87 // pred_region
          %684 = dma.done [#allocation9], 2048
        $region104: #{tpu_custom_call.1} parent=87 // pred_fallthru
          _
        // Predicated region
        $region105: #{tpu_custom_call.1} parent=87 // pred_check
          %p685 = pneg %p142
        $region106: #{tpu_custom_call.1} parent=87 // pred_check_branch
          %687 = sbr.rel (%p685) target = $region108
        $region107: #{tpu_custom_call.1} parent=87 // pred_region
          %688 = dma.done [#allocation9], 32
        $region108: #{tpu_custom_call.1} parent=87 // pred_fallthru
          _
        // Predicated region
        $region109: #{tpu_custom_call.1} parent=87 // pred_check
          %p689 = pneg %p163
        $region110: #{tpu_custom_call.1} parent=87 // pred_check_branch
          %691 = sbr.rel (%p689) target = $region112
        $region111: #{tpu_custom_call.1} parent=87 // pred_region
          %692 = dma.done [#allocation12], 32
        $region112: #{tpu_custom_call.1} parent=87 // pred_fallthru
          _
        // Predicated region
        $region113: #{tpu_custom_call.1} parent=87 // pred_check
          %p693 = pneg %p184
        $region114: #{tpu_custom_call.1} parent=87 // pred_check_branch
          %695 = sbr.rel (%p693) target = $region116
        $region115: #{tpu_custom_call.1} parent=87 // pred_region
          %696 = dma.done [#allocation12], 32
        $region116: #{tpu_custom_call.1} parent=87 // pred_fallthru
          _
        // Predicated region
        $region117: #{tpu_custom_call.1} parent=87 // pred_check
          %p697 = pneg %p205
        $region118: #{tpu_custom_call.1} parent=87 // pred_check_branch
          %699 = sbr.rel (%p697) target = $region120
        $region119: #{tpu_custom_call.1} parent=87 // pred_region
          %700 = dma.done [#allocation15], 8192
        $region120: #{tpu_custom_call.1} parent=87 // pred_fallthru
          _
        // Predicated region
        $region121: #{tpu_custom_call.1} parent=87 // pred_check
          %p701 = pneg %p226
        $region122: #{tpu_custom_call.1} parent=87 // pred_check_branch
          %703 = sbr.rel (%p701) target = $region124
        $region123: #{tpu_custom_call.1} parent=87 // pred_region
          %704 = dma.done [#allocation15], 64
        $region124: #{tpu_custom_call.1} parent=87 // pred_fallthru
          _
        // Predicated region
        $region125: #{tpu_custom_call.1} parent=87 // pred_check
          %p705 = pneg %p247
        $region126: #{tpu_custom_call.1} parent=87 // pred_check_branch
          %707 = sbr.rel (%p705) target = $region128
        $region127: #{tpu_custom_call.1} parent=87 // pred_region
          %708 = dma.done [#allocation18], 64
        $region128: #{tpu_custom_call.1} parent=87 // pred_fallthru
          _
        // Predicated region
        $region129: #{tpu_custom_call.1} parent=87 // pred_check
          %p709 = pneg %p268
        $region130: #{tpu_custom_call.1} parent=87 // pred_check_branch
          %711 = sbr.rel (%p709) target = $region132
        $region131: #{tpu_custom_call.1} parent=87 // pred_region
          %712 = dma.done [#allocation18], 64
        $region132: #{tpu_custom_call.1} parent=87 // pred_fallthru
          _
        // Predicated region
        $region133: #{tpu_custom_call.1} parent=87 // pred_check
          %p713 = pneg %p289
        $region134: #{tpu_custom_call.1} parent=87 // pred_check_branch
          %715 = sbr.rel (%p713) target = $region136
        $region135: #{tpu_custom_call.1} parent=87 // pred_region
          %716 = dma.done [#allocation21], 32768
        $region136: #{tpu_custom_call.1} parent=87 // pred_fallthru
          _
        // Predicated region
        $region137: #{tpu_custom_call.1} parent=87 // pred_check
          %p717 = pneg %p310
        $region138: #{tpu_custom_call.1} parent=87 // pred_check_branch
          %719 = sbr.rel (%p717) target = $region140
        $region139: #{tpu_custom_call.1} parent=87 // pred_region
          %720 = dma.done [#allocation21], 128
        $region140: #{tpu_custom_call.1} parent=87 // pred_fallthru
          _
        // Predicated region
        $region141: #{tpu_custom_call.1} parent=87 // pred_check
          %p721 = pneg %p331
        $region142: #{tpu_custom_call.1} parent=87 // pred_check_branch
          %723 = sbr.rel (%p721) target = $region144
        $region143: #{tpu_custom_call.1} parent=87 // pred_region
          %724 = dma.done [#allocation24], 128
        $region144: #{tpu_custom_call.1} parent=87 // pred_fallthru
          _
        // Predicated region
        $region145: #{tpu_custom_call.1} parent=87 // pred_check
          %p725 = pneg %p352
        $region146: #{tpu_custom_call.1} parent=87 // pred_check_branch
          %727 = sbr.rel (%p725) target = $region148
        $region147: #{tpu_custom_call.1} parent=87 // pred_region
          %728 = dma.done [#allocation24], 128
        $region148: #{tpu_custom_call.1} parent=87 // pred_fallthru
          _
        %s729 = sand.u32 %s42, 1
        %s730 = scalar_lea.sflag [#allocation27], %s729
        %s731 = sand.u32 %s365, 1
        %s732 = smul.addr %s731, 1024
        %s733 = scalar_lea.vmem [#allocation26], %s732
        // Predicated region
        $region149: #{tpu_custom_call.1} parent=87 // pred_check
          %p734 = pneg %p378
        $region150: #{tpu_custom_call.1} parent=87 // pred_check_branch
          %736 = sbr.rel (%p734) target = $region152
        $region151: #{tpu_custom_call.1} parent=87 // pred_region
          %737 = dma.done %s730, 16384
        $region152: #{tpu_custom_call.1} parent=87 // pred_fallthru
          _
        %s738 = sand.u32 %s42, 1
        %s739 = scalar_lea.sflag [#allocation27], %s738
        %s740 = sand.u32 %s391, 1
        %s741 = smul.addr %s740, 2
        %s742 = scalar_lea.vmem [#allocation28], %s741
        // Predicated region
        $region153: #{tpu_custom_call.1} parent=87 // pred_check
          %p743 = pneg %p404
        $region154: #{tpu_custom_call.1} parent=87 // pred_check_branch
          %745 = sbr.rel (%p743) target = $region156
        $region155: #{tpu_custom_call.1} parent=87 // pred_region
          %746 = dma.done %s739, 32
        $region156: #{tpu_custom_call.1} parent=87 // pred_fallthru
          _
        %p747 = pneg %p58
        %p748 = pneg %p55
        %p749 = pneg %p79
        %p750 = pneg %p76
        %p751 = pneg %p100
        %p752 = pneg %p97
        %p753 = pneg %p121
        %p754 = pneg %p118
        %p755 = pneg %p142
        %p756 = pneg %p139
        %p757 = pneg %p163
        %p758 = pneg %p160
        %p759 = pneg %p184
        %p760 = pneg %p181
        %p761 = pneg %p205
        %p762 = pneg %p202
        %p763 = pneg %p226
        %p764 = pneg %p223
        %p765 = pneg %p247
        %p766 = pneg %p244
        %p767 = pneg %p268
        %p768 = pneg %p265
        %p769 = pneg %p289
        %p770 = pneg %p286
        %p771 = pneg %p310
        %p772 = pneg %p307
        %p773 = pneg %p331
        %p774 = pneg %p328
        %p775 = pneg %p352
        %p776 = pneg %p349
        %s777 = sand.u32 %s42, 1
        %s778 = scalar_lea.sflag [#allocation27], %s777
        %s779 = sand.u32 %s365, 1
        %s780 = smul.addr %s779, 1024
        %s781 = scalar_lea.vmem [#allocation26], %s780
        %p782 = pneg %p378
        %p783 = pneg %p375
        %s784 = sand.u32 %s42, 1
        %s785 = scalar_lea.sflag [#allocation27], %s784
        %s786 = sand.u32 %s391, 1
        %s787 = smul.addr %s786, 2
        %s788 = scalar_lea.vmem [#allocation28], %s787
        %p789 = pneg %p404
        %p790 = pneg %p401
        %p791 = pneg %p430
        %p792 = pneg %p427
        %s793 = sand.u32 %s417, 1
        %s794 = scalar_lea.sflag [#allocation4], %s793
        %s795 = sand.u32 %s417, 1
        %s796 = smul.addr %s795, 16
        %s797 = scalar_lea.vmem [#allocation29], %s796
        %s798 = smul.u32 2, %s42
        %s799 = smul.u32 2, %s42
        %s800 = smul.u32 2, %s42
        %v802 = vld [vmem:[#allocation2] sm:$0xff]
        %v803 = vpack.c.bf16 %v802, %v802
        %v804 = vld [vmem:[#allocation5] sm:$0xf]
        %v805 = vld [vmem:[#allocation5 + $0x4] sm:$0xf]
        %v806 = vld [vmem:[#allocation5 + $0x8] sm:$0xf]
        %v807 = vld [vmem:[#allocation5 + $0xc] sm:$0xf]
        %v808 = vld [vmem:[#allocation7] sm:$0x1]
        %v810 = vlaneseq
        %v811 = vshrl.u32 %v810, 7
        %v812 = vsub.s32 0, %v811
        %v813 = vrot.slane %v808, %v812
        %v819 = vunpack.c.l.b16 %v804
        %v820 = vunpack.c.l.b16 %v805
        %v821 = vunpack.c.l.b16 %v806
        %v822 = vunpack.c.l.b16 %v807
        %v823 = vpack.c.b16 %v820, %v819
        %v824 = vpack.c.b16 %v822, %v821
        %vm827 = vcmask 261120
        %v829 = vsel %vm827, %v803, 0
        %831 = vmatprep.subr.bf16.mxu0 0
        %832 = vmatpush1.bf16.msra.mxu0 0
        %833 = vmatprep.subr.bf16.mxu0 0
        %834 = vmatpush1.bf16.msra.mxu0 0
        %835 = vmatprep.subr.bf16.mxu0 0
        %836 = vmatpush1.bf16.msra.mxu0 0
        %837 = vmatprep.subr.bf16.mxu0 0
        %838 = vmatpush1.bf16.msra.mxu0 0
        %839 = vmatprep.subr.bf16.mxu0 0
        %840 = vmatpush1.bf16.msra.mxu0 0
        %841 = vmatprep.subr.bf16.mxu0 0
        %842 = vmatpush1.bf16.msra.mxu0 0
        %843 = vmatprep.subr.bf16.mxu0 0
        %844 = vmatpush1.bf16.msra.mxu0 %v824
        %845 = vmatprep.subr.bf16.mxu0 0
        %846 = vmatpush1.bf16.msra.mxu0 %v823
        %847 = vmatprep.subr.bf16.mxu0 0
        %848 = vmatpush2.bf16.msra.mxu0 0
        %849 = vmatprep.subr.bf16.mxu0 0
        %850 = vmatpush2.bf16.msra.mxu0 0
        %851 = vmatprep.subr.bf16.mxu0 0
        %852 = vmatpush2.bf16.msra.mxu0 0
        %853 = vmatprep.subr.bf16.mxu0 0
        %854 = vmatpush2.bf16.msra.mxu0 0
        %855 = vmatprep.subr.bf16.mxu0 0
        %856 = vmatpush2.bf16.msra.mxu0 0
        %857 = vmatprep.subr.bf16.mxu0 0
        %858 = vmatpush2.bf16.msra.mxu0 0
        %859 = vmatprep.subr.bf16.mxu0 0
        %860 = vmatpush2.bf16.msra.mxu0 0
        %861 = vmatprep.subr.bf16.mxu0 0
        %862 = vmatpush2.bf16.msra.mxu0 0
        %863 = vmatprep.mubr.bf16.mxu0 0
        %864 = vmatmul.mubr.bf16.gmra.mxu0 %v829
        %v865 = vpop.f32.mrf.mxu0
        %v866 = vadd.f32 %v813, %v865
        %v867 = vpop.f32.mrf.mxu0
        %v868 = vpop.f32.mrf.mxu0
        %v869 = vpop.f32.mrf.mxu0
        %870 = vdwg.mxu0
        %vm871 = vcmp.gt.f32.partialorder %v866, 0.0
        %v872 = vmul.f32 %v866, 0.2
        %v873 = vsel %vm871, %v866, %v872
        %v874 = vpack.c.bf16 %v873, %v873
        %v875 = vld [vmem:[#allocation8] sm:$0xff]
        %v876 = vld [vmem:[#allocation8 + $0x8] sm:$0xff]
        %v877 = vld [vmem:[#allocation8 + $0x10] sm:$0xff]
        %v878 = vld [vmem:[#allocation8 + $0x18] sm:$0xff]
        %v879 = vld [vmem:[#allocation8 + $0x20] sm:$0xff]
        %v880 = vld [vmem:[#allocation8 + $0x28] sm:$0xff]
        %v881 = vld [vmem:[#allocation8 + $0x30] sm:$0xff]
        %v882 = vld [vmem:[#allocation8 + $0x38] sm:$0xff]
        %v883 = vld [vmem:[#allocation8 + $0x40] sm:$0xff]
        %v884 = vld [vmem:[#allocation8 + $0x48] sm:$0xff]
        %v885 = vld [vmem:[#allocation8 + $0x50] sm:$0xff]
        %v886 = vld [vmem:[#allocation8 + $0x58] sm:$0xff]
        %v887 = vld [vmem:[#allocation8 + $0x60] sm:$0xff]
        %v888 = vld [vmem:[#allocation8 + $0x68] sm:$0xff]
        %v889 = vld [vmem:[#allocation8 + $0x70] sm:$0xff]
        %v890 = vld [vmem:[#allocation8 + $0x78] sm:$0xff]
        %v891 = vld [vmem:[#allocation10] sm:$0x3]
        %v893 = vlaneseq
        %v894 = vshrl.u32 %v893, 7
        %v895 = vsub.s32 0, %v894
        %v896 = vrot.slane %v891, %v895
        %v897 = vlaneseq
        %v898 = vshrl.u32 %v897, 7
        %v899 = vsub.s32 1, %v898
        %v900 = vrot.slane %v891, %v899
        %v919 = vunpack.c.l.b16 %v875
        %v920 = vunpack.c.h.b16 %v875
        %v921 = vunpack.c.l.b16 %v876
        %v922 = vunpack.c.h.b16 %v876
        %v923 = vunpack.c.l.b16 %v877
        %v924 = vunpack.c.h.b16 %v877
        %v925 = vunpack.c.l.b16 %v878
        %v926 = vunpack.c.h.b16 %v878
        %v927 = vunpack.c.l.b16 %v879
        %v928 = vunpack.c.h.b16 %v879
        %v929 = vunpack.c.l.b16 %v880
        %v930 = vunpack.c.h.b16 %v880
        %v931 = vunpack.c.l.b16 %v881
        %v932 = vunpack.c.h.b16 %v881
        %v933 = vunpack.c.l.b16 %v882
        %v934 = vunpack.c.h.b16 %v882
        %v935 = vunpack.c.l.b16 %v883
        %v936 = vunpack.c.h.b16 %v883
        %v937 = vunpack.c.l.b16 %v884
        %v938 = vunpack.c.h.b16 %v884
        %v939 = vunpack.c.l.b16 %v885
        %v940 = vunpack.c.h.b16 %v885
        %v941 = vunpack.c.l.b16 %v886
        %v942 = vunpack.c.h.b16 %v886
        %v943 = vunpack.c.l.b16 %v887
        %v944 = vunpack.c.h.b16 %v887
        %v945 = vunpack.c.l.b16 %v888
        %v946 = vunpack.c.h.b16 %v888
        %v947 = vunpack.c.l.b16 %v889
        %v948 = vunpack.c.h.b16 %v889
        %v949 = vunpack.c.l.b16 %v890
        %v950 = vunpack.c.h.b16 %v890
        %v951 = vpack.c.b16 %v921, %v919
        %v952 = vpack.c.b16 %v922, %v920
        %v953 = vpack.c.b16 %v925, %v923
        %v954 = vpack.c.b16 %v926, %v924
        %v955 = vpack.c.b16 %v929, %v927
        %v956 = vpack.c.b16 %v930, %v928
        %v957 = vpack.c.b16 %v933, %v931
        %v958 = vpack.c.b16 %v934, %v932
        %v959 = vpack.c.b16 %v937, %v935
        %v960 = vpack.c.b16 %v938, %v936
        %v961 = vpack.c.b16 %v941, %v939
        %v962 = vpack.c.b16 %v942, %v940
        %v963 = vpack.c.b16 %v945, %v943
        %v964 = vpack.c.b16 %v946, %v944
        %v965 = vpack.c.b16 %v949, %v947
        %v966 = vpack.c.b16 %v950, %v948
        %983 = vmatprep.subr.bf16.mxu0 %v966
        %984 = vmatpush1.bf16.msra.mxu0 %v965
        %985 = vmatprep.subr.bf16.mxu0 %v964
        %986 = vmatpush1.bf16.msra.mxu0 %v963
        %987 = vmatprep.subr.bf16.mxu0 %v962
        %988 = vmatpush1.bf16.msra.mxu0 %v961
        %989 = vmatprep.subr.bf16.mxu0 %v960
        %990 = vmatpush1.bf16.msra.mxu0 %v959
        %991 = vmatprep.subr.bf16.mxu0 %v958
        %992 = vmatpush1.bf16.msra.mxu0 %v957
        %993 = vmatprep.subr.bf16.mxu0 %v956
        %994 = vmatpush1.bf16.msra.mxu0 %v955
        %995 = vmatprep.subr.bf16.mxu0 %v954
        %996 = vmatpush1.bf16.msra.mxu0 %v953
        %997 = vmatprep.subr.bf16.mxu0 %v952
        %998 = vmatpush1.bf16.msra.mxu0 %v951
        %999 = vmatprep.subr.bf16.mxu0 0
        %1000 = vmatpush2.bf16.msra.mxu0 0
        %1001 = vmatprep.subr.bf16.mxu0 0
        %1002 = vmatpush2.bf16.msra.mxu0 0
        %1003 = vmatprep.subr.bf16.mxu0 0
        %1004 = vmatpush2.bf16.msra.mxu0 0
        %1005 = vmatprep.subr.bf16.mxu0 0
        %1006 = vmatpush2.bf16.msra.mxu0 0
        %1007 = vmatprep.subr.bf16.mxu0 0
        %1008 = vmatpush2.bf16.msra.mxu0 0
        %1009 = vmatprep.subr.bf16.mxu0 0
        %1010 = vmatpush2.bf16.msra.mxu0 0
        %1011 = vmatprep.subr.bf16.mxu0 0
        %1012 = vmatpush2.bf16.msra.mxu0 0
        %1013 = vmatprep.subr.bf16.mxu0 0
        %1014 = vmatpush2.bf16.msra.mxu0 0
        %1015 = vmatprep.mubr.bf16.mxu0 0
        %1016 = vmatmul.mubr.bf16.gmra.mxu0 %v874
        %v1017 = vpop.f32.mrf.mxu0
        %v1018 = vadd.f32 %v896, %v1017
        %v1019 = vpop.f32.mrf.mxu0
        %v1020 = vadd.f32 %v900, %v1019
        %v1021 = vpop.f32.mrf.mxu0
        %v1022 = vpop.f32.mrf.mxu0
        %1023 = vdwg.mxu0
        %v1024 = vrot.slane %v1018, 4
        %v1025 = vadd.f32 %v1018, %v1024
        %v1026 = vrot.slane %v1025, 2
        %v1027 = vadd.f32 %v1025, %v1026
        %v1028 = vrot.slane %v1027, 1
        %v1029 = vadd.f32 %v1027, %v1028
        %v1030 = vrot.slane %v1020, 4
        %v1031 = vadd.f32 %v1020, %v1030
        %v1032 = vrot.slane %v1031, 2
        %v1033 = vadd.f32 %v1031, %v1032
        %v1034 = vrot.slane %v1033, 1
        %v1035 = vadd.f32 %v1033, %v1034
        %v1036 = vmul.f32 %v1018, %v1018
        %v1037 = vmul.f32 %v1020, %v1020
        %v1038 = vrot.slane %v1036, 4
        %v1039 = vadd.f32 %v1036, %v1038
        %v1040 = vrot.slane %v1039, 2
        %v1041 = vadd.f32 %v1039, %v1040
        %v1042 = vrot.slane %v1041, 1
        %v1043 = vadd.f32 %v1041, %v1042
        %v1044 = vrot.slane %v1037, 4
        %v1045 = vadd.f32 %v1037, %v1044
        %v1046 = vrot.slane %v1045, 2
        %v1047 = vadd.f32 %v1045, %v1046
        %v1048 = vrot.slane %v1047, 1
        %v1049 = vadd.f32 %v1047, %v1048
        %v1050 = vmul.f32 %v1029, 0.125
        %v1051 = vmul.f32 %v1035, 0.125
        %v1052 = vmul.f32 %v1043, 0.125
        %v1053 = vmul.f32 %v1049, 0.125
        %v1054 = vmul.f32 %v1050, %v1050
        %v1055 = vmul.f32 %v1051, %v1051
        %v1056 = vsub.f32 %v1052, %v1054
        %v1057 = vsub.f32 %v1053, %v1055
        %v1058 = vadd.f32 %v1056, 0.8
        %v1059 = vadd.f32 %v1057, 0.8
        %v1060 = vrsqrt.pop %v1058
        %v1061 = vrsqrt.pop %v1059
        %v1062 = vld [vmem:[#allocation11] sm:$0x3]
        %v1064 = vlaneseq
        %v1065 = vshrl.u32 %v1064, 7
        %v1066 = vsub.s32 0, %v1065
        %v1067 = vrot.slane %v1062, %v1066
        %v1068 = vlaneseq
        %v1069 = vshrl.u32 %v1068, 7
        %v1070 = vsub.s32 1, %v1069
        %v1071 = vrot.slane %v1062, %v1070
        %v1074 = vmul.f32 %v1060, %v1067
        %v1075 = vmul.f32 %v1061, %v1071
        %v1076 = vld [vmem:[#allocation13] sm:$0x3]
        %v1077 = vmul.f32 %v1050, %v1074
        %v1078 = vmul.f32 %v1051, %v1075
        %v1081 = vcombine.low %v1077, %v1078
        %v1083 = vunpack.c.l.s4 1966171168
        %v1084 = vunpack.c.0.s8 %v1083
        %v1085 = vlaneseq
        %v1086 = vshrl.u32 %v1085, 7
        %v1087 = vsub.s32 %v1084, %v1086
        %v1088 = vrot.slane %v1081, %v1087
        %v1090 = vunpack.c.l.s4 1966171168
        %v1091 = vunpack.c.0.s8 %v1090
        %v1092 = vlaneseq
        %v1093 = vshrl.u32 %v1092, 7
        %v1094 = vsub.s32 %v1091, %v1093
        %v1095 = vrot.slane %v1088, %v1094
        %v1097 = vsub.f32 %v1076, %v1095
        %v1098 = vlaneseq
        %v1099 = vshrl.u32 %v1098, 7
        %v1100 = vsub.s32 0, %v1099
        %v1101 = vrot.slane %v1074, %v1100
        %v1102 = vlaneseq
        %v1103 = vshrl.u32 %v1102, 7
        %v1104 = vsub.s32 0, %v1103
        %v1105 = vrot.slane %v1075, %v1104
        %v1106 = vmul.f32 %v1018, %v1101
        %v1107 = vmul.f32 %v1020, %v1105
        %v1109 = vlaneseq
        %v1110 = vshrl.u32 %v1109, 7
        %v1111 = vsub.s32 0, %v1110
        %v1112 = vrot.slane %v1097, %v1111
        %v1113 = vlaneseq
        %v1114 = vshrl.u32 %v1113, 7
        %v1115 = vsub.s32 1, %v1114
        %v1116 = vrot.slane %v1097, %v1115
        %v1119 = vadd.f32 %v1106, %v1112
        %v1120 = vadd.f32 %v1107, %v1116
        %vm1121 = vcmp.gt.f32.partialorder %v1119, 0.0
        %vm1122 = vcmp.gt.f32.partialorder %v1120, 0.0
        %v1123 = vmul.f32 %v1119, 0.2
        %v1124 = vmul.f32 %v1120, 0.2
        %v1125 = vsel %vm1121, %v1119, %v1123
        %v1126 = vsel %vm1122, %v1120, %v1124
        %v1127 = vpack.c.bf16 %v1125, %v1125
        %v1128 = vpack.c.bf16 %v1126, %v1126
        %v1129 = vld [vmem:[#allocation14] sm:$0xff]
        %v1130 = vld [vmem:[#allocation14 + $0x8] sm:$0xff]
        %v1131 = vld [vmem:[#allocation14 + $0x10] sm:$0xff]
        %v1132 = vld [vmem:[#allocation14 + $0x18] sm:$0xff]
        %v1133 = vld [vmem:[#allocation14 + $0x20] sm:$0xff]
        %v1134 = vld [vmem:[#allocation14 + $0x28] sm:$0xff]
        %v1135 = vld [vmem:[#allocation14 + $0x30] sm:$0xff]
        %v1136 = vld [vmem:[#allocation14 + $0x38] sm:$0xff]
        %v1137 = vld [vmem:[#allocation14 + $0x40] sm:$0xff]
        %v1138 = vld [vmem:[#allocation14 + $0x48] sm:$0xff]
        %v1139 = vld [vmem:[#allocation14 + $0x50] sm:$0xff]
        %v1140 = vld [vmem:[#allocation14 + $0x58] sm:$0xff]
        %v1141 = vld [vmem:[#allocation14 + $0x60] sm:$0xff]
        %v1142 = vld [vmem:[#allocation14 + $0x68] sm:$0xff]
        %v1143 = vld [vmem:[#allocation14 + $0x70] sm:$0xff]
        %v1144 = vld [vmem:[#allocation14 + $0x78] sm:$0xff]
        %v1145 = vld [vmem:[#allocation14 + $0x80] sm:$0xff]
        %v1146 = vld [vmem:[#allocation14 + $0x88] sm:$0xff]
        %v1147 = vld [vmem:[#allocation14 + $0x90] sm:$0xff]
        %v1148 = vld [vmem:[#allocation14 + $0x98] sm:$0xff]
        %v1149 = vld [vmem:[#allocation14 + $0xa0] sm:$0xff]
        %v1150 = vld [vmem:[#allocation14 + $0xa8] sm:$0xff]
        %v1151 = vld [vmem:[#allocation14 + $0xb0] sm:$0xff]
        %v1152 = vld [vmem:[#allocation14 + $0xb8] sm:$0xff]
        %v1153 = vld [vmem:[#allocation14 + $0xc0] sm:$0xff]
        %v1154 = vld [vmem:[#allocation14 + $0xc8] sm:$0xff]
        %v1155 = vld [vmem:[#allocation14 + $0xd0] sm:$0xff]
        %v1156 = vld [vmem:[#allocation14 + $0xd8] sm:$0xff]
        %v1157 = vld [vmem:[#allocation14 + $0xe0] sm:$0xff]
        %v1158 = vld [vmem:[#allocation14 + $0xe8] sm:$0xff]
        %v1159 = vld [vmem:[#allocation14 + $0xf0] sm:$0xff]
        %v1160 = vld [vmem:[#allocation14 + $0xf8] sm:$0xff]
        %v1161 = vld [vmem:[#allocation14 + $0x100] sm:$0xff]
        %v1162 = vld [vmem:[#allocation14 + $0x108] sm:$0xff]
        %v1163 = vld [vmem:[#allocation14 + $0x110] sm:$0xff]
        %v1164 = vld [vmem:[#allocation14 + $0x118] sm:$0xff]
        %v1165 = vld [vmem:[#allocation14 + $0x120] sm:$0xff]
        %v1166 = vld [vmem:[#allocation14 + $0x128] sm:$0xff]
        %v1167 = vld [vmem:[#allocation14 + $0x130] sm:$0xff]
        %v1168 = vld [vmem:[#allocation14 + $0x138] sm:$0xff]
        %v1169 = vld [vmem:[#allocation14 + $0x140] sm:$0xff]
        %v1170 = vld [vmem:[#allocation14 + $0x148] sm:$0xff]
        %v1171 = vld [vmem:[#allocation14 + $0x150] sm:$0xff]
        %v1172 = vld [vmem:[#allocation14 + $0x158] sm:$0xff]
        %v1173 = vld [vmem:[#allocation14 + $0x160] sm:$0xff]
        %v1174 = vld [vmem:[#allocation14 + $0x168] sm:$0xff]
        %v1175 = vld [vmem:[#allocation14 + $0x170] sm:$0xff]
        %v1176 = vld [vmem:[#allocation14 + $0x178] sm:$0xff]
        %v1177 = vld [vmem:[#allocation14 + $0x180] sm:$0xff]
        %v1178 = vld [vmem:[#allocation14 + $0x188] sm:$0xff]
        %v1179 = vld [vmem:[#allocation14 + $0x190] sm:$0xff]
        %v1180 = vld [vmem:[#allocation14 + $0x198] sm:$0xff]
        %v1181 = vld [vmem:[#allocation14 + $0x1a0] sm:$0xff]
        %v1182 = vld [vmem:[#allocation14 + $0x1a8] sm:$0xff]
        %v1183 = vld [vmem:[#allocation14 + $0x1b0] sm:$0xff]
        %v1184 = vld [vmem:[#allocation14 + $0x1b8] sm:$0xff]
        %v1185 = vld [vmem:[#allocation14 + $0x1c0] sm:$0xff]
        %v1186 = vld [vmem:[#allocation14 + $0x1c8] sm:$0xff]
        %v1187 = vld [vmem:[#allocation14 + $0x1d0] sm:$0xff]
        %v1188 = vld [vmem:[#allocation14 + $0x1d8] sm:$0xff]
        %v1189 = vld [vmem:[#allocation14 + $0x1e0] sm:$0xff]
        %v1190 = vld [vmem:[#allocation14 + $0x1e8] sm:$0xff]
        %v1191 = vld [vmem:[#allocation14 + $0x1f0] sm:$0xff]
        %v1192 = vld [vmem:[#allocation14 + $0x1f8] sm:$0xff]
        %v1193 = vld [vmem:[#allocation16] sm:$0xf]
        %v1195 = vlaneseq
        %v1196 = vshrl.u32 %v1195, 7
        %v1197 = vsub.s32 0, %v1196
        %v1198 = vrot.slane %v1193, %v1197
        %v1199 = vlaneseq
        %v1200 = vshrl.u32 %v1199, 7
        %v1201 = vsub.s32 1, %v1200
        %v1202 = vrot.slane %v1193, %v1201
        %v1203 = vlaneseq
        %v1204 = vshrl.u32 %v1203, 7
        %v1205 = vsub.s32 2, %v1204
        %v1206 = vrot.slane %v1193, %v1205
        %v1207 = vlaneseq
        %v1208 = vshrl.u32 %v1207, 7
        %v1209 = vsub.s32 3, %v1208
        %v1210 = vrot.slane %v1193, %v1209
        %v1279 = vunpack.c.l.b16 %v1129
        %v1280 = vunpack.c.h.b16 %v1129
        %v1281 = vunpack.c.l.b16 %v1130
        %v1282 = vunpack.c.h.b16 %v1130
        %v1283 = vunpack.c.l.b16 %v1131
        %v1284 = vunpack.c.h.b16 %v1131
        %v1285 = vunpack.c.l.b16 %v1132
        %v1286 = vunpack.c.h.b16 %v1132
        %v1287 = vunpack.c.l.b16 %v1133
        %v1288 = vunpack.c.h.b16 %v1133
        %v1289 = vunpack.c.l.b16 %v1134
        %v1290 = vunpack.c.h.b16 %v1134
        %v1291 = vunpack.c.l.b16 %v1135
        %v1292 = vunpack.c.h.b16 %v1135
        %v1293 = vunpack.c.l.b16 %v1136
        %v1294 = vunpack.c.h.b16 %v1136
        %v1295 = vunpack.c.l.b16 %v1137
        %v1296 = vunpack.c.h.b16 %v1137
        %v1297 = vunpack.c.l.b16 %v1138
        %v1298 = vunpack.c.h.b16 %v1138
        %v1299 = vunpack.c.l.b16 %v1139
        %v1300 = vunpack.c.h.b16 %v1139
        %v1301 = vunpack.c.l.b16 %v1140
        %v1302 = vunpack.c.h.b16 %v1140
        %v1303 = vunpack.c.l.b16 %v1141
        %v1304 = vunpack.c.h.b16 %v1141
        %v1305 = vunpack.c.l.b16 %v1142
        %v1306 = vunpack.c.h.b16 %v1142
        %v1307 = vunpack.c.l.b16 %v1143
        %v1308 = vunpack.c.h.b16 %v1143
        %v1309 = vunpack.c.l.b16 %v1144
        %v1310 = vunpack.c.h.b16 %v1144
        %v1311 = vunpack.c.l.b16 %v1145
        %v1312 = vunpack.c.h.b16 %v1145
        %v1313 = vunpack.c.l.b16 %v1146
        %v1314 = vunpack.c.h.b16 %v1146
        %v1315 = vunpack.c.l.b16 %v1147
        %v1316 = vunpack.c.h.b16 %v1147
        %v1317 = vunpack.c.l.b16 %v1148
        %v1318 = vunpack.c.h.b16 %v1148
        %v1319 = vunpack.c.l.b16 %v1149
        %v1320 = vunpack.c.h.b16 %v1149
        %v1321 = vunpack.c.l.b16 %v1150
        %v1322 = vunpack.c.h.b16 %v1150
        %v1323 = vunpack.c.l.b16 %v1151
        %v1324 = vunpack.c.h.b16 %v1151
        %v1325 = vunpack.c.l.b16 %v1152
        %v1326 = vunpack.c.h.b16 %v1152
        %v1327 = vunpack.c.l.b16 %v1153
        %v1328 = vunpack.c.h.b16 %v1153
        %v1329 = vunpack.c.l.b16 %v1154
        %v1330 = vunpack.c.h.b16 %v1154
        %v1331 = vunpack.c.l.b16 %v1155
        %v1332 = vunpack.c.h.b16 %v1155
        %v1333 = vunpack.c.l.b16 %v1156
        %v1334 = vunpack.c.h.b16 %v1156
        %v1335 = vunpack.c.l.b16 %v1157
        %v1336 = vunpack.c.h.b16 %v1157
        %v1337 = vunpack.c.l.b16 %v1158
        %v1338 = vunpack.c.h.b16 %v1158
        %v1339 = vunpack.c.l.b16 %v1159
        %v1340 = vunpack.c.h.b16 %v1159
        %v1341 = vunpack.c.l.b16 %v1160
        %v1342 = vunpack.c.h.b16 %v1160
        %v1343 = vunpack.c.l.b16 %v1161
        %v1344 = vunpack.c.h.b16 %v1161
        %v1345 = vunpack.c.l.b16 %v1162
        %v1346 = vunpack.c.h.b16 %v1162
        %v1347 = vunpack.c.l.b16 %v1163
        %v1348 = vunpack.c.h.b16 %v1163
        %v1349 = vunpack.c.l.b16 %v1164
        %v1350 = vunpack.c.h.b16 %v1164
        %v1351 = vunpack.c.l.b16 %v1165
        %v1352 = vunpack.c.h.b16 %v1165
        %v1353 = vunpack.c.l.b16 %v1166
        %v1354 = vunpack.c.h.b16 %v1166
        %v1355 = vunpack.c.l.b16 %v1167
        %v1356 = vunpack.c.h.b16 %v1167
        %v1357 = vunpack.c.l.b16 %v1168
        %v1358 = vunpack.c.h.b16 %v1168
        %v1359 = vunpack.c.l.b16 %v1169
        %v1360 = vunpack.c.h.b16 %v1169
        %v1361 = vunpack.c.l.b16 %v1170
        %v1362 = vunpack.c.h.b16 %v1170
        %v1363 = vunpack.c.l.b16 %v1171
        %v1364 = vunpack.c.h.b16 %v1171
        %v1365 = vunpack.c.l.b16 %v1172
        %v1366 = vunpack.c.h.b16 %v1172
        %v1367 = vunpack.c.l.b16 %v1173
        %v1368 = vunpack.c.h.b16 %v1173
        %v1369 = vunpack.c.l.b16 %v1174
        %v1370 = vunpack.c.h.b16 %v1174
        %v1371 = vunpack.c.l.b16 %v1175
        %v1372 = vunpack.c.h.b16 %v1175
        %v1373 = vunpack.c.l.b16 %v1176
        %v1374 = vunpack.c.h.b16 %v1176
        %v1375 = vunpack.c.l.b16 %v1177
        %v1376 = vunpack.c.h.b16 %v1177
        %v1377 = vunpack.c.l.b16 %v1178
        %v1378 = vunpack.c.h.b16 %v1178
        %v1379 = vunpack.c.l.b16 %v1179
        %v1380 = vunpack.c.h.b16 %v1179
        %v1381 = vunpack.c.l.b16 %v1180
        %v1382 = vunpack.c.h.b16 %v1180
        %v1383 = vunpack.c.l.b16 %v1181
        %v1384 = vunpack.c.h.b16 %v1181
        %v1385 = vunpack.c.l.b16 %v1182
        %v1386 = vunpack.c.h.b16 %v1182
        %v1387 = vunpack.c.l.b16 %v1183
        %v1388 = vunpack.c.h.b16 %v1183
        %v1389 = vunpack.c.l.b16 %v1184
        %v1390 = vunpack.c.h.b16 %v1184
        %v1391 = vunpack.c.l.b16 %v1185
        %v1392 = vunpack.c.h.b16 %v1185
        %v1393 = vunpack.c.l.b16 %v1186
        %v1394 = vunpack.c.h.b16 %v1186
        %v1395 = vunpack.c.l.b16 %v1187
        %v1396 = vunpack.c.h.b16 %v1187
        %v1397 = vunpack.c.l.b16 %v1188
        %v1398 = vunpack.c.h.b16 %v1188
        %v1399 = vunpack.c.l.b16 %v1189
        %v1400 = vunpack.c.h.b16 %v1189
        %v1401 = vunpack.c.l.b16 %v1190
        %v1402 = vunpack.c.h.b16 %v1190
        %v1403 = vunpack.c.l.b16 %v1191
        %v1404 = vunpack.c.h.b16 %v1191
        %v1405 = vunpack.c.l.b16 %v1192
        %v1406 = vunpack.c.h.b16 %v1192
        %v1407 = vpack.c.b16 %v1283, %v1279
        %v1408 = vpack.c.b16 %v1284, %v1280
        %v1409 = vpack.c.b16 %v1285, %v1281
        %v1410 = vpack.c.b16 %v1286, %v1282
        %v1411 = vpack.c.b16 %v1291, %v1287
        %v1412 = vpack.c.b16 %v1292, %v1288
        %v1413 = vpack.c.b16 %v1293, %v1289
        %v1414 = vpack.c.b16 %v1294, %v1290
        %v1415 = vpack.c.b16 %v1299, %v1295
        %v1416 = vpack.c.b16 %v1300, %v1296
        %v1417 = vpack.c.b16 %v1301, %v1297
        %v1418 = vpack.c.b16 %v1302, %v1298
        %v1419 = vpack.c.b16 %v1307, %v1303
        %v1420 = vpack.c.b16 %v1308, %v1304
        %v1421 = vpack.c.b16 %v1309, %v1305
        %v1422 = vpack.c.b16 %v1310, %v1306
        %v1423 = vpack.c.b16 %v1315, %v1311
        %v1424 = vpack.c.b16 %v1316, %v1312
        %v1425 = vpack.c.b16 %v1317, %v1313
        %v1426 = vpack.c.b16 %v1318, %v1314
        %v1427 = vpack.c.b16 %v1323, %v1319
        %v1428 = vpack.c.b16 %v1324, %v1320
        %v1429 = vpack.c.b16 %v1325, %v1321
        %v1430 = vpack.c.b16 %v1326, %v1322
        %v1431 = vpack.c.b16 %v1331, %v1327
        %v1432 = vpack.c.b16 %v1332, %v1328
        %v1433 = vpack.c.b16 %v1333, %v1329
        %v1434 = vpack.c.b16 %v1334, %v1330
        %v1435 = vpack.c.b16 %v1339, %v1335
        %v1436 = vpack.c.b16 %v1340, %v1336
        %v1437 = vpack.c.b16 %v1341, %v1337
        %v1438 = vpack.c.b16 %v1342, %v1338
        %v1439 = vpack.c.b16 %v1347, %v1343
        %v1440 = vpack.c.b16 %v1348, %v1344
        %v1441 = vpack.c.b16 %v1349, %v1345
        %v1442 = vpack.c.b16 %v1350, %v1346
        %v1443 = vpack.c.b16 %v1355, %v1351
        %v1444 = vpack.c.b16 %v1356, %v1352
        %v1445 = vpack.c.b16 %v1357, %v1353
        %v1446 = vpack.c.b16 %v1358, %v1354
        %v1447 = vpack.c.b16 %v1363, %v1359
        %v1448 = vpack.c.b16 %v1364, %v1360
        %v1449 = vpack.c.b16 %v1365, %v1361
        %v1450 = vpack.c.b16 %v1366, %v1362
        %v1451 = vpack.c.b16 %v1371, %v1367
        %v1452 = vpack.c.b16 %v1372, %v1368
        %v1453 = vpack.c.b16 %v1373, %v1369
        %v1454 = vpack.c.b16 %v1374, %v1370
        %v1455 = vpack.c.b16 %v1379, %v1375
        %v1456 = vpack.c.b16 %v1380, %v1376
        %v1457 = vpack.c.b16 %v1381, %v1377
        %v1458 = vpack.c.b16 %v1382, %v1378
        %v1459 = vpack.c.b16 %v1387, %v1383
        %v1460 = vpack.c.b16 %v1388, %v1384
        %v1461 = vpack.c.b16 %v1389, %v1385
        %v1462 = vpack.c.b16 %v1390, %v1386
        %v1463 = vpack.c.b16 %v1395, %v1391
        %v1464 = vpack.c.b16 %v1396, %v1392
        %v1465 = vpack.c.b16 %v1397, %v1393
        %v1466 = vpack.c.b16 %v1398, %v1394
        %v1467 = vpack.c.b16 %v1403, %v1399
        %v1468 = vpack.c.b16 %v1404, %v1400
        %v1469 = vpack.c.b16 %v1405, %v1401
        %v1470 = vpack.c.b16 %v1406, %v1402
        %1535 = vmatprep.subr.bf16.mxu0 %v1436
        %1536 = vmatpush1.bf16.msra.mxu0 %v1435
        %1537 = vmatprep.subr.bf16.mxu0 %v1432
        %1538 = vmatpush1.bf16.msra.mxu0 %v1431
        %1539 = vmatprep.subr.bf16.mxu0 %v1428
        %1540 = vmatpush1.bf16.msra.mxu0 %v1427
        %1541 = vmatprep.subr.bf16.mxu0 %v1424
        %1542 = vmatpush1.bf16.msra.mxu0 %v1423
        %1543 = vmatprep.subr.bf16.mxu0 %v1420
        %1544 = vmatpush1.bf16.msra.mxu0 %v1419
        %1545 = vmatprep.subr.bf16.mxu0 %v1416
        %1546 = vmatpush1.bf16.msra.mxu0 %v1415
        %1547 = vmatprep.subr.bf16.mxu0 %v1412
        %1548 = vmatpush1.bf16.msra.mxu0 %v1411
        %1549 = vmatprep.subr.bf16.mxu0 %v1408
        %1550 = vmatpush1.bf16.msra.mxu0 %v1407
        %1551 = vmatprep.subr.bf16.mxu0 %v1468
        %1552 = vmatpush2.bf16.msra.mxu0 %v1467
        %1553 = vmatprep.subr.bf16.mxu0 %v1464
        %1554 = vmatpush2.bf16.msra.mxu0 %v1463
        %1555 = vmatprep.subr.bf16.mxu0 %v1460
        %1556 = vmatpush2.bf16.msra.mxu0 %v1459
        %1557 = vmatprep.subr.bf16.mxu0 %v1456
        %1558 = vmatpush2.bf16.msra.mxu0 %v1455
        %1559 = vmatprep.subr.bf16.mxu0 %v1452
        %1560 = vmatpush2.bf16.msra.mxu0 %v1451
        %1561 = vmatprep.subr.bf16.mxu0 %v1448
        %1562 = vmatpush2.bf16.msra.mxu0 %v1447
        %1563 = vmatprep.subr.bf16.mxu0 %v1444
        %1564 = vmatpush2.bf16.msra.mxu0 %v1443
        %1565 = vmatprep.subr.bf16.mxu0 %v1440
        %1566 = vmatpush2.bf16.msra.mxu0 %v1439
        %1567 = vmatprep.mubr.bf16.mxu0 %v1128
        %1568 = vmatmul.mubr.bf16.gmra.mxu0 %v1127
        %v1569 = vpop.f32.mrf.mxu0
        %v1570 = vadd.f32 %v1198, %v1569
        %v1571 = vpop.f32.mrf.mxu0
        %v1572 = vadd.f32 %v1202, %v1571
        %v1573 = vpop.f32.mrf.mxu0
        %v1574 = vpop.f32.mrf.mxu0
        %1575 = vdwg.mxu0
        %1576 = vmatprep.subr.bf16.mxu0 %v1438
        %1577 = vmatpush1.bf16.msra.mxu0 %v1437
        %1578 = vmatprep.subr.bf16.mxu0 %v1434
        %1579 = vmatpush1.bf16.msra.mxu0 %v1433
        %1580 = vmatprep.subr.bf16.mxu0 %v1430
        %1581 = vmatpush1.bf16.msra.mxu0 %v1429
        %1582 = vmatprep.subr.bf16.mxu0 %v1426
        %1583 = vmatpush1.bf16.msra.mxu0 %v1425
        %1584 = vmatprep.subr.bf16.mxu0 %v1422
        %1585 = vmatpush1.bf16.msra.mxu0 %v1421
        %1586 = vmatprep.subr.bf16.mxu0 %v1418
        %1587 = vmatpush1.bf16.msra.mxu0 %v1417
        %1588 = vmatprep.subr.bf16.mxu0 %v1414
        %1589 = vmatpush1.bf16.msra.mxu0 %v1413
        %1590 = vmatprep.subr.bf16.mxu0 %v1410
        %1591 = vmatpush1.bf16.msra.mxu0 %v1409
        %1592 = vmatprep.subr.bf16.mxu0 %v1470
        %1593 = vmatpush2.bf16.msra.mxu0 %v1469
        %1594 = vmatprep.subr.bf16.mxu0 %v1466
        %1595 = vmatpush2.bf16.msra.mxu0 %v1465
        %1596 = vmatprep.subr.bf16.mxu0 %v1462
        %1597 = vmatpush2.bf16.msra.mxu0 %v1461
        %1598 = vmatprep.subr.bf16.mxu0 %v1458
        %1599 = vmatpush2.bf16.msra.mxu0 %v1457
        %1600 = vmatprep.subr.bf16.mxu0 %v1454
        %1601 = vmatpush2.bf16.msra.mxu0 %v1453
        %1602 = vmatprep.subr.bf16.mxu0 %v1450
        %1603 = vmatpush2.bf16.msra.mxu0 %v1449
        %1604 = vmatprep.subr.bf16.mxu0 %v1446
        %1605 = vmatpush2.bf16.msra.mxu0 %v1445
        %1606 = vmatprep.subr.bf16.mxu0 %v1442
        %1607 = vmatpush2.bf16.msra.mxu0 %v1441
        %1608 = vmatprep.mubr.bf16.mxu0 %v1128
        %1609 = vmatmul.mubr.bf16.gmra.mxu0 %v1127
        %v1610 = vpop.f32.mrf.mxu0
        %v1611 = vadd.f32 %v1206, %v1610
        %v1612 = vpop.f32.mrf.mxu0
        %v1613 = vadd.f32 %v1210, %v1612
        %v1614 = vpop.f32.mrf.mxu0
        %v1615 = vpop.f32.mrf.mxu0
        %1616 = vdwg.mxu0
        %v1617 = vrot.slane %v1570, 4
        %v1618 = vadd.f32 %v1570, %v1617
        %v1619 = vrot.slane %v1618, 2
        %v1620 = vadd.f32 %v1618, %v1619
        %v1621 = vrot.slane %v1620, 1
        %v1622 = vadd.f32 %v1620, %v1621
        %v1623 = vrot.slane %v1572, 4
        %v1624 = vadd.f32 %v1572, %v1623
        %v1625 = vrot.slane %v1624, 2
        %v1626 = vadd.f32 %v1624, %v1625
        %v1627 = vrot.slane %v1626, 1
        %v1628 = vadd.f32 %v1626, %v1627
        %v1629 = vrot.slane %v1611, 4
        %v1630 = vadd.f32 %v1611, %v1629
        %v1631 = vrot.slane %v1630, 2
        %v1632 = vadd.f32 %v1630, %v1631
        %v1633 = vrot.slane %v1632, 1
        %v1634 = vadd.f32 %v1632, %v1633
        %v1635 = vrot.slane %v1613, 4
        %v1636 = vadd.f32 %v1613, %v1635
        %v1637 = vrot.slane %v1636, 2
        %v1638 = vadd.f32 %v1636, %v1637
        %v1639 = vrot.slane %v1638, 1
        %v1640 = vadd.f32 %v1638, %v1639
        %v1641 = vmul.f32 %v1570, %v1570
        %v1642 = vmul.f32 %v1572, %v1572
        %v1643 = vmul.f32 %v1611, %v1611
        %v1644 = vmul.f32 %v1613, %v1613
        %v1645 = vrot.slane %v1641, 4
        %v1646 = vadd.f32 %v1641, %v1645
        %v1647 = vrot.slane %v1646, 2
        %v1648 = vadd.f32 %v1646, %v1647
        %v1649 = vrot.slane %v1648, 1
        %v1650 = vadd.f32 %v1648, %v1649
        %v1651 = vrot.slane %v1642, 4
        %v1652 = vadd.f32 %v1642, %v1651
        %v1653 = vrot.slane %v1652, 2
        %v1654 = vadd.f32 %v1652, %v1653
        %v1655 = vrot.slane %v1654, 1
        %v1656 = vadd.f32 %v1654, %v1655
        %v1657 = vrot.slane %v1643, 4
        %v1658 = vadd.f32 %v1643, %v1657
        %v1659 = vrot.slane %v1658, 2
        %v1660 = vadd.f32 %v1658, %v1659
        %v1661 = vrot.slane %v1660, 1
        %v1662 = vadd.f32 %v1660, %v1661
        %v1663 = vrot.slane %v1644, 4
        %v1664 = vadd.f32 %v1644, %v1663
        %v1665 = vrot.slane %v1664, 2
        %v1666 = vadd.f32 %v1664, %v1665
        %v1667 = vrot.slane %v1666, 1
        %v1668 = vadd.f32 %v1666, %v1667
        %v1669 = vmul.f32 %v1622, 0.125
        %v1670 = vmul.f32 %v1628, 0.125
        %v1671 = vmul.f32 %v1634, 0.125
        %v1672 = vmul.f32 %v1640, 0.125
        %v1673 = vmul.f32 %v1650, 0.125
        %v1674 = vmul.f32 %v1656, 0.125
        %v1675 = vmul.f32 %v1662, 0.125
        %v1676 = vmul.f32 %v1668, 0.125
        %v1677 = vmul.f32 %v1669, %v1669
        %v1678 = vmul.f32 %v1670, %v1670
        %v1679 = vmul.f32 %v1671, %v1671
        %v1680 = vmul.f32 %v1672, %v1672
        %v1681 = vsub.f32 %v1673, %v1677
        %v1682 = vsub.f32 %v1674, %v1678
        %v1683 = vsub.f32 %v1675, %v1679
        %v1684 = vsub.f32 %v1676, %v1680
        %v1685 = vadd.f32 %v1681, 0.8
        %v1686 = vadd.f32 %v1682, 0.8
        %v1687 = vadd.f32 %v1683, 0.8
        %v1688 = vadd.f32 %v1684, 0.8
        %v1689 = vrsqrt.pop %v1685
        %v1690 = vrsqrt.pop %v1686
        %v1691 = vrsqrt.pop %v1687
        %v1692 = vrsqrt.pop %v1688
        %v1693 = vld [vmem:[#allocation17] sm:$0xf]
        %v1695 = vlaneseq
        %v1696 = vshrl.u32 %v1695, 7
        %v1697 = vsub.s32 0, %v1696
        %v1698 = vrot.slane %v1693, %v1697
        %v1699 = vlaneseq
        %v1700 = vshrl.u32 %v1699, 7
        %v1701 = vsub.s32 1, %v1700
        %v1702 = vrot.slane %v1693, %v1701
        %v1703 = vlaneseq
        %v1704 = vshrl.u32 %v1703, 7
        %v1705 = vsub.s32 2, %v1704
        %v1706 = vrot.slane %v1693, %v1705
        %v1707 = vlaneseq
        %v1708 = vshrl.u32 %v1707, 7
        %v1709 = vsub.s32 3, %v1708
        %v1710 = vrot.slane %v1693, %v1709
        %v1715 = vmul.f32 %v1689, %v1698
        %v1716 = vmul.f32 %v1690, %v1702
        %v1717 = vmul.f32 %v1691, %v1706
        %v1718 = vmul.f32 %v1692, %v1710
        %v1719 = vld [vmem:[#allocation19] sm:$0xf]
        %v1720 = vmul.f32 %v1669, %v1715
        %v1721 = vmul.f32 %v1670, %v1716
        %v1722 = vmul.f32 %v1671, %v1717
        %v1723 = vmul.f32 %v1672, %v1718
        %v1728 = vcombine.low %v1720, %v1721
        %v1729 = vcombine.low %v1722, %v1723
        %v1731 = vunpack.c.l.s4 1966171168
        %v1732 = vunpack.c.0.s8 %v1731
        %v1733 = vlaneseq
        %v1734 = vshrl.u32 %v1733, 7
        %v1735 = vsub.s32 %v1732, %v1734
        %v1736 = vrot.slane %v1728, %v1735
        %v1738 = vunpack.c.l.s4 1966171168
        %v1739 = vunpack.c.0.s8 %v1738
        %v1740 = vlaneseq
        %v1741 = vshrl.u32 %v1740, 7
        %v1742 = vsub.s32 %v1739, %v1741
        %v1743 = vrot.slane %v1729, %v1742
        %v1744 = vcombine.low %v1736, %v1743
        %v1746 = vunpack.c.l.s4 1966171168
        %v1747 = vunpack.c.0.s8 %v1746
        %v1748 = vlaneseq
        %v1749 = vshrl.u32 %v1748, 7
        %v1750 = vsub.s32 %v1747, %v1749
        %v1751 = vrot.slane %v1744, %v1750
        %v1753 = vsub.f32 %v1719, %v1751
        %v1754 = vlaneseq
        %v1755 = vshrl.u32 %v1754, 7
        %v1756 = vsub.s32 0, %v1755
        %v1757 = vrot.slane %v1715, %v1756
        %v1758 = vlaneseq
        %v1759 = vshrl.u32 %v1758, 7
        %v1760 = vsub.s32 0, %v1759
        %v1761 = vrot.slane %v1716, %v1760
        %v1762 = vlaneseq
        %v1763 = vshrl.u32 %v1762, 7
        %v1764 = vsub.s32 0, %v1763
        %v1765 = vrot.slane %v1717, %v1764
        %v1766 = vlaneseq
        %v1767 = vshrl.u32 %v1766, 7
        %v1768 = vsub.s32 0, %v1767
        %v1769 = vrot.slane %v1718, %v1768
        %v1770 = vmul.f32 %v1570, %v1757
        %v1771 = vmul.f32 %v1572, %v1761
        %v1772 = vmul.f32 %v1611, %v1765
        %v1773 = vmul.f32 %v1613, %v1769
        %v1775 = vlaneseq
        %v1776 = vshrl.u32 %v1775, 7
        %v1777 = vsub.s32 0, %v1776
        %v1778 = vrot.slane %v1753, %v1777
        %v1779 = vlaneseq
        %v1780 = vshrl.u32 %v1779, 7
        %v1781 = vsub.s32 1, %v1780
        %v1782 = vrot.slane %v1753, %v1781
        %v1783 = vlaneseq
        %v1784 = vshrl.u32 %v1783, 7
        %v1785 = vsub.s32 2, %v1784
        %v1786 = vrot.slane %v1753, %v1785
        %v1787 = vlaneseq
        %v1788 = vshrl.u32 %v1787, 7
        %v1789 = vsub.s32 3, %v1788
        %v1790 = vrot.slane %v1753, %v1789
        %v1795 = vadd.f32 %v1770, %v1778
        %v1796 = vadd.f32 %v1771, %v1782
        %v1797 = vadd.f32 %v1772, %v1786
        %v1798 = vadd.f32 %v1773, %v1790
        %vm1799 = vcmp.gt.f32.partialorder %v1795, 0.0
        %vm1800 = vcmp.gt.f32.partialorder %v1796, 0.0
        %vm1801 = vcmp.gt.f32.partialorder %v1797, 0.0
        %vm1802 = vcmp.gt.f32.partialorder %v1798, 0.0
        %v1803 = vmul.f32 %v1795, 0.2
        %v1804 = vmul.f32 %v1796, 0.2
        %v1805 = vmul.f32 %v1797, 0.2
        %v1806 = vmul.f32 %v1798, 0.2
        %v1807 = vsel %vm1799, %v1795, %v1803
        %v1808 = vsel %vm1800, %v1796, %v1804
        %v1809 = vsel %vm1801, %v1797, %v1805
        %v1810 = vsel %vm1802, %v1798, %v1806
        %v1811 = vpack.c.bf16 %v1807, %v1807
        %v1812 = vpack.c.bf16 %v1808, %v1808
        %v1813 = vpack.c.bf16 %v1809, %v1809
        %v1814 = vpack.c.bf16 %v1810, %v1810
        %v1815 = vld [vmem:[#allocation20] sm:$0xff]
        %v1816 = vld [vmem:[#allocation20 + $0x8] sm:$0xff]
        %v1817 = vld [vmem:[#allocation20 + $0x10] sm:$0xff]
        %v1818 = vld [vmem:[#allocation20 + $0x18] sm:$0xff]
        %v1819 = vld [vmem:[#allocation20 + $0x20] sm:$0xff]
        %v1820 = vld [vmem:[#allocation20 + $0x28] sm:$0xff]
        %v1821 = vld [vmem:[#allocation20 + $0x30] sm:$0xff]
        %v1822 = vld [vmem:[#allocation20 + $0x38] sm:$0xff]
        %v1823 = vld [vmem:[#allocation20 + $0x40] sm:$0xff]
        %v1824 = vld [vmem:[#allocation20 + $0x48] sm:$0xff]
        %v1825 = vld [vmem:[#allocation20 + $0x50] sm:$0xff]
        %v1826 = vld [vmem:[#allocation20 + $0x58] sm:$0xff]
        %v1827 = vld [vmem:[#allocation20 + $0x60] sm:$0xff]
        %v1828 = vld [vmem:[#allocation20 + $0x68] sm:$0xff]
        %v1829 = vld [vmem:[#allocation20 + $0x70] sm:$0xff]
        %v1830 = vld [vmem:[#allocation20 + $0x78] sm:$0xff]
        %v1831 = vld [vmem:[#allocation20 + $0x80] sm:$0xff]
        %v1832 = vld [vmem:[#allocation20 + $0x88] sm:$0xff]
        %v1833 = vld [vmem:[#allocation20 + $0x90] sm:$0xff]
        %v1834 = vld [vmem:[#allocation20 + $0x98] sm:$0xff]
        %v1835 = vld [vmem:[#allocation20 + $0xa0] sm:$0xff]
        %v1836 = vld [vmem:[#allocation20 + $0xa8] sm:$0xff]
        %v1837 = vld [vmem:[#allocation20 + $0xb0] sm:$0xff]
        %v1838 = vld [vmem:[#allocation20 + $0xb8] sm:$0xff]
        %v1839 = vld [vmem:[#allocation20 + $0xc0] sm:$0xff]
        %v1840 = vld [vmem:[#allocation20 + $0xc8] sm:$0xff]
        %v1841 = vld [vmem:[#allocation20 + $0xd0] sm:$0xff]
        %v1842 = vld [vmem:[#allocation20 + $0xd8] sm:$0xff]
        %v1843 = vld [vmem:[#allocation20 + $0xe0] sm:$0xff]
        %v1844 = vld [vmem:[#allocation20 + $0xe8] sm:$0xff]
        %v1845 = vld [vmem:[#allocation20 + $0xf0] sm:$0xff]
        %v1846 = vld [vmem:[#allocation20 + $0xf8] sm:$0xff]
        %v1847 = vld [vmem:[#allocation20 + $0x100] sm:$0xff]
        %v1848 = vld [vmem:[#allocation20 + $0x108] sm:$0xff]
        %v1849 = vld [vmem:[#allocation20 + $0x110] sm:$0xff]
        %v1850 = vld [vmem:[#allocation20 + $0x118] sm:$0xff]
        %v1851 = vld [vmem:[#allocation20 + $0x120] sm:$0xff]
        %v1852 = vld [vmem:[#allocation20 + $0x128] sm:$0xff]
        %v1853 = vld [vmem:[#allocation20 + $0x130] sm:$0xff]
        %v1854 = vld [vmem:[#allocation20 + $0x138] sm:$0xff]
        %v1855 = vld [vmem:[#allocation20 + $0x140] sm:$0xff]
        %v1856 = vld [vmem:[#allocation20 + $0x148] sm:$0xff]
        %v1857 = vld [vmem:[#allocation20 + $0x150] sm:$0xff]
        %v1858 = vld [vmem:[#allocation20 + $0x158] sm:$0xff]
        %v1859 = vld [vmem:[#allocation20 + $0x160] sm:$0xff]
        %v1860 = vld [vmem:[#allocation20 + $0x168] sm:$0xff]
        %v1861 = vld [vmem:[#allocation20 + $0x170] sm:$0xff]
        %v1862 = vld [vmem:[#allocation20 + $0x178] sm:$0xff]
        %v1863 = vld [vmem:[#allocation20 + $0x180] sm:$0xff]
        %v1864 = vld [vmem:[#allocation20 + $0x188] sm:$0xff]
        %v1865 = vld [vmem:[#allocation20 + $0x190] sm:$0xff]
        %v1866 = vld [vmem:[#allocation20 + $0x198] sm:$0xff]
        %v1867 = vld [vmem:[#allocation20 + $0x1a0] sm:$0xff]
        %v1868 = vld [vmem:[#allocation20 + $0x1a8] sm:$0xff]
        %v1869 = vld [vmem:[#allocation20 + $0x1b0] sm:$0xff]
        %v1870 = vld [vmem:[#allocation20 + $0x1b8] sm:$0xff]
        %v1871 = vld [vmem:[#allocation20 + $0x1c0] sm:$0xff]
        %v1872 = vld [vmem:[#allocation20 + $0x1c8] sm:$0xff]
        %v1873 = vld [vmem:[#allocation20 + $0x1d0] sm:$0xff]
        %v1874 = vld [vmem:[#allocation20 + $0x1d8] sm:$0xff]
        %v1875 = vld [vmem:[#allocation20 + $0x1e0] sm:$0xff]
        %v1876 = vld [vmem:[#allocation20 + $0x1e8] sm:$0xff]
        %v1877 = vld [vmem:[#allocation20 + $0x1f0] sm:$0xff]
        %v1878 = vld [vmem:[#allocation20 + $0x1f8] sm:$0xff]
        %v1879 = vld [vmem:[#allocation20 + $0x200] sm:$0xff]
        %v1880 = vld [vmem:[#allocation20 + $0x208] sm:$0xff]
        %v1881 = vld [vmem:[#allocation20 + $0x210] sm:$0xff]
        %v1882 = vld [vmem:[#allocation20 + $0x218] sm:$0xff]
        %v1883 = vld [vmem:[#allocation20 + $0x220] sm:$0xff]
        %v1884 = vld [vmem:[#allocation20 + $0x228] sm:$0xff]
        %v1885 = vld [vmem:[#allocation20 + $0x230] sm:$0xff]
        %v1886 = vld [vmem:[#allocation20 + $0x238] sm:$0xff]
        %v1887 = vld [vmem:[#allocation20 + $0x240] sm:$0xff]
        %v1888 = vld [vmem:[#allocation20 + $0x248] sm:$0xff]
        %v1889 = vld [vmem:[#allocation20 + $0x250] sm:$0xff]
        %v1890 = vld [vmem:[#allocation20 + $0x258] sm:$0xff]
        %v1891 = vld [vmem:[#allocation20 + $0x260] sm:$0xff]
        %v1892 = vld [vmem:[#allocation20 + $0x268] sm:$0xff]
        %v1893 = vld [vmem:[#allocation20 + $0x270] sm:$0xff]
        %v1894 = vld [vmem:[#allocation20 + $0x278] sm:$0xff]
        %v1895 = vld [vmem:[#allocation20 + $0x280] sm:$0xff]
        %v1896 = vld [vmem:[#allocation20 + $0x288] sm:$0xff]
        %v1897 = vld [vmem:[#allocation20 + $0x290] sm:$0xff]
        %v1898 = vld [vmem:[#allocation20 + $0x298] sm:$0xff]
        %v1899 = vld [vmem:[#allocation20 + $0x2a0] sm:$0xff]
        %v1900 = vld [vmem:[#allocation20 + $0x2a8] sm:$0xff]
        %v1901 = vld [vmem:[#allocation20 + $0x2b0] sm:$0xff]
        %v1902 = vld [vmem:[#allocation20 + $0x2b8] sm:$0xff]
        %v1903 = vld [vmem:[#allocation20 + $0x2c0] sm:$0xff]
        %v1904 = vld [vmem:[#allocation20 + $0x2c8] sm:$0xff]
        %v1905 = vld [vmem:[#allocation20 + $0x2d0] sm:$0xff]
        %v1906 = vld [vmem:[#allocation20 + $0x2d8] sm:$0xff]
        %v1907 = vld [vmem:[#allocation20 + $0x2e0] sm:$0xff]
        %v1908 = vld [vmem:[#allocation20 + $0x2e8] sm:$0xff]
        %v1909 = vld [vmem:[#allocation20 + $0x2f0] sm:$0xff]
        %v1910 = vld [vmem:[#allocation20 + $0x2f8] sm:$0xff]
        %v1911 = vld [vmem:[#allocation20 + $0x300] sm:$0xff]
        %v1912 = vld [vmem:[#allocation20 + $0x308] sm:$0xff]
        %v1913 = vld [vmem:[#allocation20 + $0x310] sm:$0xff]
        %v1914 = vld [vmem:[#allocation20 + $0x318] sm:$0xff]
        %v1915 = vld [vmem:[#allocation20 + $0x320] sm:$0xff]
        %v1916 = vld [vmem:[#allocation20 + $0x328] sm:$0xff]
        %v1917 = vld [vmem:[#allocation20 + $0x330] sm:$0xff]
        %v1918 = vld [vmem:[#allocation20 + $0x338] sm:$0xff]
        %v1919 = vld [vmem:[#allocation20 + $0x340] sm:$0xff]
        %v1920 = vld [vmem:[#allocation20 + $0x348] sm:$0xff]
        %v1921 = vld [vmem:[#allocation20 + $0x350] sm:$0xff]
        %v1922 = vld [vmem:[#allocation20 + $0x358] sm:$0xff]
        %v1923 = vld [vmem:[#allocation20 + $0x360] sm:$0xff]
        %v1924 = vld [vmem:[#allocation20 + $0x368] sm:$0xff]
        %v1925 = vld [vmem:[#allocation20 + $0x370] sm:$0xff]
        %v1926 = vld [vmem:[#allocation20 + $0x378] sm:$0xff]
        %v1927 = vld [vmem:[#allocation20 + $0x380] sm:$0xff]
        %v1928 = vld [vmem:[#allocation20 + $0x388] sm:$0xff]
        %v1929 = vld [vmem:[#allocation20 + $0x390] sm:$0xff]
        %v1930 = vld [vmem:[#allocation20 + $0x398] sm:$0xff]
        %v1931 = vld [vmem:[#allocation20 + $0x3a0] sm:$0xff]
        %v1932 = vld [vmem:[#allocation20 + $0x3a8] sm:$0xff]
        %v1933 = vld [vmem:[#allocation20 + $0x3b0] sm:$0xff]
        %v1934 = vld [vmem:[#allocation20 + $0x3b8] sm:$0xff]
        %v1935 = vld [vmem:[#allocation20 + $0x3c0] sm:$0xff]
        %v1936 = vld [vmem:[#allocation20 + $0x3c8] sm:$0xff]
        %v1937 = vld [vmem:[#allocation20 + $0x3d0] sm:$0xff]
        %v1938 = vld [vmem:[#allocation20 + $0x3d8] sm:$0xff]
        %v1939 = vld [vmem:[#allocation20 + $0x3e0] sm:$0xff]
        %v1940 = vld [vmem:[#allocation20 + $0x3e8] sm:$0xff]
        %v1941 = vld [vmem:[#allocation20 + $0x3f0] sm:$0xff]
        %v1942 = vld [vmem:[#allocation20 + $0x3f8] sm:$0xff]
        %v1943 = vld [vmem:[#allocation20 + $0x400] sm:$0xff]
        %v1944 = vld [vmem:[#allocation20 + $0x408] sm:$0xff]
        %v1945 = vld [vmem:[#allocation20 + $0x410] sm:$0xff]
        %v1946 = vld [vmem:[#allocation20 + $0x418] sm:$0xff]
        %v1947 = vld [vmem:[#allocation20 + $0x420] sm:$0xff]
        %v1948 = vld [vmem:[#allocation20 + $0x428] sm:$0xff]
        %v1949 = vld [vmem:[#allocation20 + $0x430] sm:$0xff]
        %v1950 = vld [vmem:[#allocation20 + $0x438] sm:$0xff]
        %v1951 = vld [vmem:[#allocation20 + $0x440] sm:$0xff]
        %v1952 = vld [vmem:[#allocation20 + $0x448] sm:$0xff]
        %v1953 = vld [vmem:[#allocation20 + $0x450] sm:$0xff]
        %v1954 = vld [vmem:[#allocation20 + $0x458] sm:$0xff]
        %v1955 = vld [vmem:[#allocation20 + $0x460] sm:$0xff]
        %v1956 = vld [vmem:[#allocation20 + $0x468] sm:$0xff]
        %v1957 = vld [vmem:[#allocation20 + $0x470] sm:$0xff]
        %v1958 = vld [vmem:[#allocation20 + $0x478] sm:$0xff]
        %v1959 = vld [vmem:[#allocation20 + $0x480] sm:$0xff]
        %v1960 = vld [vmem:[#allocation20 + $0x488] sm:$0xff]
        %v1961 = vld [vmem:[#allocation20 + $0x490] sm:$0xff]
        %v1962 = vld [vmem:[#allocation20 + $0x498] sm:$0xff]
        %v1963 = vld [vmem:[#allocation20 + $0x4a0] sm:$0xff]
        %v1964 = vld [vmem:[#allocation20 + $0x4a8] sm:$0xff]
        %v1965 = vld [vmem:[#allocation20 + $0x4b0] sm:$0xff]
        %v1966 = vld [vmem:[#allocation20 + $0x4b8] sm:$0xff]
        %v1967 = vld [vmem:[#allocation20 + $0x4c0] sm:$0xff]
        %v1968 = vld [vmem:[#allocation20 + $0x4c8] sm:$0xff]
        %v1969 = vld [vmem:[#allocation20 + $0x4d0] sm:$0xff]
        %v1970 = vld [vmem:[#allocation20 + $0x4d8] sm:$0xff]
        %v1971 = vld [vmem:[#allocation20 + $0x4e0] sm:$0xff]
        %v1972 = vld [vmem:[#allocation20 + $0x4e8] sm:$0xff]
        %v1973 = vld [vmem:[#allocation20 + $0x4f0] sm:$0xff]
        %v1974 = vld [vmem:[#allocation20 + $0x4f8] sm:$0xff]
        %v1975 = vld [vmem:[#allocation20 + $0x500] sm:$0xff]
        %v1976 = vld [vmem:[#allocation20 + $0x508] sm:$0xff]
        %v1977 = vld [vmem:[#allocation20 + $0x510] sm:$0xff]
        %v1978 = vld [vmem:[#allocation20 + $0x518] sm:$0xff]
        %v1979 = vld [vmem:[#allocation20 + $0x520] sm:$0xff]
        %v1980 = vld [vmem:[#allocation20 + $0x528] sm:$0xff]
        %v1981 = vld [vmem:[#allocation20 + $0x530] sm:$0xff]
        %v1982 = vld [vmem:[#allocation20 + $0x538] sm:$0xff]
        %v1983 = vld [vmem:[#allocation20 + $0x540] sm:$0xff]
        %v1984 = vld [vmem:[#allocation20 + $0x548] sm:$0xff]
        %v1985 = vld [vmem:[#allocation20 + $0x550] sm:$0xff]
        %v1986 = vld [vmem:[#allocation20 + $0x558] sm:$0xff]
        %v1987 = vld [vmem:[#allocation20 + $0x560] sm:$0xff]
        %v1988 = vld [vmem:[#allocation20 + $0x568] sm:$0xff]
        %v1989 = vld [vmem:[#allocation20 + $0x570] sm:$0xff]
        %v1990 = vld [vmem:[#allocation20 + $0x578] sm:$0xff]
        %v1991 = vld [vmem:[#allocation20 + $0x580] sm:$0xff]
        %v1992 = vld [vmem:[#allocation20 + $0x588] sm:$0xff]
        %v1993 = vld [vmem:[#allocation20 + $0x590] sm:$0xff]
        %v1994 = vld [vmem:[#allocation20 + $0x598] sm:$0xff]
        %v1995 = vld [vmem:[#allocation20 + $0x5a0] sm:$0xff]
        %v1996 = vld [vmem:[#allocation20 + $0x5a8] sm:$0xff]
        %v1997 = vld [vmem:[#allocation20 + $0x5b0] sm:$0xff]
        %v1998 = vld [vmem:[#allocation20 + $0x5b8] sm:$0xff]
        %v1999 = vld [vmem:[#allocation20 + $0x5c0] sm:$0xff]
        %v2000 = vld [vmem:[#allocation20 + $0x5c8] sm:$0xff]
        %v2001 = vld [vmem:[#allocation20 + $0x5d0] sm:$0xff]
        %v2002 = vld [vmem:[#allocation20 + $0x5d8] sm:$0xff]
        %v2003 = vld [vmem:[#allocation20 + $0x5e0] sm:$0xff]
        %v2004 = vld [vmem:[#allocation20 + $0x5e8] sm:$0xff]
        %v2005 = vld [vmem:[#allocation20 + $0x5f0] sm:$0xff]
        %v2006 = vld [vmem:[#allocation20 + $0x5f8] sm:$0xff]
        %v2007 = vld [vmem:[#allocation20 + $0x600] sm:$0xff]
        %v2008 = vld [vmem:[#allocation20 + $0x608] sm:$0xff]
        %v2009 = vld [vmem:[#allocation20 + $0x610] sm:$0xff]
        %v2010 = vld [vmem:[#allocation20 + $0x618] sm:$0xff]
        %v2011 = vld [vmem:[#allocation20 + $0x620] sm:$0xff]
        %v2012 = vld [vmem:[#allocation20 + $0x628] sm:$0xff]
        %v2013 = vld [vmem:[#allocation20 + $0x630] sm:$0xff]
        %v2014 = vld [vmem:[#allocation20 + $0x638] sm:$0xff]
        %v2015 = vld [vmem:[#allocation20 + $0x640] sm:$0xff]
        %v2016 = vld [vmem:[#allocation20 + $0x648] sm:$0xff]
        %v2017 = vld [vmem:[#allocation20 + $0x650] sm:$0xff]
        %v2018 = vld [vmem:[#allocation20 + $0x658] sm:$0xff]
        %v2019 = vld [vmem:[#allocation20 + $0x660] sm:$0xff]
        %v2020 = vld [vmem:[#allocation20 + $0x668] sm:$0xff]
        %v2021 = vld [vmem:[#allocation20 + $0x670] sm:$0xff]
        %v2022 = vld [vmem:[#allocation20 + $0x678] sm:$0xff]
        %v2023 = vld [vmem:[#allocation20 + $0x680] sm:$0xff]
        %v2024 = vld [vmem:[#allocation20 + $0x688] sm:$0xff]
        %v2025 = vld [vmem:[#allocation20 + $0x690] sm:$0xff]
        %v2026 = vld [vmem:[#allocation20 + $0x698] sm:$0xff]
        %v2027 = vld [vmem:[#allocation20 + $0x6a0] sm:$0xff]
        %v2028 = vld [vmem:[#allocation20 + $0x6a8] sm:$0xff]
        %v2029 = vld [vmem:[#allocation20 + $0x6b0] sm:$0xff]
        %v2030 = vld [vmem:[#allocation20 + $0x6b8] sm:$0xff]
        %v2031 = vld [vmem:[#allocation20 + $0x6c0] sm:$0xff]
        %v2032 = vld [vmem:[#allocation20 + $0x6c8] sm:$0xff]
        %v2033 = vld [vmem:[#allocation20 + $0x6d0] sm:$0xff]
        %v2034 = vld [vmem:[#allocation20 + $0x6d8] sm:$0xff]
        %v2035 = vld [vmem:[#allocation20 + $0x6e0] sm:$0xff]
        %v2036 = vld [vmem:[#allocation20 + $0x6e8] sm:$0xff]
        %v2037 = vld [vmem:[#allocation20 + $0x6f0] sm:$0xff]
        %v2038 = vld [vmem:[#allocation20 + $0x6f8] sm:$0xff]
        %v2039 = vld [vmem:[#allocation20 + $0x700] sm:$0xff]
        %v2040 = vld [vmem:[#allocation20 + $0x708] sm:$0xff]
        %v2041 = vld [vmem:[#allocation20 + $0x710] sm:$0xff]
        %v2042 = vld [vmem:[#allocation20 + $0x718] sm:$0xff]
        %v2043 = vld [vmem:[#allocation20 + $0x720] sm:$0xff]
        %v2044 = vld [vmem:[#allocation20 + $0x728] sm:$0xff]
        %v2045 = vld [vmem:[#allocation20 + $0x730] sm:$0xff]
        %v2046 = vld [vmem:[#allocation20 + $0x738] sm:$0xff]
        %v2047 = vld [vmem:[#allocation20 + $0x740] sm:$0xff]
        %v2048 = vld [vmem:[#allocation20 + $0x748] sm:$0xff]
        %v2049 = vld [vmem:[#allocation20 + $0x750] sm:$0xff]
        %v2050 = vld [vmem:[#allocation20 + $0x758] sm:$0xff]
        %v2051 = vld [vmem:[#allocation20 + $0x760] sm:$0xff]
        %v2052 = vld [vmem:[#allocation20 + $0x768] sm:$0xff]
        %v2053 = vld [vmem:[#allocation20 + $0x770] sm:$0xff]
        %v2054 = vld [vmem:[#allocation20 + $0x778] sm:$0xff]
        %v2055 = vld [vmem:[#allocation20 + $0x780] sm:$0xff]
        %v2056 = vld [vmem:[#allocation20 + $0x788] sm:$0xff]
        %v2057 = vld [vmem:[#allocation20 + $0x790] sm:$0xff]
        %v2058 = vld [vmem:[#allocation20 + $0x798] sm:$0xff]
        %v2059 = vld [vmem:[#allocation20 + $0x7a0] sm:$0xff]
        %v2060 = vld [vmem:[#allocation20 + $0x7a8] sm:$0xff]
        %v2061 = vld [vmem:[#allocation20 + $0x7b0] sm:$0xff]
        %v2062 = vld [vmem:[#allocation20 + $0x7b8] sm:$0xff]
        %v2063 = vld [vmem:[#allocation20 + $0x7c0] sm:$0xff]
        %v2064 = vld [vmem:[#allocation20 + $0x7c8] sm:$0xff]
        %v2065 = vld [vmem:[#allocation20 + $0x7d0] sm:$0xff]
        %v2066 = vld [vmem:[#allocation20 + $0x7d8] sm:$0xff]
        %v2067 = vld [vmem:[#allocation20 + $0x7e0] sm:$0xff]
        %v2068 = vld [vmem:[#allocation20 + $0x7e8] sm:$0xff]
        %v2069 = vld [vmem:[#allocation20 + $0x7f0] sm:$0xff]
        %v2070 = vld [vmem:[#allocation20 + $0x7f8] sm:$0xff]
        %v2071 = vld [vmem:[#allocation22] sm:$0xff]
        %v2073 = vlaneseq
        %v2074 = vshrl.u32 %v2073, 7
        %v2075 = vsub.s32 0, %v2074
        %v2076 = vrot.slane %v2071, %v2075
        %v2077 = vlaneseq
        %v2078 = vshrl.u32 %v2077, 7
        %v2079 = vsub.s32 1, %v2078
        %v2080 = vrot.slane %v2071, %v2079
        %v2081 = vlaneseq
        %v2082 = vshrl.u32 %v2081, 7
        %v2083 = vsub.s32 2, %v2082
        %v2084 = vrot.slane %v2071, %v2083
        %v2085 = vlaneseq
        %v2086 = vshrl.u32 %v2085, 7
        %v2087 = vsub.s32 3, %v2086
        %v2088 = vrot.slane %v2071, %v2087
        %v2089 = vlaneseq
        %v2090 = vshrl.u32 %v2089, 7
        %v2091 = vsub.s32 4, %v2090
        %v2092 = vrot.slane %v2071, %v2091
        %v2093 = vlaneseq
        %v2094 = vshrl.u32 %v2093, 7
        %v2095 = vsub.s32 5, %v2094
        %v2096 = vrot.slane %v2071, %v2095
        %v2097 = vlaneseq
        %v2098 = vshrl.u32 %v2097, 7
        %v2099 = vsub.s32 6, %v2098
        %v2100 = vrot.slane %v2071, %v2099
        %v2101 = vlaneseq
        %v2102 = vshrl.u32 %v2101, 7
        %v2103 = vsub.s32 7, %v2102
        %v2104 = vrot.slane %v2071, %v2103
        %v2369 = vunpack.c.l.b16 %v1815
        %v2370 = vunpack.c.h.b16 %v1815
        %v2371 = vunpack.c.l.b16 %v1816
        %v2372 = vunpack.c.h.b16 %v1816
        %v2373 = vunpack.c.l.b16 %v1817
        %v2374 = vunpack.c.h.b16 %v1817
        %v2375 = vunpack.c.l.b16 %v1818
        %v2376 = vunpack.c.h.b16 %v1818
        %v2377 = vunpack.c.l.b16 %v1819
        %v2378 = vunpack.c.h.b16 %v1819
        %v2379 = vunpack.c.l.b16 %v1820
        %v2380 = vunpack.c.h.b16 %v1820
        %v2381 = vunpack.c.l.b16 %v1821
        %v2382 = vunpack.c.h.b16 %v1821
        %v2383 = vunpack.c.l.b16 %v1822
        %v2384 = vunpack.c.h.b16 %v1822
        %v2385 = vunpack.c.l.b16 %v1823
        %v2386 = vunpack.c.h.b16 %v1823
        %v2387 = vunpack.c.l.b16 %v1824
        %v2388 = vunpack.c.h.b16 %v1824
        %v2389 = vunpack.c.l.b16 %v1825
        %v2390 = vunpack.c.h.b16 %v1825
        %v2391 = vunpack.c.l.b16 %v1826
        %v2392 = vunpack.c.h.b16 %v1826
        %v2393 = vunpack.c.l.b16 %v1827
        %v2394 = vunpack.c.h.b16 %v1827
        %v2395 = vunpack.c.l.b16 %v1828
        %v2396 = vunpack.c.h.b16 %v1828
        %v2397 = vunpack.c.l.b16 %v1829
        %v2398 = vunpack.c.h.b16 %v1829
        %v2399 = vunpack.c.l.b16 %v1830
        %v2400 = vunpack.c.h.b16 %v1830
        %v2401 = vunpack.c.l.b16 %v1831
        %v2402 = vunpack.c.h.b16 %v1831
        %v2403 = vunpack.c.l.b16 %v1832
        %v2404 = vunpack.c.h.b16 %v1832
        %v2405 = vunpack.c.l.b16 %v1833
        %v2406 = vunpack.c.h.b16 %v1833
        %v2407 = vunpack.c.l.b16 %v1834
        %v2408 = vunpack.c.h.b16 %v1834
        %v2409 = vunpack.c.l.b16 %v1835
        %v2410 = vunpack.c.h.b16 %v1835
        %v2411 = vunpack.c.l.b16 %v1836
        %v2412 = vunpack.c.h.b16 %v1836
        %v2413 = vunpack.c.l.b16 %v1837
        %v2414 = vunpack.c.h.b16 %v1837
        %v2415 = vunpack.c.l.b16 %v1838
        %v2416 = vunpack.c.h.b16 %v1838
        %v2417 = vunpack.c.l.b16 %v1839
        %v2418 = vunpack.c.h.b16 %v1839
        %v2419 = vunpack.c.l.b16 %v1840
        %v2420 = vunpack.c.h.b16 %v1840
        %v2421 = vunpack.c.l.b16 %v1841
        %v2422 = vunpack.c.h.b16 %v1841
        %v2423 = vunpack.c.l.b16 %v1842
        %v2424 = vunpack.c.h.b16 %v1842
        %v2425 = vunpack.c.l.b16 %v1843
        %v2426 = vunpack.c.h.b16 %v1843
        %v2427 = vunpack.c.l.b16 %v1844
        %v2428 = vunpack.c.h.b16 %v1844
        %v2429 = vunpack.c.l.b16 %v1845
        %v2430 = vunpack.c.h.b16 %v1845
        %v2431 = vunpack.c.l.b16 %v1846
        %v2432 = vunpack.c.h.b16 %v1846
        %v2433 = vunpack.c.l.b16 %v1847
        %v2434 = vunpack.c.h.b16 %v1847
        %v2435 = vunpack.c.l.b16 %v1848
        %v2436 = vunpack.c.h.b16 %v1848
        %v2437 = vunpack.c.l.b16 %v1849
        %v2438 = vunpack.c.h.b16 %v1849
        %v2439 = vunpack.c.l.b16 %v1850
        %v2440 = vunpack.c.h.b16 %v1850
        %v2441 = vunpack.c.l.b16 %v1851
        %v2442 = vunpack.c.h.b16 %v1851
        %v2443 = vunpack.c.l.b16 %v1852
        %v2444 = vunpack.c.h.b16 %v1852
        %v2445 = vunpack.c.l.b16 %v1853
        %v2446 = vunpack.c.h.b16 %v1853
        %v2447 = vunpack.c.l.b16 %v1854
        %v2448 = vunpack.c.h.b16 %v1854
        %v2449 = vunpack.c.l.b16 %v1855
        %v2450 = vunpack.c.h.b16 %v1855
        %v2451 = vunpack.c.l.b16 %v1856
        %v2452 = vunpack.c.h.b16 %v1856
        %v2453 = vunpack.c.l.b16 %v1857
        %v2454 = vunpack.c.h.b16 %v1857
        %v2455 = vunpack.c.l.b16 %v1858
        %v2456 = vunpack.c.h.b16 %v1858
        %v2457 = vunpack.c.l.b16 %v1859
        %v2458 = vunpack.c.h.b16 %v1859
        %v2459 = vunpack.c.l.b16 %v1860
        %v2460 = vunpack.c.h.b16 %v1860
        %v2461 = vunpack.c.l.b16 %v1861
        %v2462 = vunpack.c.h.b16 %v1861
        %v2463 = vunpack.c.l.b16 %v1862
        %v2464 = vunpack.c.h.b16 %v1862
        %v2465 = vunpack.c.l.b16 %v1863
        %v2466 = vunpack.c.h.b16 %v1863
        %v2467 = vunpack.c.l.b16 %v1864
        %v2468 = vunpack.c.h.b16 %v1864
        %v2469 = vunpack.c.l.b16 %v1865
        %v2470 = vunpack.c.h.b16 %v1865
        %v2471 = vunpack.c.l.b16 %v1866
        %v2472 = vunpack.c.h.b16 %v1866
        %v2473 = vunpack.c.l.b16 %v1867
        %v2474 = vunpack.c.h.b16 %v1867
        %v2475 = vunpack.c.l.b16 %v1868
        %v2476 = vunpack.c.h.b16 %v1868
        %v2477 = vunpack.c.l.b16 %v1869
        %v2478 = vunpack.c.h.b16 %v1869
        %v2479 = vunpack.c.l.b16 %v1870
        %v2480 = vunpack.c.h.b16 %v1870
        %v2481 = vunpack.c.l.b16 %v1871
        %v2482 = vunpack.c.h.b16 %v1871
        %v2483 = vunpack.c.l.b16 %v1872
        %v2484 = vunpack.c.h.b16 %v1872
        %v2485 = vunpack.c.l.b16 %v1873
        %v2486 = vunpack.c.h.b16 %v1873
        %v2487 = vunpack.c.l.b16 %v1874
        %v2488 = vunpack.c.h.b16 %v1874
        %v2489 = vunpack.c.l.b16 %v1875
        %v2490 = vunpack.c.h.b16 %v1875
        %v2491 = vunpack.c.l.b16 %v1876
        %v2492 = vunpack.c.h.b16 %v1876
        %v2493 = vunpack.c.l.b16 %v1877
        %v2494 = vunpack.c.h.b16 %v1877
        %v2495 = vunpack.c.l.b16 %v1878
        %v2496 = vunpack.c.h.b16 %v1878
        %v2497 = vunpack.c.l.b16 %v1879
        %v2498 = vunpack.c.h.b16 %v1879
        %v2499 = vunpack.c.l.b16 %v1880
        %v2500 = vunpack.c.h.b16 %v1880
        %v2501 = vunpack.c.l.b16 %v1881
        %v2502 = vunpack.c.h.b16 %v1881
        %v2503 = vunpack.c.l.b16 %v1882
        %v2504 = vunpack.c.h.b16 %v1882
        %v2505 = vunpack.c.l.b16 %v1883
        %v2506 = vunpack.c.h.b16 %v1883
        %v2507 = vunpack.c.l.b16 %v1884
        %v2508 = vunpack.c.h.b16 %v1884
        %v2509 = vunpack.c.l.b16 %v1885
        %v2510 = vunpack.c.h.b16 %v1885
        %v2511 = vunpack.c.l.b16 %v1886
        %v2512 = vunpack.c.h.b16 %v1886
        %v2513 = vunpack.c.l.b16 %v1887
        %v2514 = vunpack.c.h.b16 %v1887
        %v2515 = vunpack.c.l.b16 %v1888
        %v2516 = vunpack.c.h.b16 %v1888
        %v2517 = vunpack.c.l.b16 %v1889
        %v2518 = vunpack.c.h.b16 %v1889
        %v2519 = vunpack.c.l.b16 %v1890
        %v2520 = vunpack.c.h.b16 %v1890
        %v2521 = vunpack.c.l.b16 %v1891
        %v2522 = vunpack.c.h.b16 %v1891
        %v2523 = vunpack.c.l.b16 %v1892
        %v2524 = vunpack.c.h.b16 %v1892
        %v2525 = vunpack.c.l.b16 %v1893
        %v2526 = vunpack.c.h.b16 %v1893
        %v2527 = vunpack.c.l.b16 %v1894
        %v2528 = vunpack.c.h.b16 %v1894
        %v2529 = vunpack.c.l.b16 %v1895
        %v2530 = vunpack.c.h.b16 %v1895
        %v2531 = vunpack.c.l.b16 %v1896
        %v2532 = vunpack.c.h.b16 %v1896
        %v2533 = vunpack.c.l.b16 %v1897
        %v2534 = vunpack.c.h.b16 %v1897
        %v2535 = vunpack.c.l.b16 %v1898
        %v2536 = vunpack.c.h.b16 %v1898
        %v2537 = vunpack.c.l.b16 %v1899
        %v2538 = vunpack.c.h.b16 %v1899
        %v2539 = vunpack.c.l.b16 %v1900
        %v2540 = vunpack.c.h.b16 %v1900
        %v2541 = vunpack.c.l.b16 %v1901
        %v2542 = vunpack.c.h.b16 %v1901
        %v2543 = vunpack.c.l.b16 %v1902
        %v2544 = vunpack.c.h.b16 %v1902
        %v2545 = vunpack.c.l.b16 %v1903
        %v2546 = vunpack.c.h.b16 %v1903
        %v2547 = vunpack.c.l.b16 %v1904
        %v2548 = vunpack.c.h.b16 %v1904
        %v2549 = vunpack.c.l.b16 %v1905
        %v2550 = vunpack.c.h.b16 %v1905
        %v2551 = vunpack.c.l.b16 %v1906
        %v2552 = vunpack.c.h.b16 %v1906
        %v2553 = vunpack.c.l.b16 %v1907
        %v2554 = vunpack.c.h.b16 %v1907
        %v2555 = vunpack.c.l.b16 %v1908
        %v2556 = vunpack.c.h.b16 %v1908
        %v2557 = vunpack.c.l.b16 %v1909
        %v2558 = vunpack.c.h.b16 %v1909
        %v2559 = vunpack.c.l.b16 %v1910
        %v2560 = vunpack.c.h.b16 %v1910
        %v2561 = vunpack.c.l.b16 %v1911
        %v2562 = vunpack.c.h.b16 %v1911
        %v2563 = vunpack.c.l.b16 %v1912
        %v2564 = vunpack.c.h.b16 %v1912
        %v2565 = vunpack.c.l.b16 %v1913
        %v2566 = vunpack.c.h.b16 %v1913
        %v2567 = vunpack.c.l.b16 %v1914
        %v2568 = vunpack.c.h.b16 %v1914
        %v2569 = vunpack.c.l.b16 %v1915
        %v2570 = vunpack.c.h.b16 %v1915
        %v2571 = vunpack.c.l.b16 %v1916
        %v2572 = vunpack.c.h.b16 %v1916
        %v2573 = vunpack.c.l.b16 %v1917
        %v2574 = vunpack.c.h.b16 %v1917
        %v2575 = vunpack.c.l.b16 %v1918
        %v2576 = vunpack.c.h.b16 %v1918
        %v2577 = vunpack.c.l.b16 %v1919
        %v2578 = vunpack.c.h.b16 %v1919
        %v2579 = vunpack.c.l.b16 %v1920
        %v2580 = vunpack.c.h.b16 %v1920
        %v2581 = vunpack.c.l.b16 %v1921
        %v2582 = vunpack.c.h.b16 %v1921
        %v2583 = vunpack.c.l.b16 %v1922
        %v2584 = vunpack.c.h.b16 %v1922
        %v2585 = vunpack.c.l.b16 %v1923
        %v2586 = vunpack.c.h.b16 %v1923
        %v2587 = vunpack.c.l.b16 %v1924
        %v2588 = vunpack.c.h.b16 %v1924
        %v2589 = vunpack.c.l.b16 %v1925
        %v2590 = vunpack.c.h.b16 %v1925
        %v2591 = vunpack.c.l.b16 %v1926
        %v2592 = vunpack.c.h.b16 %v1926
        %v2593 = vunpack.c.l.b16 %v1927
        %v2594 = vunpack.c.h.b16 %v1927
        %v2595 = vunpack.c.l.b16 %v1928
        %v2596 = vunpack.c.h.b16 %v1928
        %v2597 = vunpack.c.l.b16 %v1929
        %v2598 = vunpack.c.h.b16 %v1929
        %v2599 = vunpack.c.l.b16 %v1930
        %v2600 = vunpack.c.h.b16 %v1930
        %v2601 = vunpack.c.l.b16 %v1931
        %v2602 = vunpack.c.h.b16 %v1931
        %v2603 = vunpack.c.l.b16 %v1932
        %v2604 = vunpack.c.h.b16 %v1932
        %v2605 = vunpack.c.l.b16 %v1933
        %v2606 = vunpack.c.h.b16 %v1933
        %v2607 = vunpack.c.l.b16 %v1934
        %v2608 = vunpack.c.h.b16 %v1934
        %v2609 = vunpack.c.l.b16 %v1935
        %v2610 = vunpack.c.h.b16 %v1935
        %v2611 = vunpack.c.l.b16 %v1936
        %v2612 = vunpack.c.h.b16 %v1936
        %v2613 = vunpack.c.l.b16 %v1937
        %v2614 = vunpack.c.h.b16 %v1937
        %v2615 = vunpack.c.l.b16 %v1938
        %v2616 = vunpack.c.h.b16 %v1938
        %v2617 = vunpack.c.l.b16 %v1939
        %v2618 = vunpack.c.h.b16 %v1939
        %v2619 = vunpack.c.l.b16 %v1940
        %v2620 = vunpack.c.h.b16 %v1940
        %v2621 = vunpack.c.l.b16 %v1941
        %v2622 = vunpack.c.h.b16 %v1941
        %v2623 = vunpack.c.l.b16 %v1942
        %v2624 = vunpack.c.h.b16 %v1942
        %v2625 = vunpack.c.l.b16 %v1943
        %v2626 = vunpack.c.h.b16 %v1943
        %v2627 = vunpack.c.l.b16 %v1944
        %v2628 = vunpack.c.h.b16 %v1944
        %v2629 = vunpack.c.l.b16 %v1945
        %v2630 = vunpack.c.h.b16 %v1945
        %v2631 = vunpack.c.l.b16 %v1946
        %v2632 = vunpack.c.h.b16 %v1946
        %v2633 = vunpack.c.l.b16 %v1947
        %v2634 = vunpack.c.h.b16 %v1947
        %v2635 = vunpack.c.l.b16 %v1948
        %v2636 = vunpack.c.h.b16 %v1948
        %v2637 = vunpack.c.l.b16 %v1949
        %v2638 = vunpack.c.h.b16 %v1949
        %v2639 = vunpack.c.l.b16 %v1950
        %v2640 = vunpack.c.h.b16 %v1950
        %v2641 = vunpack.c.l.b16 %v1951
        %v2642 = vunpack.c.h.b16 %v1951
        %v2643 = vunpack.c.l.b16 %v1952
        %v2644 = vunpack.c.h.b16 %v1952
        %v2645 = vunpack.c.l.b16 %v1953
        %v2646 = vunpack.c.h.b16 %v1953
        %v2647 = vunpack.c.l.b16 %v1954
        %v2648 = vunpack.c.h.b16 %v1954
        %v2649 = vunpack.c.l.b16 %v1955
        %v2650 = vunpack.c.h.b16 %v1955
        %v2651 = vunpack.c.l.b16 %v1956
        %v2652 = vunpack.c.h.b16 %v1956
        %v2653 = vunpack.c.l.b16 %v1957
        %v2654 = vunpack.c.h.b16 %v1957
        %v2655 = vunpack.c.l.b16 %v1958
        %v2656 = vunpack.c.h.b16 %v1958
        %v2657 = vunpack.c.l.b16 %v1959
        %v2658 = vunpack.c.h.b16 %v1959
        %v2659 = vunpack.c.l.b16 %v1960
        %v2660 = vunpack.c.h.b16 %v1960
        %v2661 = vunpack.c.l.b16 %v1961
        %v2662 = vunpack.c.h.b16 %v1961
        %v2663 = vunpack.c.l.b16 %v1962
        %v2664 = vunpack.c.h.b16 %v1962
        %v2665 = vunpack.c.l.b16 %v1963
        %v2666 = vunpack.c.h.b16 %v1963
        %v2667 = vunpack.c.l.b16 %v1964
        %v2668 = vunpack.c.h.b16 %v1964
        %v2669 = vunpack.c.l.b16 %v1965
        %v2670 = vunpack.c.h.b16 %v1965
        %v2671 = vunpack.c.l.b16 %v1966
        %v2672 = vunpack.c.h.b16 %v1966
        %v2673 = vunpack.c.l.b16 %v1967
        %v2674 = vunpack.c.h.b16 %v1967
        %v2675 = vunpack.c.l.b16 %v1968
        %v2676 = vunpack.c.h.b16 %v1968
        %v2677 = vunpack.c.l.b16 %v1969
        %v2678 = vunpack.c.h.b16 %v1969
        %v2679 = vunpack.c.l.b16 %v1970
        %v2680 = vunpack.c.h.b16 %v1970
        %v2681 = vunpack.c.l.b16 %v1971
        %v2682 = vunpack.c.h.b16 %v1971
        %v2683 = vunpack.c.l.b16 %v1972
        %v2684 = vunpack.c.h.b16 %v1972
        %v2685 = vunpack.c.l.b16 %v1973
        %v2686 = vunpack.c.h.b16 %v1973
        %v2687 = vunpack.c.l.b16 %v1974
        %v2688 = vunpack.c.h.b16 %v1974
        %v2689 = vunpack.c.l.b16 %v1975
        %v2690 = vunpack.c.h.b16 %v1975
        %v2691 = vunpack.c.l.b16 %v1976
        %v2692 = vunpack.c.h.b16 %v1976
        %v2693 = vunpack.c.l.b16 %v1977
        %v2694 = vunpack.c.h.b16 %v1977
        %v2695 = vunpack.c.l.b16 %v1978
        %v2696 = vunpack.c.h.b16 %v1978
        %v2697 = vunpack.c.l.b16 %v1979
        %v2698 = vunpack.c.h.b16 %v1979
        %v2699 = vunpack.c.l.b16 %v1980
        %v2700 = vunpack.c.h.b16 %v1980
        %v2701 = vunpack.c.l.b16 %v1981
        %v2702 = vunpack.c.h.b16 %v1981
        %v2703 = vunpack.c.l.b16 %v1982
        %v2704 = vunpack.c.h.b16 %v1982
        %v2705 = vunpack.c.l.b16 %v1983
        %v2706 = vunpack.c.h.b16 %v1983
        %v2707 = vunpack.c.l.b16 %v1984
        %v2708 = vunpack.c.h.b16 %v1984
        %v2709 = vunpack.c.l.b16 %v1985
        %v2710 = vunpack.c.h.b16 %v1985
        %v2711 = vunpack.c.l.b16 %v1986
        %v2712 = vunpack.c.h.b16 %v1986
        %v2713 = vunpack.c.l.b16 %v1987
        %v2714 = vunpack.c.h.b16 %v1987
        %v2715 = vunpack.c.l.b16 %v1988
        %v2716 = vunpack.c.h.b16 %v1988
        %v2717 = vunpack.c.l.b16 %v1989
        %v2718 = vunpack.c.h.b16 %v1989
        %v2719 = vunpack.c.l.b16 %v1990
        %v2720 = vunpack.c.h.b16 %v1990
        %v2721 = vunpack.c.l.b16 %v1991
        %v2722 = vunpack.c.h.b16 %v1991
        %v2723 = vunpack.c.l.b16 %v1992
        %v2724 = vunpack.c.h.b16 %v1992
        %v2725 = vunpack.c.l.b16 %v1993
        %v2726 = vunpack.c.h.b16 %v1993
        %v2727 = vunpack.c.l.b16 %v1994
        %v2728 = vunpack.c.h.b16 %v1994
        %v2729 = vunpack.c.l.b16 %v1995
        %v2730 = vunpack.c.h.b16 %v1995
        %v2731 = vunpack.c.l.b16 %v1996
        %v2732 = vunpack.c.h.b16 %v1996
        %v2733 = vunpack.c.l.b16 %v1997
        %v2734 = vunpack.c.h.b16 %v1997
        %v2735 = vunpack.c.l.b16 %v1998
        %v2736 = vunpack.c.h.b16 %v1998
        %v2737 = vunpack.c.l.b16 %v1999
        %v2738 = vunpack.c.h.b16 %v1999
        %v2739 = vunpack.c.l.b16 %v2000
        %v2740 = vunpack.c.h.b16 %v2000
        %v2741 = vunpack.c.l.b16 %v2001
        %v2742 = vunpack.c.h.b16 %v2001
        %v2743 = vunpack.c.l.b16 %v2002
        %v2744 = vunpack.c.h.b16 %v2002
        %v2745 = vunpack.c.l.b16 %v2003
        %v2746 = vunpack.c.h.b16 %v2003
        %v2747 = vunpack.c.l.b16 %v2004
        %v2748 = vunpack.c.h.b16 %v2004
        %v2749 = vunpack.c.l.b16 %v2005
        %v2750 = vunpack.c.h.b16 %v2005
        %v2751 = vunpack.c.l.b16 %v2006
        %v2752 = vunpack.c.h.b16 %v2006
        %v2753 = vunpack.c.l.b16 %v2007
        %v2754 = vunpack.c.h.b16 %v2007
        %v2755 = vunpack.c.l.b16 %v2008
        %v2756 = vunpack.c.h.b16 %v2008
        %v2757 = vunpack.c.l.b16 %v2009
        %v2758 = vunpack.c.h.b16 %v2009
        %v2759 = vunpack.c.l.b16 %v2010
        %v2760 = vunpack.c.h.b16 %v2010
        %v2761 = vunpack.c.l.b16 %v2011
        %v2762 = vunpack.c.h.b16 %v2011
        %v2763 = vunpack.c.l.b16 %v2012
        %v2764 = vunpack.c.h.b16 %v2012
        %v2765 = vunpack.c.l.b16 %v2013
        %v2766 = vunpack.c.h.b16 %v2013
        %v2767 = vunpack.c.l.b16 %v2014
        %v2768 = vunpack.c.h.b16 %v2014
        %v2769 = vunpack.c.l.b16 %v2015
        %v2770 = vunpack.c.h.b16 %v2015
        %v2771 = vunpack.c.l.b16 %v2016
        %v2772 = vunpack.c.h.b16 %v2016
        %v2773 = vunpack.c.l.b16 %v2017
        %v2774 = vunpack.c.h.b16 %v2017
        %v2775 = vunpack.c.l.b16 %v2018
        %v2776 = vunpack.c.h.b16 %v2018
        %v2777 = vunpack.c.l.b16 %v2019
        %v2778 = vunpack.c.h.b16 %v2019
        %v2779 = vunpack.c.l.b16 %v2020
        %v2780 = vunpack.c.h.b16 %v2020
        %v2781 = vunpack.c.l.b16 %v2021
        %v2782 = vunpack.c.h.b16 %v2021
        %v2783 = vunpack.c.l.b16 %v2022
        %v2784 = vunpack.c.h.b16 %v2022
        %v2785 = vunpack.c.l.b16 %v2023
        %v2786 = vunpack.c.h.b16 %v2023
        %v2787 = vunpack.c.l.b16 %v2024
        %v2788 = vunpack.c.h.b16 %v2024
        %v2789 = vunpack.c.l.b16 %v2025
        %v2790 = vunpack.c.h.b16 %v2025
        %v2791 = vunpack.c.l.b16 %v2026
        %v2792 = vunpack.c.h.b16 %v2026
        %v2793 = vunpack.c.l.b16 %v2027
        %v2794 = vunpack.c.h.b16 %v2027
        %v2795 = vunpack.c.l.b16 %v2028
        %v2796 = vunpack.c.h.b16 %v2028
        %v2797 = vunpack.c.l.b16 %v2029
        %v2798 = vunpack.c.h.b16 %v2029
        %v2799 = vunpack.c.l.b16 %v2030
        %v2800 = vunpack.c.h.b16 %v2030
        %v2801 = vunpack.c.l.b16 %v2031
        %v2802 = vunpack.c.h.b16 %v2031
        %v2803 = vunpack.c.l.b16 %v2032
        %v2804 = vunpack.c.h.b16 %v2032
        %v2805 = vunpack.c.l.b16 %v2033
        %v2806 = vunpack.c.h.b16 %v2033
        %v2807 = vunpack.c.l.b16 %v2034
        %v2808 = vunpack.c.h.b16 %v2034
        %v2809 = vunpack.c.l.b16 %v2035
        %v2810 = vunpack.c.h.b16 %v2035
        %v2811 = vunpack.c.l.b16 %v2036
        %v2812 = vunpack.c.h.b16 %v2036
        %v2813 = vunpack.c.l.b16 %v2037
        %v2814 = vunpack.c.h.b16 %v2037
        %v2815 = vunpack.c.l.b16 %v2038
        %v2816 = vunpack.c.h.b16 %v2038
        %v2817 = vunpack.c.l.b16 %v2039
        %v2818 = vunpack.c.h.b16 %v2039
        %v2819 = vunpack.c.l.b16 %v2040
        %v2820 = vunpack.c.h.b16 %v2040
        %v2821 = vunpack.c.l.b16 %v2041
        %v2822 = vunpack.c.h.b16 %v2041
        %v2823 = vunpack.c.l.b16 %v2042
        %v2824 = vunpack.c.h.b16 %v2042
        %v2825 = vunpack.c.l.b16 %v2043
        %v2826 = vunpack.c.h.b16 %v2043
        %v2827 = vunpack.c.l.b16 %v2044
        %v2828 = vunpack.c.h.b16 %v2044
        %v2829 = vunpack.c.l.b16 %v2045
        %v2830 = vunpack.c.h.b16 %v2045
        %v2831 = vunpack.c.l.b16 %v2046
        %v2832 = vunpack.c.h.b16 %v2046
        %v2833 = vunpack.c.l.b16 %v2047
        %v2834 = vunpack.c.h.b16 %v2047
        %v2835 = vunpack.c.l.b16 %v2048
        %v2836 = vunpack.c.h.b16 %v2048
        %v2837 = vunpack.c.l.b16 %v2049
        %v2838 = vunpack.c.h.b16 %v2049
        %v2839 = vunpack.c.l.b16 %v2050
        %v2840 = vunpack.c.h.b16 %v2050
        %v2841 = vunpack.c.l.b16 %v2051
        %v2842 = vunpack.c.h.b16 %v2051
        %v2843 = vunpack.c.l.b16 %v2052
        %v2844 = vunpack.c.h.b16 %v2052
        %v2845 = vunpack.c.l.b16 %v2053
        %v2846 = vunpack.c.h.b16 %v2053
        %v2847 = vunpack.c.l.b16 %v2054
        %v2848 = vunpack.c.h.b16 %v2054
        %v2849 = vunpack.c.l.b16 %v2055
        %v2850 = vunpack.c.h.b16 %v2055
        %v2851 = vunpack.c.l.b16 %v2056
        %v2852 = vunpack.c.h.b16 %v2056
        %v2853 = vunpack.c.l.b16 %v2057
        %v2854 = vunpack.c.h.b16 %v2057
        %v2855 = vunpack.c.l.b16 %v2058
        %v2856 = vunpack.c.h.b16 %v2058
        %v2857 = vunpack.c.l.b16 %v2059
        %v2858 = vunpack.c.h.b16 %v2059
        %v2859 = vunpack.c.l.b16 %v2060
        %v2860 = vunpack.c.h.b16 %v2060
        %v2861 = vunpack.c.l.b16 %v2061
        %v2862 = vunpack.c.h.b16 %v2061
        %v2863 = vunpack.c.l.b16 %v2062
        %v2864 = vunpack.c.h.b16 %v2062
        %v2865 = vunpack.c.l.b16 %v2063
        %v2866 = vunpack.c.h.b16 %v2063
        %v2867 = vunpack.c.l.b16 %v2064
        %v2868 = vunpack.c.h.b16 %v2064
        %v2869 = vunpack.c.l.b16 %v2065
        %v2870 = vunpack.c.h.b16 %v2065
        %v2871 = vunpack.c.l.b16 %v2066
        %v2872 = vunpack.c.h.b16 %v2066
        %v2873 = vunpack.c.l.b16 %v2067
        %v2874 = vunpack.c.h.b16 %v2067
        %v2875 = vunpack.c.l.b16 %v2068
        %v2876 = vunpack.c.h.b16 %v2068
        %v2877 = vunpack.c.l.b16 %v2069
        %v2878 = vunpack.c.h.b16 %v2069
        %v2879 = vunpack.c.l.b16 %v2070
        %v2880 = vunpack.c.h.b16 %v2070
        %v2881 = vpack.c.b16 %v2377, %v2369
        %v2882 = vpack.c.b16 %v2378, %v2370
        %v2883 = vpack.c.b16 %v2379, %v2371
        %v2884 = vpack.c.b16 %v2380, %v2372
        %v2885 = vpack.c.b16 %v2381, %v2373
        %v2886 = vpack.c.b16 %v2382, %v2374
        %v2887 = vpack.c.b16 %v2383, %v2375
        %v2888 = vpack.c.b16 %v2384, %v2376
        %v2889 = vpack.c.b16 %v2393, %v2385
        %v2890 = vpack.c.b16 %v2394, %v2386
        %v2891 = vpack.c.b16 %v2395, %v2387
        %v2892 = vpack.c.b16 %v2396, %v2388
        %v2893 = vpack.c.b16 %v2397, %v2389
        %v2894 = vpack.c.b16 %v2398, %v2390
        %v2895 = vpack.c.b16 %v2399, %v2391
        %v2896 = vpack.c.b16 %v2400, %v2392
        %v2897 = vpack.c.b16 %v2409, %v2401
        %v2898 = vpack.c.b16 %v2410, %v2402
        %v2899 = vpack.c.b16 %v2411, %v2403
        %v2900 = vpack.c.b16 %v2412, %v2404
        %v2901 = vpack.c.b16 %v2413, %v2405
        %v2902 = vpack.c.b16 %v2414, %v2406
        %v2903 = vpack.c.b16 %v2415, %v2407
        %v2904 = vpack.c.b16 %v2416, %v2408
        %v2905 = vpack.c.b16 %v2425, %v2417
        %v2906 = vpack.c.b16 %v2426, %v2418
        %v2907 = vpack.c.b16 %v2427, %v2419
        %v2908 = vpack.c.b16 %v2428, %v2420
        %v2909 = vpack.c.b16 %v2429, %v2421
        %v2910 = vpack.c.b16 %v2430, %v2422
        %v2911 = vpack.c.b16 %v2431, %v2423
        %v2912 = vpack.c.b16 %v2432, %v2424
        %v2913 = vpack.c.b16 %v2441, %v2433
        %v2914 = vpack.c.b16 %v2442, %v2434
        %v2915 = vpack.c.b16 %v2443, %v2435
        %v2916 = vpack.c.b16 %v2444, %v2436
        %v2917 = vpack.c.b16 %v2445, %v2437
        %v2918 = vpack.c.b16 %v2446, %v2438
        %v2919 = vpack.c.b16 %v2447, %v2439
        %v2920 = vpack.c.b16 %v2448, %v2440
        %v2921 = vpack.c.b16 %v2457, %v2449
        %v2922 = vpack.c.b16 %v2458, %v2450
        %v2923 = vpack.c.b16 %v2459, %v2451
        %v2924 = vpack.c.b16 %v2460, %v2452
        %v2925 = vpack.c.b16 %v2461, %v2453
        %v2926 = vpack.c.b16 %v2462, %v2454
        %v2927 = vpack.c.b16 %v2463, %v2455
        %v2928 = vpack.c.b16 %v2464, %v2456
        %v2929 = vpack.c.b16 %v2473, %v2465
        %v2930 = vpack.c.b16 %v2474, %v2466
        %v2931 = vpack.c.b16 %v2475, %v2467
        %v2932 = vpack.c.b16 %v2476, %v2468
        %v2933 = vpack.c.b16 %v2477, %v2469
        %v2934 = vpack.c.b16 %v2478, %v2470
        %v2935 = vpack.c.b16 %v2479, %v2471
        %v2936 = vpack.c.b16 %v2480, %v2472
        %v2937 = vpack.c.b16 %v2489, %v2481
        %v2938 = vpack.c.b16 %v2490, %v2482
        %v2939 = vpack.c.b16 %v2491, %v2483
        %v2940 = vpack.c.b16 %v2492, %v2484
        %v2941 = vpack.c.b16 %v2493, %v2485
        %v2942 = vpack.c.b16 %v2494, %v2486
        %v2943 = vpack.c.b16 %v2495, %v2487
        %v2944 = vpack.c.b16 %v2496, %v2488
        %v2945 = vpack.c.b16 %v2505, %v2497
        %v2946 = vpack.c.b16 %v2506, %v2498
        %v2947 = vpack.c.b16 %v2507, %v2499
        %v2948 = vpack.c.b16 %v2508, %v2500
        %v2949 = vpack.c.b16 %v2509, %v2501
        %v2950 = vpack.c.b16 %v2510, %v2502
        %v2951 = vpack.c.b16 %v2511, %v2503
        %v2952 = vpack.c.b16 %v2512, %v2504
        %v2953 = vpack.c.b16 %v2521, %v2513
        %v2954 = vpack.c.b16 %v2522, %v2514
        %v2955 = vpack.c.b16 %v2523, %v2515
        %v2956 = vpack.c.b16 %v2524, %v2516
        %v2957 = vpack.c.b16 %v2525, %v2517
        %v2958 = vpack.c.b16 %v2526, %v2518
        %v2959 = vpack.c.b16 %v2527, %v2519
        %v2960 = vpack.c.b16 %v2528, %v2520
        %v2961 = vpack.c.b16 %v2537, %v2529
        %v2962 = vpack.c.b16 %v2538, %v2530
        %v2963 = vpack.c.b16 %v2539, %v2531
        %v2964 = vpack.c.b16 %v2540, %v2532
        %v2965 = vpack.c.b16 %v2541, %v2533
        %v2966 = vpack.c.b16 %v2542, %v2534
        %v2967 = vpack.c.b16 %v2543, %v2535
        %v2968 = vpack.c.b16 %v2544, %v2536
        %v2969 = vpack.c.b16 %v2553, %v2545
        %v2970 = vpack.c.b16 %v2554, %v2546
        %v2971 = vpack.c.b16 %v2555, %v2547
        %v2972 = vpack.c.b16 %v2556, %v2548
        %v2973 = vpack.c.b16 %v2557, %v2549
        %v2974 = vpack.c.b16 %v2558, %v2550
        %v2975 = vpack.c.b16 %v2559, %v2551
        %v2976 = vpack.c.b16 %v2560, %v2552
        %v2977 = vpack.c.b16 %v2569, %v2561
        %v2978 = vpack.c.b16 %v2570, %v2562
        %v2979 = vpack.c.b16 %v2571, %v2563
        %v2980 = vpack.c.b16 %v2572, %v2564
        %v2981 = vpack.c.b16 %v2573, %v2565
        %v2982 = vpack.c.b16 %v2574, %v2566
        %v2983 = vpack.c.b16 %v2575, %v2567
        %v2984 = vpack.c.b16 %v2576, %v2568
        %v2985 = vpack.c.b16 %v2585, %v2577
        %v2986 = vpack.c.b16 %v2586, %v2578
        %v2987 = vpack.c.b16 %v2587, %v2579
        %v2988 = vpack.c.b16 %v2588, %v2580
        %v2989 = vpack.c.b16 %v2589, %v2581
        %v2990 = vpack.c.b16 %v2590, %v2582
        %v2991 = vpack.c.b16 %v2591, %v2583
        %v2992 = vpack.c.b16 %v2592, %v2584
        %v2993 = vpack.c.b16 %v2601, %v2593
        %v2994 = vpack.c.b16 %v2602, %v2594
        %v2995 = vpack.c.b16 %v2603, %v2595
        %v2996 = vpack.c.b16 %v2604, %v2596
        %v2997 = vpack.c.b16 %v2605, %v2597
        %v2998 = vpack.c.b16 %v2606, %v2598
        %v2999 = vpack.c.b16 %v2607, %v2599
        %v3000 = vpack.c.b16 %v2608, %v2600
        %v3001 = vpack.c.b16 %v2617, %v2609
        %v3002 = vpack.c.b16 %v2618, %v2610
        %v3003 = vpack.c.b16 %v2619, %v2611
        %v3004 = vpack.c.b16 %v2620, %v2612
        %v3005 = vpack.c.b16 %v2621, %v2613
        %v3006 = vpack.c.b16 %v2622, %v2614
        %v3007 = vpack.c.b16 %v2623, %v2615
        %v3008 = vpack.c.b16 %v2624, %v2616
        %v3009 = vpack.c.b16 %v2633, %v2625
        %v3010 = vpack.c.b16 %v2634, %v2626
        %v3011 = vpack.c.b16 %v2635, %v2627
        %v3012 = vpack.c.b16 %v2636, %v2628
        %v3013 = vpack.c.b16 %v2637, %v2629
        %v3014 = vpack.c.b16 %v2638, %v2630
        %v3015 = vpack.c.b16 %v2639, %v2631
        %v3016 = vpack.c.b16 %v2640, %v2632
        %v3017 = vpack.c.b16 %v2649, %v2641
        %v3018 = vpack.c.b16 %v2650, %v2642
        %v3019 = vpack.c.b16 %v2651, %v2643
        %v3020 = vpack.c.b16 %v2652, %v2644
        %v3021 = vpack.c.b16 %v2653, %v2645
        %v3022 = vpack.c.b16 %v2654, %v2646
        %v3023 = vpack.c.b16 %v2655, %v2647
        %v3024 = vpack.c.b16 %v2656, %v2648
        %v3025 = vpack.c.b16 %v2665, %v2657
        %v3026 = vpack.c.b16 %v2666, %v2658
        %v3027 = vpack.c.b16 %v2667, %v2659
        %v3028 = vpack.c.b16 %v2668, %v2660
        %v3029 = vpack.c.b16 %v2669, %v2661
        %v3030 = vpack.c.b16 %v2670, %v2662
        %v3031 = vpack.c.b16 %v2671, %v2663
        %v3032 = vpack.c.b16 %v2672, %v2664
        %v3033 = vpack.c.b16 %v2681, %v2673
        %v3034 = vpack.c.b16 %v2682, %v2674
        %v3035 = vpack.c.b16 %v2683, %v2675
        %v3036 = vpack.c.b16 %v2684, %v2676
        %v3037 = vpack.c.b16 %v2685, %v2677
        %v3038 = vpack.c.b16 %v2686, %v2678
        %v3039 = vpack.c.b16 %v2687, %v2679
        %v3040 = vpack.c.b16 %v2688, %v2680
        %v3041 = vpack.c.b16 %v2697, %v2689
        %v3042 = vpack.c.b16 %v2698, %v2690
        %v3043 = vpack.c.b16 %v2699, %v2691
        %v3044 = vpack.c.b16 %v2700, %v2692
        %v3045 = vpack.c.b16 %v2701, %v2693
        %v3046 = vpack.c.b16 %v2702, %v2694
        %v3047 = vpack.c.b16 %v2703, %v2695
        %v3048 = vpack.c.b16 %v2704, %v2696
        %v3049 = vpack.c.b16 %v2713, %v2705
        %v3050 = vpack.c.b16 %v2714, %v2706
        %v3051 = vpack.c.b16 %v2715, %v2707
        %v3052 = vpack.c.b16 %v2716, %v2708
        %v3053 = vpack.c.b16 %v2717, %v2709
        %v3054 = vpack.c.b16 %v2718, %v2710
        %v3055 = vpack.c.b16 %v2719, %v2711
        %v3056 = vpack.c.b16 %v2720, %v2712
        %v3057 = vpack.c.b16 %v2729, %v2721
        %v3058 = vpack.c.b16 %v2730, %v2722
        %v3059 = vpack.c.b16 %v2731, %v2723
        %v3060 = vpack.c.b16 %v2732, %v2724
        %v3061 = vpack.c.b16 %v2733, %v2725
        %v3062 = vpack.c.b16 %v2734, %v2726
        %v3063 = vpack.c.b16 %v2735, %v2727
        %v3064 = vpack.c.b16 %v2736, %v2728
        %v3065 = vpack.c.b16 %v2745, %v2737
        %v3066 = vpack.c.b16 %v2746, %v2738
        %v3067 = vpack.c.b16 %v2747, %v2739
        %v3068 = vpack.c.b16 %v2748, %v2740
        %v3069 = vpack.c.b16 %v2749, %v2741
        %v3070 = vpack.c.b16 %v2750, %v2742
        %v3071 = vpack.c.b16 %v2751, %v2743
        %v3072 = vpack.c.b16 %v2752, %v2744
        %v3073 = vpack.c.b16 %v2761, %v2753
        %v3074 = vpack.c.b16 %v2762, %v2754
        %v3075 = vpack.c.b16 %v2763, %v2755
        %v3076 = vpack.c.b16 %v2764, %v2756
        %v3077 = vpack.c.b16 %v2765, %v2757
        %v3078 = vpack.c.b16 %v2766, %v2758
        %v3079 = vpack.c.b16 %v2767, %v2759
        %v3080 = vpack.c.b16 %v2768, %v2760
        %v3081 = vpack.c.b16 %v2777, %v2769
        %v3082 = vpack.c.b16 %v2778, %v2770
        %v3083 = vpack.c.b16 %v2779, %v2771
        %v3084 = vpack.c.b16 %v2780, %v2772
        %v3085 = vpack.c.b16 %v2781, %v2773
        %v3086 = vpack.c.b16 %v2782, %v2774
        %v3087 = vpack.c.b16 %v2783, %v2775
        %v3088 = vpack.c.b16 %v2784, %v2776
        %v3089 = vpack.c.b16 %v2793, %v2785
        %v3090 = vpack.c.b16 %v2794, %v2786
        %v3091 = vpack.c.b16 %v2795, %v2787
        %v3092 = vpack.c.b16 %v2796, %v2788
        %v3093 = vpack.c.b16 %v2797, %v2789
        %v3094 = vpack.c.b16 %v2798, %v2790
        %v3095 = vpack.c.b16 %v2799, %v2791
        %v3096 = vpack.c.b16 %v2800, %v2792
        %v3097 = vpack.c.b16 %v2809, %v2801
        %v3098 = vpack.c.b16 %v2810, %v2802
        %v3099 = vpack.c.b16 %v2811, %v2803
        %v3100 = vpack.c.b16 %v2812, %v2804
        %v3101 = vpack.c.b16 %v2813, %v2805
        %v3102 = vpack.c.b16 %v2814, %v2806
        %v3103 = vpack.c.b16 %v2815, %v2807
        %v3104 = vpack.c.b16 %v2816, %v2808
        %v3105 = vpack.c.b16 %v2825, %v2817
        %v3106 = vpack.c.b16 %v2826, %v2818
        %v3107 = vpack.c.b16 %v2827, %v2819
        %v3108 = vpack.c.b16 %v2828, %v2820
        %v3109 = vpack.c.b16 %v2829, %v2821
        %v3110 = vpack.c.b16 %v2830, %v2822
        %v3111 = vpack.c.b16 %v2831, %v2823
        %v3112 = vpack.c.b16 %v2832, %v2824
        %v3113 = vpack.c.b16 %v2841, %v2833
        %v3114 = vpack.c.b16 %v2842, %v2834
        %v3115 = vpack.c.b16 %v2843, %v2835
        %v3116 = vpack.c.b16 %v2844, %v2836
        %v3117 = vpack.c.b16 %v2845, %v2837
        %v3118 = vpack.c.b16 %v2846, %v2838
        %v3119 = vpack.c.b16 %v2847, %v2839
        %v3120 = vpack.c.b16 %v2848, %v2840
        %v3121 = vpack.c.b16 %v2857, %v2849
        %v3122 = vpack.c.b16 %v2858, %v2850
        %v3123 = vpack.c.b16 %v2859, %v2851
        %v3124 = vpack.c.b16 %v2860, %v2852
        %v3125 = vpack.c.b16 %v2861, %v2853
        %v3126 = vpack.c.b16 %v2862, %v2854
        %v3127 = vpack.c.b16 %v2863, %v2855
        %v3128 = vpack.c.b16 %v2864, %v2856
        %v3129 = vpack.c.b16 %v2873, %v2865
        %v3130 = vpack.c.b16 %v2874, %v2866
        %v3131 = vpack.c.b16 %v2875, %v2867
        %v3132 = vpack.c.b16 %v2876, %v2868
        %v3133 = vpack.c.b16 %v2877, %v2869
        %v3134 = vpack.c.b16 %v2878, %v2870
        %v3135 = vpack.c.b16 %v2879, %v2871
        %v3136 = vpack.c.b16 %v2880, %v2872
        %3393 = vmatprep.subr.bf16.mxu0 %v2938
        %3394 = vmatpush1.bf16.msra.mxu0 %v2937
        %3395 = vmatprep.subr.bf16.mxu0 %v2930
        %3396 = vmatpush1.bf16.msra.mxu0 %v2929
        %3397 = vmatprep.subr.bf16.mxu0 %v2922
        %3398 = vmatpush1.bf16.msra.mxu0 %v2921
        %3399 = vmatprep.subr.bf16.mxu0 %v2914
        %3400 = vmatpush1.bf16.msra.mxu0 %v2913
        %3401 = vmatprep.subr.bf16.mxu0 %v2906
        %3402 = vmatpush1.bf16.msra.mxu0 %v2905
        %3403 = vmatprep.subr.bf16.mxu0 %v2898
        %3404 = vmatpush1.bf16.msra.mxu0 %v2897
        %3405 = vmatprep.subr.bf16.mxu0 %v2890
        %3406 = vmatpush1.bf16.msra.mxu0 %v2889
        %3407 = vmatprep.subr.bf16.mxu0 %v2882
        %3408 = vmatpush1.bf16.msra.mxu0 %v2881
        %3409 = vmatprep.subr.bf16.mxu0 %v3002
        %3410 = vmatpush2.bf16.msra.mxu0 %v3001
        %3411 = vmatprep.subr.bf16.mxu0 %v2994
        %3412 = vmatpush2.bf16.msra.mxu0 %v2993
        %3413 = vmatprep.subr.bf16.mxu0 %v2986
        %3414 = vmatpush2.bf16.msra.mxu0 %v2985
        %3415 = vmatprep.subr.bf16.mxu0 %v2978
        %3416 = vmatpush2.bf16.msra.mxu0 %v2977
        %3417 = vmatprep.subr.bf16.mxu0 %v2970
        %3418 = vmatpush2.bf16.msra.mxu0 %v2969
        %3419 = vmatprep.subr.bf16.mxu0 %v2962
        %3420 = vmatpush2.bf16.msra.mxu0 %v2961
        %3421 = vmatprep.subr.bf16.mxu0 %v2954
        %3422 = vmatpush2.bf16.msra.mxu0 %v2953
        %3423 = vmatprep.subr.bf16.mxu0 %v2946
        %3424 = vmatpush2.bf16.msra.mxu0 %v2945
        %3425 = vmatprep.mubr.bf16.mxu0 %v1812
        %3426 = vmatmul.mubr.bf16.gmra.mxu0 %v1811
        %v3427 = vpop.f32.mrf.mxu0
        %v3428 = vadd.f32 %v2076, %v3427
        %v3429 = vpop.f32.mrf.mxu0
        %v3430 = vadd.f32 %v2080, %v3429
        %v3431 = vpop.f32.mrf.mxu0
        %v3432 = vpop.f32.mrf.mxu0
        %3433 = vdwg.mxu0
        %3434 = vmatprep.subr.bf16.mxu0 %v3066
        %3435 = vmatpush1.bf16.msra.mxu0 %v3065
        %3436 = vmatprep.subr.bf16.mxu0 %v3058
        %3437 = vmatpush1.bf16.msra.mxu0 %v3057
        %3438 = vmatprep.subr.bf16.mxu0 %v3050
        %3439 = vmatpush1.bf16.msra.mxu0 %v3049
        %3440 = vmatprep.subr.bf16.mxu0 %v3042
        %3441 = vmatpush1.bf16.msra.mxu0 %v3041
        %3442 = vmatprep.subr.bf16.mxu0 %v3034
        %3443 = vmatpush1.bf16.msra.mxu0 %v3033
        %3444 = vmatprep.subr.bf16.mxu0 %v3026
        %3445 = vmatpush1.bf16.msra.mxu0 %v3025
        %3446 = vmatprep.subr.bf16.mxu0 %v3018
        %3447 = vmatpush1.bf16.msra.mxu0 %v3017
        %3448 = vmatprep.subr.bf16.mxu0 %v3010
        %3449 = vmatpush1.bf16.msra.mxu0 %v3009
        %3450 = vmatprep.subr.bf16.mxu0 %v3130
        %3451 = vmatpush2.bf16.msra.mxu0 %v3129
        %3452 = vmatprep.subr.bf16.mxu0 %v3122
        %3453 = vmatpush2.bf16.msra.mxu0 %v3121
        %3454 = vmatprep.subr.bf16.mxu0 %v3114
        %3455 = vmatpush2.bf16.msra.mxu0 %v3113
        %3456 = vmatprep.subr.bf16.mxu0 %v3106
        %3457 = vmatpush2.bf16.msra.mxu0 %v3105
        %3458 = vmatprep.subr.bf16.mxu0 %v3098
        %3459 = vmatpush2.bf16.msra.mxu0 %v3097
        %3460 = vmatprep.subr.bf16.mxu0 %v3090
        %3461 = vmatpush2.bf16.msra.mxu0 %v3089
        %3462 = vmatprep.subr.bf16.mxu0 %v3082
        %3463 = vmatpush2.bf16.msra.mxu0 %v3081
        %3464 = vmatprep.subr.bf16.mxu0 %v3074
        %3465 = vmatpush2.bf16.msra.mxu0 %v3073
        %3466 = vmatprep.mubr.bf16.mxu0 %v1814
        %3467 = vmatmul.mubr.bf16.gmra.mxu0 %v1813
        %v3468 = vpop.f32.mrf.mxu0
        %v3469 = vadd.f32 %v3428, %v3468
        %v3470 = vpop.f32.mrf.mxu0
        %v3471 = vadd.f32 %v3430, %v3470
        %v3472 = vpop.f32.mrf.mxu0
        %v3473 = vpop.f32.mrf.mxu0
        %3474 = vdwg.mxu0
        %3475 = vmatprep.subr.bf16.mxu0 %v2940
        %3476 = vmatpush1.bf16.msra.mxu0 %v2939
        %3477 = vmatprep.subr.bf16.mxu0 %v2932
        %3478 = vmatpush1.bf16.msra.mxu0 %v2931
        %3479 = vmatprep.subr.bf16.mxu0 %v2924
        %3480 = vmatpush1.bf16.msra.mxu0 %v2923
        %3481 = vmatprep.subr.bf16.mxu0 %v2916
        %3482 = vmatpush1.bf16.msra.mxu0 %v2915
        %3483 = vmatprep.subr.bf16.mxu0 %v2908
        %3484 = vmatpush1.bf16.msra.mxu0 %v2907
        %3485 = vmatprep.subr.bf16.mxu0 %v2900
        %3486 = vmatpush1.bf16.msra.mxu0 %v2899
        %3487 = vmatprep.subr.bf16.mxu0 %v2892
        %3488 = vmatpush1.bf16.msra.mxu0 %v2891
        %3489 = vmatprep.subr.bf16.mxu0 %v2884
        %3490 = vmatpush1.bf16.msra.mxu0 %v2883
        %3491 = vmatprep.subr.bf16.mxu0 %v3004
        %3492 = vmatpush2.bf16.msra.mxu0 %v3003
        %3493 = vmatprep.subr.bf16.mxu0 %v2996
        %3494 = vmatpush2.bf16.msra.mxu0 %v2995
        %3495 = vmatprep.subr.bf16.mxu0 %v2988
        %3496 = vmatpush2.bf16.msra.mxu0 %v2987
        %3497 = vmatprep.subr.bf16.mxu0 %v2980
        %3498 = vmatpush2.bf16.msra.mxu0 %v2979
        %3499 = vmatprep.subr.bf16.mxu0 %v2972
        %3500 = vmatpush2.bf16.msra.mxu0 %v2971
        %3501 = vmatprep.subr.bf16.mxu0 %v2964
        %3502 = vmatpush2.bf16.msra.mxu0 %v2963
        %3503 = vmatprep.subr.bf16.mxu0 %v2956
        %3504 = vmatpush2.bf16.msra.mxu0 %v2955
        %3505 = vmatprep.subr.bf16.mxu0 %v2948
        %3506 = vmatpush2.bf16.msra.mxu0 %v2947
        %3507 = vmatprep.mubr.bf16.mxu0 %v1812
        %3508 = vmatmul.mubr.bf16.gmra.mxu0 %v1811
        %v3509 = vpop.f32.mrf.mxu0
        %v3510 = vadd.f32 %v2084, %v3509
        %v3511 = vpop.f32.mrf.mxu0
        %v3512 = vadd.f32 %v2088, %v3511
        %v3513 = vpop.f32.mrf.mxu0
        %v3514 = vpop.f32.mrf.mxu0
        %3515 = vdwg.mxu0
        %3516 = vmatprep.subr.bf16.mxu0 %v3068
        %3517 = vmatpush1.bf16.msra.mxu0 %v3067
        %3518 = vmatprep.subr.bf16.mxu0 %v3060
        %3519 = vmatpush1.bf16.msra.mxu0 %v3059
        %3520 = vmatprep.subr.bf16.mxu0 %v3052
        %3521 = vmatpush1.bf16.msra.mxu0 %v3051
        %3522 = vmatprep.subr.bf16.mxu0 %v3044
        %3523 = vmatpush1.bf16.msra.mxu0 %v3043
        %3524 = vmatprep.subr.bf16.mxu0 %v3036
        %3525 = vmatpush1.bf16.msra.mxu0 %v3035
        %3526 = vmatprep.subr.bf16.mxu0 %v3028
        %3527 = vmatpush1.bf16.msra.mxu0 %v3027
        %3528 = vmatprep.subr.bf16.mxu0 %v3020
        %3529 = vmatpush1.bf16.msra.mxu0 %v3019
        %3530 = vmatprep.subr.bf16.mxu0 %v3012
        %3531 = vmatpush1.bf16.msra.mxu0 %v3011
        %3532 = vmatprep.subr.bf16.mxu0 %v3132
        %3533 = vmatpush2.bf16.msra.mxu0 %v3131
        %3534 = vmatprep.subr.bf16.mxu0 %v3124
        %3535 = vmatpush2.bf16.msra.mxu0 %v3123
        %3536 = vmatprep.subr.bf16.mxu0 %v3116
        %3537 = vmatpush2.bf16.msra.mxu0 %v3115
        %3538 = vmatprep.subr.bf16.mxu0 %v3108
        %3539 = vmatpush2.bf16.msra.mxu0 %v3107
        %3540 = vmatprep.subr.bf16.mxu0 %v3100
        %3541 = vmatpush2.bf16.msra.mxu0 %v3099
        %3542 = vmatprep.subr.bf16.mxu0 %v3092
        %3543 = vmatpush2.bf16.msra.mxu0 %v3091
        %3544 = vmatprep.subr.bf16.mxu0 %v3084
        %3545 = vmatpush2.bf16.msra.mxu0 %v3083
        %3546 = vmatprep.subr.bf16.mxu0 %v3076
        %3547 = vmatpush2.bf16.msra.mxu0 %v3075
        %3548 = vmatprep.mubr.bf16.mxu0 %v1814
        %3549 = vmatmul.mubr.bf16.gmra.mxu0 %v1813
        %v3550 = vpop.f32.mrf.mxu0
        %v3551 = vadd.f32 %v3510, %v3550
        %v3552 = vpop.f32.mrf.mxu0
        %v3553 = vadd.f32 %v3512, %v3552
        %v3554 = vpop.f32.mrf.mxu0
        %v3555 = vpop.f32.mrf.mxu0
        %3556 = vdwg.mxu0
        %3557 = vmatprep.subr.bf16.mxu0 %v2942
        %3558 = vmatpush1.bf16.msra.mxu0 %v2941
        %3559 = vmatprep.subr.bf16.mxu0 %v2934
        %3560 = vmatpush1.bf16.msra.mxu0 %v2933
        %3561 = vmatprep.subr.bf16.mxu0 %v2926
        %3562 = vmatpush1.bf16.msra.mxu0 %v2925
        %3563 = vmatprep.subr.bf16.mxu0 %v2918
        %3564 = vmatpush1.bf16.msra.mxu0 %v2917
        %3565 = vmatprep.subr.bf16.mxu0 %v2910
        %3566 = vmatpush1.bf16.msra.mxu0 %v2909
        %3567 = vmatprep.subr.bf16.mxu0 %v2902
        %3568 = vmatpush1.bf16.msra.mxu0 %v2901
        %3569 = vmatprep.subr.bf16.mxu0 %v2894
        %3570 = vmatpush1.bf16.msra.mxu0 %v2893
        %3571 = vmatprep.subr.bf16.mxu0 %v2886
        %3572 = vmatpush1.bf16.msra.mxu0 %v2885
        %3573 = vmatprep.subr.bf16.mxu0 %v3006
        %3574 = vmatpush2.bf16.msra.mxu0 %v3005
        %3575 = vmatprep.subr.bf16.mxu0 %v2998
        %3576 = vmatpush2.bf16.msra.mxu0 %v2997
        %3577 = vmatprep.subr.bf16.mxu0 %v2990
        %3578 = vmatpush2.bf16.msra.mxu0 %v2989
        %3579 = vmatprep.subr.bf16.mxu0 %v2982
        %3580 = vmatpush2.bf16.msra.mxu0 %v2981
        %3581 = vmatprep.subr.bf16.mxu0 %v2974
        %3582 = vmatpush2.bf16.msra.mxu0 %v2973
        %3583 = vmatprep.subr.bf16.mxu0 %v2966
        %3584 = vmatpush2.bf16.msra.mxu0 %v2965
        %3585 = vmatprep.subr.bf16.mxu0 %v2958
        %3586 = vmatpush2.bf16.msra.mxu0 %v2957
        %3587 = vmatprep.subr.bf16.mxu0 %v2950
        %3588 = vmatpush2.bf16.msra.mxu0 %v2949
        %3589 = vmatprep.mubr.bf16.mxu0 %v1812
        %3590 = vmatmul.mubr.bf16.gmra.mxu0 %v1811
        %v3591 = vpop.f32.mrf.mxu0
        %v3592 = vadd.f32 %v2092, %v3591
        %v3593 = vpop.f32.mrf.mxu0
        %v3594 = vadd.f32 %v2096, %v3593
        %v3595 = vpop.f32.mrf.mxu0
        %v3596 = vpop.f32.mrf.mxu0
        %3597 = vdwg.mxu0
        %3598 = vmatprep.subr.bf16.mxu0 %v3070
        %3599 = vmatpush1.bf16.msra.mxu0 %v3069
        %3600 = vmatprep.subr.bf16.mxu0 %v3062
        %3601 = vmatpush1.bf16.msra.mxu0 %v3061
        %3602 = vmatprep.subr.bf16.mxu0 %v3054
        %3603 = vmatpush1.bf16.msra.mxu0 %v3053
        %3604 = vmatprep.subr.bf16.mxu0 %v3046
        %3605 = vmatpush1.bf16.msra.mxu0 %v3045
        %3606 = vmatprep.subr.bf16.mxu0 %v3038
        %3607 = vmatpush1.bf16.msra.mxu0 %v3037
        %3608 = vmatprep.subr.bf16.mxu0 %v3030
        %3609 = vmatpush1.bf16.msra.mxu0 %v3029
        %3610 = vmatprep.subr.bf16.mxu0 %v3022
        %3611 = vmatpush1.bf16.msra.mxu0 %v3021
        %3612 = vmatprep.subr.bf16.mxu0 %v3014
        %3613 = vmatpush1.bf16.msra.mxu0 %v3013
        %3614 = vmatprep.subr.bf16.mxu0 %v3134
        %3615 = vmatpush2.bf16.msra.mxu0 %v3133
        %3616 = vmatprep.subr.bf16.mxu0 %v3126
        %3617 = vmatpush2.bf16.msra.mxu0 %v3125
        %3618 = vmatprep.subr.bf16.mxu0 %v3118
        %3619 = vmatpush2.bf16.msra.mxu0 %v3117
        %3620 = vmatprep.subr.bf16.mxu0 %v3110
        %3621 = vmatpush2.bf16.msra.mxu0 %v3109
        %3622 = vmatprep.subr.bf16.mxu0 %v3102
        %3623 = vmatpush2.bf16.msra.mxu0 %v3101
        %3624 = vmatprep.subr.bf16.mxu0 %v3094
        %3625 = vmatpush2.bf16.msra.mxu0 %v3093
        %3626 = vmatprep.subr.bf16.mxu0 %v3086
        %3627 = vmatpush2.bf16.msra.mxu0 %v3085
        %3628 = vmatprep.subr.bf16.mxu0 %v3078
        %3629 = vmatpush2.bf16.msra.mxu0 %v3077
        %3630 = vmatprep.mubr.bf16.mxu0 %v1814
        %3631 = vmatmul.mubr.bf16.gmra.mxu0 %v1813
        %v3632 = vpop.f32.mrf.mxu0
        %v3633 = vadd.f32 %v3592, %v3632
        %v3634 = vpop.f32.mrf.mxu0
        %v3635 = vadd.f32 %v3594, %v3634
        %v3636 = vpop.f32.mrf.mxu0
        %v3637 = vpop.f32.mrf.mxu0
        %3638 = vdwg.mxu0
        %3639 = vmatprep.subr.bf16.mxu0 %v2944
        %3640 = vmatpush1.bf16.msra.mxu0 %v2943
        %3641 = vmatprep.subr.bf16.mxu0 %v2936
        %3642 = vmatpush1.bf16.msra.mxu0 %v2935
        %3643 = vmatprep.subr.bf16.mxu0 %v2928
        %3644 = vmatpush1.bf16.msra.mxu0 %v2927
        %3645 = vmatprep.subr.bf16.mxu0 %v2920
        %3646 = vmatpush1.bf16.msra.mxu0 %v2919
        %3647 = vmatprep.subr.bf16.mxu0 %v2912
        %3648 = vmatpush1.bf16.msra.mxu0 %v2911
        %3649 = vmatprep.subr.bf16.mxu0 %v2904
        %3650 = vmatpush1.bf16.msra.mxu0 %v2903
        %3651 = vmatprep.subr.bf16.mxu0 %v2896
        %3652 = vmatpush1.bf16.msra.mxu0 %v2895
        %3653 = vmatprep.subr.bf16.mxu0 %v2888
        %3654 = vmatpush1.bf16.msra.mxu0 %v2887
        %3655 = vmatprep.subr.bf16.mxu0 %v3008
        %3656 = vmatpush2.bf16.msra.mxu0 %v3007
        %3657 = vmatprep.subr.bf16.mxu0 %v3000
        %3658 = vmatpush2.bf16.msra.mxu0 %v2999
        %3659 = vmatprep.subr.bf16.mxu0 %v2992
        %3660 = vmatpush2.bf16.msra.mxu0 %v2991
        %3661 = vmatprep.subr.bf16.mxu0 %v2984
        %3662 = vmatpush2.bf16.msra.mxu0 %v2983
        %3663 = vmatprep.subr.bf16.mxu0 %v2976
        %3664 = vmatpush2.bf16.msra.mxu0 %v2975
        %3665 = vmatprep.subr.bf16.mxu0 %v2968
        %3666 = vmatpush2.bf16.msra.mxu0 %v2967
        %3667 = vmatprep.subr.bf16.mxu0 %v2960
        %3668 = vmatpush2.bf16.msra.mxu0 %v2959
        %3669 = vmatprep.subr.bf16.mxu0 %v2952
        %3670 = vmatpush2.bf16.msra.mxu0 %v2951
        %3671 = vmatprep.mubr.bf16.mxu0 %v1812
        %3672 = vmatmul.mubr.bf16.gmra.mxu0 %v1811
        %v3673 = vpop.f32.mrf.mxu0
        %v3674 = vadd.f32 %v2100, %v3673
        %v3675 = vpop.f32.mrf.mxu0
        %v3676 = vadd.f32 %v2104, %v3675
        %v3677 = vpop.f32.mrf.mxu0
        %v3678 = vpop.f32.mrf.mxu0
        %3679 = vdwg.mxu0
        %3680 = vmatprep.subr.bf16.mxu0 %v3072
        %3681 = vmatpush1.bf16.msra.mxu0 %v3071
        %3682 = vmatprep.subr.bf16.mxu0 %v3064
        %3683 = vmatpush1.bf16.msra.mxu0 %v3063
        %3684 = vmatprep.subr.bf16.mxu0 %v3056
        %3685 = vmatpush1.bf16.msra.mxu0 %v3055
        %3686 = vmatprep.subr.bf16.mxu0 %v3048
        %3687 = vmatpush1.bf16.msra.mxu0 %v3047
        %3688 = vmatprep.subr.bf16.mxu0 %v3040
        %3689 = vmatpush1.bf16.msra.mxu0 %v3039
        %3690 = vmatprep.subr.bf16.mxu0 %v3032
        %3691 = vmatpush1.bf16.msra.mxu0 %v3031
        %3692 = vmatprep.subr.bf16.mxu0 %v3024
        %3693 = vmatpush1.bf16.msra.mxu0 %v3023
        %3694 = vmatprep.subr.bf16.mxu0 %v3016
        %3695 = vmatpush1.bf16.msra.mxu0 %v3015
        %3696 = vmatprep.subr.bf16.mxu0 %v3136
        %3697 = vmatpush2.bf16.msra.mxu0 %v3135
        %3698 = vmatprep.subr.bf16.mxu0 %v3128
        %3699 = vmatpush2.bf16.msra.mxu0 %v3127
        %3700 = vmatprep.subr.bf16.mxu0 %v3120
        %3701 = vmatpush2.bf16.msra.mxu0 %v3119
        %3702 = vmatprep.subr.bf16.mxu0 %v3112
        %3703 = vmatpush2.bf16.msra.mxu0 %v3111
        %3704 = vmatprep.subr.bf16.mxu0 %v3104
        %3705 = vmatpush2.bf16.msra.mxu0 %v3103
        %3706 = vmatprep.subr.bf16.mxu0 %v3096
        %3707 = vmatpush2.bf16.msra.mxu0 %v3095
        %3708 = vmatprep.subr.bf16.mxu0 %v3088
        %3709 = vmatpush2.bf16.msra.mxu0 %v3087
        %3710 = vmatprep.subr.bf16.mxu0 %v3080
        %3711 = vmatpush2.bf16.msra.mxu0 %v3079
        %3712 = vmatprep.mubr.bf16.mxu0 %v1814
        %3713 = vmatmul.mubr.bf16.gmra.mxu0 %v1813
        %v3714 = vpop.f32.mrf.mxu0
        %v3715 = vadd.f32 %v3674, %v3714
        %v3716 = vpop.f32.mrf.mxu0
        %v3717 = vadd.f32 %v3676, %v3716
        %v3718 = vpop.f32.mrf.mxu0
        %v3719 = vpop.f32.mrf.mxu0
        %3720 = vdwg.mxu0
        %v3721 = vrot.slane %v3469, 4
        %v3722 = vadd.f32 %v3469, %v3721
        %v3723 = vrot.slane %v3722, 2
        %v3724 = vadd.f32 %v3722, %v3723
        %v3725 = vrot.slane %v3724, 1
        %v3726 = vadd.f32 %v3724, %v3725
        %v3727 = vrot.slane %v3471, 4
        %v3728 = vadd.f32 %v3471, %v3727
        %v3729 = vrot.slane %v3728, 2
        %v3730 = vadd.f32 %v3728, %v3729
        %v3731 = vrot.slane %v3730, 1
        %v3732 = vadd.f32 %v3730, %v3731
        %v3733 = vrot.slane %v3551, 4
        %v3734 = vadd.f32 %v3551, %v3733
        %v3735 = vrot.slane %v3734, 2
        %v3736 = vadd.f32 %v3734, %v3735
        %v3737 = vrot.slane %v3736, 1
        %v3738 = vadd.f32 %v3736, %v3737
        %v3739 = vrot.slane %v3553, 4
        %v3740 = vadd.f32 %v3553, %v3739
        %v3741 = vrot.slane %v3740, 2
        %v3742 = vadd.f32 %v3740, %v3741
        %v3743 = vrot.slane %v3742, 1
        %v3744 = vadd.f32 %v3742, %v3743
        %v3745 = vrot.slane %v3633, 4
        %v3746 = vadd.f32 %v3633, %v3745
        %v3747 = vrot.slane %v3746, 2
        %v3748 = vadd.f32 %v3746, %v3747
        %v3749 = vrot.slane %v3748, 1
        %v3750 = vadd.f32 %v3748, %v3749
        %v3751 = vrot.slane %v3635, 4
        %v3752 = vadd.f32 %v3635, %v3751
        %v3753 = vrot.slane %v3752, 2
        %v3754 = vadd.f32 %v3752, %v3753
        %v3755 = vrot.slane %v3754, 1
        %v3756 = vadd.f32 %v3754, %v3755
        %v3757 = vrot.slane %v3715, 4
        %v3758 = vadd.f32 %v3715, %v3757
        %v3759 = vrot.slane %v3758, 2
        %v3760 = vadd.f32 %v3758, %v3759
        %v3761 = vrot.slane %v3760, 1
        %v3762 = vadd.f32 %v3760, %v3761
        %v3763 = vrot.slane %v3717, 4
        %v3764 = vadd.f32 %v3717, %v3763
        %v3765 = vrot.slane %v3764, 2
        %v3766 = vadd.f32 %v3764, %v3765
        %v3767 = vrot.slane %v3766, 1
        %v3768 = vadd.f32 %v3766, %v3767
        %v3769 = vmul.f32 %v3469, %v3469
        %v3770 = vmul.f32 %v3471, %v3471
        %v3771 = vmul.f32 %v3551, %v3551
        %v3772 = vmul.f32 %v3553, %v3553
        %v3773 = vmul.f32 %v3633, %v3633
        %v3774 = vmul.f32 %v3635, %v3635
        %v3775 = vmul.f32 %v3715, %v3715
        %v3776 = vmul.f32 %v3717, %v3717
        %v3777 = vrot.slane %v3769, 4
        %v3778 = vadd.f32 %v3769, %v3777
        %v3779 = vrot.slane %v3778, 2
        %v3780 = vadd.f32 %v3778, %v3779
        %v3781 = vrot.slane %v3780, 1
        %v3782 = vadd.f32 %v3780, %v3781
        %v3783 = vrot.slane %v3770, 4
        %v3784 = vadd.f32 %v3770, %v3783
        %v3785 = vrot.slane %v3784, 2
        %v3786 = vadd.f32 %v3784, %v3785
        %v3787 = vrot.slane %v3786, 1
        %v3788 = vadd.f32 %v3786, %v3787
        %v3789 = vrot.slane %v3771, 4
        %v3790 = vadd.f32 %v3771, %v3789
        %v3791 = vrot.slane %v3790, 2
        %v3792 = vadd.f32 %v3790, %v3791
        %v3793 = vrot.slane %v3792, 1
        %v3794 = vadd.f32 %v3792, %v3793
        %v3795 = vrot.slane %v3772, 4
        %v3796 = vadd.f32 %v3772, %v3795
        %v3797 = vrot.slane %v3796, 2
        %v3798 = vadd.f32 %v3796, %v3797
        %v3799 = vrot.slane %v3798, 1
        %v3800 = vadd.f32 %v3798, %v3799
        %v3801 = vrot.slane %v3773, 4
        %v3802 = vadd.f32 %v3773, %v3801
        %v3803 = vrot.slane %v3802, 2
        %v3804 = vadd.f32 %v3802, %v3803
        %v3805 = vrot.slane %v3804, 1
        %v3806 = vadd.f32 %v3804, %v3805
        %v3807 = vrot.slane %v3774, 4
        %v3808 = vadd.f32 %v3774, %v3807
        %v3809 = vrot.slane %v3808, 2
        %v3810 = vadd.f32 %v3808, %v3809
        %v3811 = vrot.slane %v3810, 1
        %v3812 = vadd.f32 %v3810, %v3811
        %v3813 = vrot.slane %v3775, 4
        %v3814 = vadd.f32 %v3775, %v3813
        %v3815 = vrot.slane %v3814, 2
        %v3816 = vadd.f32 %v3814, %v3815
        %v3817 = vrot.slane %v3816, 1
        %v3818 = vadd.f32 %v3816, %v3817
        %v3819 = vrot.slane %v3776, 4
        %v3820 = vadd.f32 %v3776, %v3819
        %v3821 = vrot.slane %v3820, 2
        %v3822 = vadd.f32 %v3820, %v3821
        %v3823 = vrot.slane %v3822, 1
        %v3824 = vadd.f32 %v3822, %v3823
        %v3825 = vmul.f32 %v3726, 0.125
        %v3826 = vmul.f32 %v3732, 0.125
        %v3827 = vmul.f32 %v3738, 0.125
        %v3828 = vmul.f32 %v3744, 0.125
        %v3829 = vmul.f32 %v3750, 0.125
        %v3830 = vmul.f32 %v3756, 0.125
        %v3831 = vmul.f32 %v3762, 0.125
        %v3832 = vmul.f32 %v3768, 0.125
        %v3833 = vmul.f32 %v3782, 0.125
        %v3834 = vmul.f32 %v3788, 0.125
        %v3835 = vmul.f32 %v3794, 0.125
        %v3836 = vmul.f32 %v3800, 0.125
        %v3837 = vmul.f32 %v3806, 0.125
        %v3838 = vmul.f32 %v3812, 0.125
        %v3839 = vmul.f32 %v3818, 0.125
        %v3840 = vmul.f32 %v3824, 0.125
        %v3841 = vmul.f32 %v3825, %v3825
        %v3842 = vmul.f32 %v3826, %v3826
        %v3843 = vmul.f32 %v3827, %v3827
        %v3844 = vmul.f32 %v3828, %v3828
        %v3845 = vmul.f32 %v3829, %v3829
        %v3846 = vmul.f32 %v3830, %v3830
        %v3847 = vmul.f32 %v3831, %v3831
        %v3848 = vmul.f32 %v3832, %v3832
        %v3849 = vsub.f32 %v3833, %v3841
        %v3850 = vsub.f32 %v3834, %v3842
        %v3851 = vsub.f32 %v3835, %v3843
        %v3852 = vsub.f32 %v3836, %v3844
        %v3853 = vsub.f32 %v3837, %v3845
        %v3854 = vsub.f32 %v3838, %v3846
        %v3855 = vsub.f32 %v3839, %v3847
        %v3856 = vsub.f32 %v3840, %v3848
        %v3857 = vadd.f32 %v3849, 0.8
        %v3858 = vadd.f32 %v3850, 0.8
        %v3859 = vadd.f32 %v3851, 0.8
        %v3860 = vadd.f32 %v3852, 0.8
        %v3861 = vadd.f32 %v3853, 0.8
        %v3862 = vadd.f32 %v3854, 0.8
        %v3863 = vadd.f32 %v3855, 0.8
        %v3864 = vadd.f32 %v3856, 0.8
        %v3865 = vrsqrt.pop %v3857
        %v3866 = vrsqrt.pop %v3858
        %v3867 = vrsqrt.pop %v3859
        %v3868 = vrsqrt.pop %v3860
        %v3869 = vrsqrt.pop %v3861
        %v3870 = vrsqrt.pop %v3862
        %v3871 = vrsqrt.pop %v3863
        %v3872 = vrsqrt.pop %v3864
        %v3873 = vld [vmem:[#allocation23] sm:$0xff]
        %v3875 = vlaneseq
        %v3876 = vshrl.u32 %v3875, 7
        %v3877 = vsub.s32 0, %v3876
        %v3878 = vrot.slane %v3873, %v3877
        %v3879 = vlaneseq
        %v3880 = vshrl.u32 %v3879, 7
        %v3881 = vsub.s32 1, %v3880
        %v3882 = vrot.slane %v3873, %v3881
        %v3883 = vlaneseq
        %v3884 = vshrl.u32 %v3883, 7
        %v3885 = vsub.s32 2, %v3884
        %v3886 = vrot.slane %v3873, %v3885
        %v3887 = vlaneseq
        %v3888 = vshrl.u32 %v3887, 7
        %v3889 = vsub.s32 3, %v3888
        %v3890 = vrot.slane %v3873, %v3889
        %v3891 = vlaneseq
        %v3892 = vshrl.u32 %v3891, 7
        %v3893 = vsub.s32 4, %v3892
        %v3894 = vrot.slane %v3873, %v3893
        %v3895 = vlaneseq
        %v3896 = vshrl.u32 %v3895, 7
        %v3897 = vsub.s32 5, %v3896
        %v3898 = vrot.slane %v3873, %v3897
        %v3899 = vlaneseq
        %v3900 = vshrl.u32 %v3899, 7
        %v3901 = vsub.s32 6, %v3900
        %v3902 = vrot.slane %v3873, %v3901
        %v3903 = vlaneseq
        %v3904 = vshrl.u32 %v3903, 7
        %v3905 = vsub.s32 7, %v3904
        %v3906 = vrot.slane %v3873, %v3905
        %v3915 = vmul.f32 %v3865, %v3878
        %v3916 = vmul.f32 %v3866, %v3882
        %v3917 = vmul.f32 %v3867, %v3886
        %v3918 = vmul.f32 %v3868, %v3890
        %v3919 = vmul.f32 %v3869, %v3894
        %v3920 = vmul.f32 %v3870, %v3898
        %v3921 = vmul.f32 %v3871, %v3902
        %v3922 = vmul.f32 %v3872, %v3906
        %v3923 = vld [vmem:[#allocation25] sm:$0xff]
        %v3924 = vmul.f32 %v3825, %v3915
        %v3925 = vmul.f32 %v3826, %v3916
        %v3926 = vmul.f32 %v3827, %v3917
        %v3927 = vmul.f32 %v3828, %v3918
        %v3928 = vmul.f32 %v3829, %v3919
        %v3929 = vmul.f32 %v3830, %v3920
        %v3930 = vmul.f32 %v3831, %v3921
        %v3931 = vmul.f32 %v3832, %v3922
        %v3940 = vcombine.low %v3924, %v3925
        %v3941 = vcombine.low %v3926, %v3927
        %v3942 = vcombine.low %v3928, %v3929
        %v3943 = vcombine.low %v3930, %v3931
        %v3945 = vunpack.c.l.s4 1966171168
        %v3946 = vunpack.c.0.s8 %v3945
        %v3947 = vlaneseq
        %v3948 = vshrl.u32 %v3947, 7
        %v3949 = vsub.s32 %v3946, %v3948
        %v3950 = vrot.slane %v3940, %v3949
        %v3952 = vunpack.c.l.s4 1966171168
        %v3953 = vunpack.c.0.s8 %v3952
        %v3954 = vlaneseq
        %v3955 = vshrl.u32 %v3954, 7
        %v3956 = vsub.s32 %v3953, %v3955
        %v3957 = vrot.slane %v3941, %v3956
        %v3959 = vunpack.c.l.s4 1966171168
        %v3960 = vunpack.c.0.s8 %v3959
        %v3961 = vlaneseq
        %v3962 = vshrl.u32 %v3961, 7
        %v3963 = vsub.s32 %v3960, %v3962
        %v3964 = vrot.slane %v3942, %v3963
        %v3966 = vunpack.c.l.s4 1966171168
        %v3967 = vunpack.c.0.s8 %v3966
        %v3968 = vlaneseq
        %v3969 = vshrl.u32 %v3968, 7
        %v3970 = vsub.s32 %v3967, %v3969
        %v3971 = vrot.slane %v3943, %v3970
        %v3972 = vcombine.low %v3950, %v3957
        %v3973 = vcombine.low %v3964, %v3971
        %v3975 = vunpack.c.l.s4 1966171168
        %v3976 = vunpack.c.0.s8 %v3975
        %v3977 = vlaneseq
        %v3978 = vshrl.u32 %v3977, 7
        %v3979 = vsub.s32 %v3976, %v3978
        %v3980 = vrot.slane %v3972, %v3979
        %v3982 = vunpack.c.l.s4 1966171168
        %v3983 = vunpack.c.0.s8 %v3982
        %v3984 = vlaneseq
        %v3985 = vshrl.u32 %v3984, 7
        %v3986 = vsub.s32 %v3983, %v3985
        %v3987 = vrot.slane %v3973, %v3986
        %v3988 = vcombine.low %v3980, %v3987
        %v3990 = vsub.f32 %v3923, %v3988
        %v3991 = vlaneseq
        %v3992 = vshrl.u32 %v3991, 7
        %v3993 = vsub.s32 0, %v3992
        %v3994 = vrot.slane %v3915, %v3993
        %v3995 = vlaneseq
        %v3996 = vshrl.u32 %v3995, 7
        %v3997 = vsub.s32 0, %v3996
        %v3998 = vrot.slane %v3916, %v3997
        %v3999 = vlaneseq
        %v4000 = vshrl.u32 %v3999, 7
        %v4001 = vsub.s32 0, %v4000
        %v4002 = vrot.slane %v3917, %v4001
        %v4003 = vlaneseq
        %v4004 = vshrl.u32 %v4003, 7
        %v4005 = vsub.s32 0, %v4004
        %v4006 = vrot.slane %v3918, %v4005
        %v4007 = vlaneseq
        %v4008 = vshrl.u32 %v4007, 7
        %v4009 = vsub.s32 0, %v4008
        %v4010 = vrot.slane %v3919, %v4009
        %v4011 = vlaneseq
        %v4012 = vshrl.u32 %v4011, 7
        %v4013 = vsub.s32 0, %v4012
        %v4014 = vrot.slane %v3920, %v4013
        %v4015 = vlaneseq
        %v4016 = vshrl.u32 %v4015, 7
        %v4017 = vsub.s32 0, %v4016
        %v4018 = vrot.slane %v3921, %v4017
        %v4019 = vlaneseq
        %v4020 = vshrl.u32 %v4019, 7
        %v4021 = vsub.s32 0, %v4020
        %v4022 = vrot.slane %v3922, %v4021
        %v4023 = vmul.f32 %v3469, %v3994
        %v4024 = vmul.f32 %v3471, %v3998
        %v4025 = vmul.f32 %v3551, %v4002
        %v4026 = vmul.f32 %v3553, %v4006
        %v4027 = vmul.f32 %v3633, %v4010
        %v4028 = vmul.f32 %v3635, %v4014
        %v4029 = vmul.f32 %v3715, %v4018
        %v4030 = vmul.f32 %v3717, %v4022
        %v4032 = vlaneseq
        %v4033 = vshrl.u32 %v4032, 7
        %v4034 = vsub.s32 0, %v4033
        %v4035 = vrot.slane %v3990, %v4034
        %v4036 = vlaneseq
        %v4037 = vshrl.u32 %v4036, 7
        %v4038 = vsub.s32 1, %v4037
        %v4039 = vrot.slane %v3990, %v4038
        %v4040 = vlaneseq
        %v4041 = vshrl.u32 %v4040, 7
        %v4042 = vsub.s32 2, %v4041
        %v4043 = vrot.slane %v3990, %v4042
        %v4044 = vlaneseq
        %v4045 = vshrl.u32 %v4044, 7
        %v4046 = vsub.s32 3, %v4045
        %v4047 = vrot.slane %v3990, %v4046
        %v4048 = vlaneseq
        %v4049 = vshrl.u32 %v4048, 7
        %v4050 = vsub.s32 4, %v4049
        %v4051 = vrot.slane %v3990, %v4050
        %v4052 = vlaneseq
        %v4053 = vshrl.u32 %v4052, 7
        %v4054 = vsub.s32 5, %v4053
        %v4055 = vrot.slane %v3990, %v4054
        %v4056 = vlaneseq
        %v4057 = vshrl.u32 %v4056, 7
        %v4058 = vsub.s32 6, %v4057
        %v4059 = vrot.slane %v3990, %v4058
        %v4060 = vlaneseq
        %v4061 = vshrl.u32 %v4060, 7
        %v4062 = vsub.s32 7, %v4061
        %v4063 = vrot.slane %v3990, %v4062
        %v4072 = vadd.f32 %v4023, %v4035
        %v4073 = vadd.f32 %v4024, %v4039
        %v4074 = vadd.f32 %v4025, %v4043
        %v4075 = vadd.f32 %v4026, %v4047
        %v4076 = vadd.f32 %v4027, %v4051
        %v4077 = vadd.f32 %v4028, %v4055
        %v4078 = vadd.f32 %v4029, %v4059
        %v4079 = vadd.f32 %v4030, %v4063
        %vm4080 = vcmp.gt.f32.partialorder %v4072, 0.0
        %vm4081 = vcmp.gt.f32.partialorder %v4073, 0.0
        %vm4082 = vcmp.gt.f32.partialorder %v4074, 0.0
        %vm4083 = vcmp.gt.f32.partialorder %v4075, 0.0
        %vm4084 = vcmp.gt.f32.partialorder %v4076, 0.0
        %vm4085 = vcmp.gt.f32.partialorder %v4077, 0.0
        %vm4086 = vcmp.gt.f32.partialorder %v4078, 0.0
        %vm4087 = vcmp.gt.f32.partialorder %v4079, 0.0
        %v4088 = vmul.f32 %v4072, 0.2
        %v4089 = vmul.f32 %v4073, 0.2
        %v4090 = vmul.f32 %v4074, 0.2
        %v4091 = vmul.f32 %v4075, 0.2
        %v4092 = vmul.f32 %v4076, 0.2
        %v4093 = vmul.f32 %v4077, 0.2
        %v4094 = vmul.f32 %v4078, 0.2
        %v4095 = vmul.f32 %v4079, 0.2
        %v4096 = vsel %vm4080, %v4072, %v4088
        %v4097 = vsel %vm4081, %v4073, %v4089
        %v4098 = vsel %vm4082, %v4074, %v4090
        %v4099 = vsel %vm4083, %v4075, %v4091
        %v4100 = vsel %vm4084, %v4076, %v4092
        %v4101 = vsel %vm4085, %v4077, %v4093
        %v4102 = vsel %vm4086, %v4078, %v4094
        %v4103 = vsel %vm4087, %v4079, %v4095
        %v4104 = vpack.c.bf16 %v4096, %v4096
        %v4105 = vpack.c.bf16 %v4097, %v4097
        %v4106 = vpack.c.bf16 %v4098, %v4098
        %v4107 = vpack.c.bf16 %v4099, %v4099
        %v4108 = vpack.c.bf16 %v4100, %v4100
        %v4109 = vpack.c.bf16 %v4101, %v4101
        %v4110 = vpack.c.bf16 %v4102, %v4102
        %v4111 = vpack.c.bf16 %v4103, %v4103
        %v4112 = vld [vmem:[%s733] sm:$0xff]
        %v4113 = vld [vmem:[%s733 + $0x8] sm:$0xff]
        %v4114 = vld [vmem:[%s733 + $0x10] sm:$0xff]
        %v4115 = vld [vmem:[%s733 + $0x18] sm:$0xff]
        %v4116 = vld [vmem:[%s733 + $0x20] sm:$0xff]
        %v4117 = vld [vmem:[%s733 + $0x28] sm:$0xff]
        %v4118 = vld [vmem:[%s733 + $0x30] sm:$0xff]
        %v4119 = vld [vmem:[%s733 + $0x38] sm:$0xff]
        %v4120 = vld [vmem:[%s733 + $0x40] sm:$0xff]
        %v4121 = vld [vmem:[%s733 + $0x48] sm:$0xff]
        %v4122 = vld [vmem:[%s733 + $0x50] sm:$0xff]
        %v4123 = vld [vmem:[%s733 + $0x58] sm:$0xff]
        %v4124 = vld [vmem:[%s733 + $0x60] sm:$0xff]
        %v4125 = vld [vmem:[%s733 + $0x68] sm:$0xff]
        %v4126 = vld [vmem:[%s733 + $0x70] sm:$0xff]
        %v4127 = vld [vmem:[%s733 + $0x78] sm:$0xff]
        %v4128 = vld [vmem:[%s733 + $0x80] sm:$0xff]
        %v4129 = vld [vmem:[%s733 + $0x88] sm:$0xff]
        %v4130 = vld [vmem:[%s733 + $0x90] sm:$0xff]
        %v4131 = vld [vmem:[%s733 + $0x98] sm:$0xff]
        %v4132 = vld [vmem:[%s733 + $0xa0] sm:$0xff]
        %v4133 = vld [vmem:[%s733 + $0xa8] sm:$0xff]
        %v4134 = vld [vmem:[%s733 + $0xb0] sm:$0xff]
        %v4135 = vld [vmem:[%s733 + $0xb8] sm:$0xff]
        %v4136 = vld [vmem:[%s733 + $0xc0] sm:$0xff]
        %v4137 = vld [vmem:[%s733 + $0xc8] sm:$0xff]
        %v4138 = vld [vmem:[%s733 + $0xd0] sm:$0xff]
        %v4139 = vld [vmem:[%s733 + $0xd8] sm:$0xff]
        %v4140 = vld [vmem:[%s733 + $0xe0] sm:$0xff]
        %v4141 = vld [vmem:[%s733 + $0xe8] sm:$0xff]
        %v4142 = vld [vmem:[%s733 + $0xf0] sm:$0xff]
        %v4143 = vld [vmem:[%s733 + $0xf8] sm:$0xff]
        %v4144 = vld [vmem:[%s733 + $0x100] sm:$0xff]
        %v4145 = vld [vmem:[%s733 + $0x108] sm:$0xff]
        %v4146 = vld [vmem:[%s733 + $0x110] sm:$0xff]
        %v4147 = vld [vmem:[%s733 + $0x118] sm:$0xff]
        %v4148 = vld [vmem:[%s733 + $0x120] sm:$0xff]
        %v4149 = vld [vmem:[%s733 + $0x128] sm:$0xff]
        %v4150 = vld [vmem:[%s733 + $0x130] sm:$0xff]
        %v4151 = vld [vmem:[%s733 + $0x138] sm:$0xff]
        %v4152 = vld [vmem:[%s733 + $0x140] sm:$0xff]
        %v4153 = vld [vmem:[%s733 + $0x148] sm:$0xff]
        %v4154 = vld [vmem:[%s733 + $0x150] sm:$0xff]
        %v4155 = vld [vmem:[%s733 + $0x158] sm:$0xff]
        %v4156 = vld [vmem:[%s733 + $0x160] sm:$0xff]
        %v4157 = vld [vmem:[%s733 + $0x168] sm:$0xff]
        %v4158 = vld [vmem:[%s733 + $0x170] sm:$0xff]
        %v4159 = vld [vmem:[%s733 + $0x178] sm:$0xff]
        %v4160 = vld [vmem:[%s733 + $0x180] sm:$0xff]
        %v4161 = vld [vmem:[%s733 + $0x188] sm:$0xff]
        %v4162 = vld [vmem:[%s733 + $0x190] sm:$0xff]
        %v4163 = vld [vmem:[%s733 + $0x198] sm:$0xff]
        %v4164 = vld [vmem:[%s733 + $0x1a0] sm:$0xff]
        %v4165 = vld [vmem:[%s733 + $0x1a8] sm:$0xff]
        %v4166 = vld [vmem:[%s733 + $0x1b0] sm:$0xff]
        %v4167 = vld [vmem:[%s733 + $0x1b8] sm:$0xff]
        %v4168 = vld [vmem:[%s733 + $0x1c0] sm:$0xff]
        %v4169 = vld [vmem:[%s733 + $0x1c8] sm:$0xff]
        %v4170 = vld [vmem:[%s733 + $0x1d0] sm:$0xff]
        %v4171 = vld [vmem:[%s733 + $0x1d8] sm:$0xff]
        %v4172 = vld [vmem:[%s733 + $0x1e0] sm:$0xff]
        %v4173 = vld [vmem:[%s733 + $0x1e8] sm:$0xff]
        %v4174 = vld [vmem:[%s733 + $0x1f0] sm:$0xff]
        %v4175 = vld [vmem:[%s733 + $0x1f8] sm:$0xff]
        %v4176 = vld [vmem:[%s733 + $0x200] sm:$0xff]
        %v4177 = vld [vmem:[%s733 + $0x208] sm:$0xff]
        %v4178 = vld [vmem:[%s733 + $0x210] sm:$0xff]
        %v4179 = vld [vmem:[%s733 + $0x218] sm:$0xff]
        %v4180 = vld [vmem:[%s733 + $0x220] sm:$0xff]
        %v4181 = vld [vmem:[%s733 + $0x228] sm:$0xff]
        %v4182 = vld [vmem:[%s733 + $0x230] sm:$0xff]
        %v4183 = vld [vmem:[%s733 + $0x238] sm:$0xff]
        %v4184 = vld [vmem:[%s733 + $0x240] sm:$0xff]
        %v4185 = vld [vmem:[%s733 + $0x248] sm:$0xff]
        %v4186 = vld [vmem:[%s733 + $0x250] sm:$0xff]
        %v4187 = vld [vmem:[%s733 + $0x258] sm:$0xff]
        %v4188 = vld [vmem:[%s733 + $0x260] sm:$0xff]
        %v4189 = vld [vmem:[%s733 + $0x268] sm:$0xff]
        %v4190 = vld [vmem:[%s733 + $0x270] sm:$0xff]
        %v4191 = vld [vmem:[%s733 + $0x278] sm:$0xff]
        %v4192 = vld [vmem:[%s733 + $0x280] sm:$0xff]
        %v4193 = vld [vmem:[%s733 + $0x288] sm:$0xff]
        %v4194 = vld [vmem:[%s733 + $0x290] sm:$0xff]
        %v4195 = vld [vmem:[%s733 + $0x298] sm:$0xff]
        %v4196 = vld [vmem:[%s733 + $0x2a0] sm:$0xff]
        %v4197 = vld [vmem:[%s733 + $0x2a8] sm:$0xff]
        %v4198 = vld [vmem:[%s733 + $0x2b0] sm:$0xff]
        %v4199 = vld [vmem:[%s733 + $0x2b8] sm:$0xff]
        %v4200 = vld [vmem:[%s733 + $0x2c0] sm:$0xff]
        %v4201 = vld [vmem:[%s733 + $0x2c8] sm:$0xff]
        %v4202 = vld [vmem:[%s733 + $0x2d0] sm:$0xff]
        %v4203 = vld [vmem:[%s733 + $0x2d8] sm:$0xff]
        %v4204 = vld [vmem:[%s733 + $0x2e0] sm:$0xff]
        %v4205 = vld [vmem:[%s733 + $0x2e8] sm:$0xff]
        %v4206 = vld [vmem:[%s733 + $0x2f0] sm:$0xff]
        %v4207 = vld [vmem:[%s733 + $0x2f8] sm:$0xff]
        %v4208 = vld [vmem:[%s733 + $0x300] sm:$0xff]
        %v4209 = vld [vmem:[%s733 + $0x308] sm:$0xff]
        %v4210 = vld [vmem:[%s733 + $0x310] sm:$0xff]
        %v4211 = vld [vmem:[%s733 + $0x318] sm:$0xff]
        %v4212 = vld [vmem:[%s733 + $0x320] sm:$0xff]
        %v4213 = vld [vmem:[%s733 + $0x328] sm:$0xff]
        %v4214 = vld [vmem:[%s733 + $0x330] sm:$0xff]
        %v4215 = vld [vmem:[%s733 + $0x338] sm:$0xff]
        %v4216 = vld [vmem:[%s733 + $0x340] sm:$0xff]
        %v4217 = vld [vmem:[%s733 + $0x348] sm:$0xff]
        %v4218 = vld [vmem:[%s733 + $0x350] sm:$0xff]
        %v4219 = vld [vmem:[%s733 + $0x358] sm:$0xff]
        %v4220 = vld [vmem:[%s733 + $0x360] sm:$0xff]
        %v4221 = vld [vmem:[%s733 + $0x368] sm:$0xff]
        %v4222 = vld [vmem:[%s733 + $0x370] sm:$0xff]
        %v4223 = vld [vmem:[%s733 + $0x378] sm:$0xff]
        %v4224 = vld [vmem:[%s733 + $0x380] sm:$0xff]
        %v4225 = vld [vmem:[%s733 + $0x388] sm:$0xff]
        %v4226 = vld [vmem:[%s733 + $0x390] sm:$0xff]
        %v4227 = vld [vmem:[%s733 + $0x398] sm:$0xff]
        %v4228 = vld [vmem:[%s733 + $0x3a0] sm:$0xff]
        %v4229 = vld [vmem:[%s733 + $0x3a8] sm:$0xff]
        %v4230 = vld [vmem:[%s733 + $0x3b0] sm:$0xff]
        %v4231 = vld [vmem:[%s733 + $0x3b8] sm:$0xff]
        %v4232 = vld [vmem:[%s733 + $0x3c0] sm:$0xff]
        %v4233 = vld [vmem:[%s733 + $0x3c8] sm:$0xff]
        %v4234 = vld [vmem:[%s733 + $0x3d0] sm:$0xff]
        %v4235 = vld [vmem:[%s733 + $0x3d8] sm:$0xff]
        %v4236 = vld [vmem:[%s733 + $0x3e0] sm:$0xff]
        %v4237 = vld [vmem:[%s733 + $0x3e8] sm:$0xff]
        %v4238 = vld [vmem:[%s733 + $0x3f0] sm:$0xff]
        %v4239 = vld [vmem:[%s733 + $0x3f8] sm:$0xff]
        %v4240 = vld [vmem:[%s742] sm:$0x3]
        %v4242 = vlaneseq
        %v4243 = vshrl.u32 %v4242, 7
        %v4244 = vsub.s32 0, %v4243
        %v4245 = vrot.slane %v4240, %v4244
        %v4246 = vlaneseq
        %v4247 = vshrl.u32 %v4246, 7
        %v4248 = vsub.s32 1, %v4247
        %v4249 = vrot.slane %v4240, %v4248
        %v4380 = vunpack.c.l.b16 %v4112
        %v4381 = vunpack.c.h.b16 %v4112
        %v4382 = vunpack.c.l.b16 %v4113
        %v4383 = vunpack.c.h.b16 %v4113
        %v4384 = vunpack.c.l.b16 %v4114
        %v4385 = vunpack.c.h.b16 %v4114
        %v4386 = vunpack.c.l.b16 %v4115
        %v4387 = vunpack.c.h.b16 %v4115
        %v4388 = vunpack.c.l.b16 %v4116
        %v4389 = vunpack.c.h.b16 %v4116
        %v4390 = vunpack.c.l.b16 %v4117
        %v4391 = vunpack.c.h.b16 %v4117
        %v4392 = vunpack.c.l.b16 %v4118
        %v4393 = vunpack.c.h.b16 %v4118
        %v4394 = vunpack.c.l.b16 %v4119
        %v4395 = vunpack.c.h.b16 %v4119
        %v4396 = vunpack.c.l.b16 %v4120
        %v4397 = vunpack.c.h.b16 %v4120
        %v4398 = vunpack.c.l.b16 %v4121
        %v4399 = vunpack.c.h.b16 %v4121
        %v4400 = vunpack.c.l.b16 %v4122
        %v4401 = vunpack.c.h.b16 %v4122
        %v4402 = vunpack.c.l.b16 %v4123
        %v4403 = vunpack.c.h.b16 %v4123
        %v4404 = vunpack.c.l.b16 %v4124
        %v4405 = vunpack.c.h.b16 %v4124
        %v4406 = vunpack.c.l.b16 %v4125
        %v4407 = vunpack.c.h.b16 %v4125
        %v4408 = vunpack.c.l.b16 %v4126
        %v4409 = vunpack.c.h.b16 %v4126
        %v4410 = vunpack.c.l.b16 %v4127
        %v4411 = vunpack.c.h.b16 %v4127
        %v4412 = vunpack.c.l.b16 %v4128
        %v4413 = vunpack.c.h.b16 %v4128
        %v4414 = vunpack.c.l.b16 %v4129
        %v4415 = vunpack.c.h.b16 %v4129
        %v4416 = vunpack.c.l.b16 %v4130
        %v4417 = vunpack.c.h.b16 %v4130
        %v4418 = vunpack.c.l.b16 %v4131
        %v4419 = vunpack.c.h.b16 %v4131
        %v4420 = vunpack.c.l.b16 %v4132
        %v4421 = vunpack.c.h.b16 %v4132
        %v4422 = vunpack.c.l.b16 %v4133
        %v4423 = vunpack.c.h.b16 %v4133
        %v4424 = vunpack.c.l.b16 %v4134
        %v4425 = vunpack.c.h.b16 %v4134
        %v4426 = vunpack.c.l.b16 %v4135
        %v4427 = vunpack.c.h.b16 %v4135
        %v4428 = vunpack.c.l.b16 %v4136
        %v4429 = vunpack.c.h.b16 %v4136
        %v4430 = vunpack.c.l.b16 %v4137
        %v4431 = vunpack.c.h.b16 %v4137
        %v4432 = vunpack.c.l.b16 %v4138
        %v4433 = vunpack.c.h.b16 %v4138
        %v4434 = vunpack.c.l.b16 %v4139
        %v4435 = vunpack.c.h.b16 %v4139
        %v4436 = vunpack.c.l.b16 %v4140
        %v4437 = vunpack.c.h.b16 %v4140
        %v4438 = vunpack.c.l.b16 %v4141
        %v4439 = vunpack.c.h.b16 %v4141
        %v4440 = vunpack.c.l.b16 %v4142
        %v4441 = vunpack.c.h.b16 %v4142
        %v4442 = vunpack.c.l.b16 %v4143
        %v4443 = vunpack.c.h.b16 %v4143
        %v4444 = vunpack.c.l.b16 %v4144
        %v4445 = vunpack.c.h.b16 %v4144
        %v4446 = vunpack.c.l.b16 %v4145
        %v4447 = vunpack.c.h.b16 %v4145
        %v4448 = vunpack.c.l.b16 %v4146
        %v4449 = vunpack.c.h.b16 %v4146
        %v4450 = vunpack.c.l.b16 %v4147
        %v4451 = vunpack.c.h.b16 %v4147
        %v4452 = vunpack.c.l.b16 %v4148
        %v4453 = vunpack.c.h.b16 %v4148
        %v4454 = vunpack.c.l.b16 %v4149
        %v4455 = vunpack.c.h.b16 %v4149
        %v4456 = vunpack.c.l.b16 %v4150
        %v4457 = vunpack.c.h.b16 %v4150
        %v4458 = vunpack.c.l.b16 %v4151
        %v4459 = vunpack.c.h.b16 %v4151
        %v4460 = vunpack.c.l.b16 %v4152
        %v4461 = vunpack.c.h.b16 %v4152
        %v4462 = vunpack.c.l.b16 %v4153
        %v4463 = vunpack.c.h.b16 %v4153
        %v4464 = vunpack.c.l.b16 %v4154
        %v4465 = vunpack.c.h.b16 %v4154
        %v4466 = vunpack.c.l.b16 %v4155
        %v4467 = vunpack.c.h.b16 %v4155
        %v4468 = vunpack.c.l.b16 %v4156
        %v4469 = vunpack.c.h.b16 %v4156
        %v4470 = vunpack.c.l.b16 %v4157
        %v4471 = vunpack.c.h.b16 %v4157
        %v4472 = vunpack.c.l.b16 %v4158
        %v4473 = vunpack.c.h.b16 %v4158
        %v4474 = vunpack.c.l.b16 %v4159
        %v4475 = vunpack.c.h.b16 %v4159
        %v4476 = vunpack.c.l.b16 %v4160
        %v4477 = vunpack.c.h.b16 %v4160
        %v4478 = vunpack.c.l.b16 %v4161
        %v4479 = vunpack.c.h.b16 %v4161
        %v4480 = vunpack.c.l.b16 %v4162
        %v4481 = vunpack.c.h.b16 %v4162
        %v4482 = vunpack.c.l.b16 %v4163
        %v4483 = vunpack.c.h.b16 %v4163
        %v4484 = vunpack.c.l.b16 %v4164
        %v4485 = vunpack.c.h.b16 %v4164
        %v4486 = vunpack.c.l.b16 %v4165
        %v4487 = vunpack.c.h.b16 %v4165
        %v4488 = vunpack.c.l.b16 %v4166
        %v4489 = vunpack.c.h.b16 %v4166
        %v4490 = vunpack.c.l.b16 %v4167
        %v4491 = vunpack.c.h.b16 %v4167
        %v4492 = vunpack.c.l.b16 %v4168
        %v4493 = vunpack.c.h.b16 %v4168
        %v4494 = vunpack.c.l.b16 %v4169
        %v4495 = vunpack.c.h.b16 %v4169
        %v4496 = vunpack.c.l.b16 %v4170
        %v4497 = vunpack.c.h.b16 %v4170
        %v4498 = vunpack.c.l.b16 %v4171
        %v4499 = vunpack.c.h.b16 %v4171
        %v4500 = vunpack.c.l.b16 %v4172
        %v4501 = vunpack.c.h.b16 %v4172
        %v4502 = vunpack.c.l.b16 %v4173
        %v4503 = vunpack.c.h.b16 %v4173
        %v4504 = vunpack.c.l.b16 %v4174
        %v4505 = vunpack.c.h.b16 %v4174
        %v4506 = vunpack.c.l.b16 %v4175
        %v4507 = vunpack.c.h.b16 %v4175
        %v4508 = vunpack.c.l.b16 %v4176
        %v4509 = vunpack.c.h.b16 %v4176
        %v4510 = vunpack.c.l.b16 %v4177
        %v4511 = vunpack.c.h.b16 %v4177
        %v4512 = vunpack.c.l.b16 %v4178
        %v4513 = vunpack.c.h.b16 %v4178
        %v4514 = vunpack.c.l.b16 %v4179
        %v4515 = vunpack.c.h.b16 %v4179
        %v4516 = vunpack.c.l.b16 %v4180
        %v4517 = vunpack.c.h.b16 %v4180
        %v4518 = vunpack.c.l.b16 %v4181
        %v4519 = vunpack.c.h.b16 %v4181
        %v4520 = vunpack.c.l.b16 %v4182
        %v4521 = vunpack.c.h.b16 %v4182
        %v4522 = vunpack.c.l.b16 %v4183
        %v4523 = vunpack.c.h.b16 %v4183
        %v4524 = vunpack.c.l.b16 %v4184
        %v4525 = vunpack.c.h.b16 %v4184
        %v4526 = vunpack.c.l.b16 %v4185
        %v4527 = vunpack.c.h.b16 %v4185
        %v4528 = vunpack.c.l.b16 %v4186
        %v4529 = vunpack.c.h.b16 %v4186
        %v4530 = vunpack.c.l.b16 %v4187
        %v4531 = vunpack.c.h.b16 %v4187
        %v4532 = vunpack.c.l.b16 %v4188
        %v4533 = vunpack.c.h.b16 %v4188
        %v4534 = vunpack.c.l.b16 %v4189
        %v4535 = vunpack.c.h.b16 %v4189
        %v4536 = vunpack.c.l.b16 %v4190
        %v4537 = vunpack.c.h.b16 %v4190
        %v4538 = vunpack.c.l.b16 %v4191
        %v4539 = vunpack.c.h.b16 %v4191
        %v4540 = vunpack.c.l.b16 %v4192
        %v4541 = vunpack.c.h.b16 %v4192
        %v4542 = vunpack.c.l.b16 %v4193
        %v4543 = vunpack.c.h.b16 %v4193
        %v4544 = vunpack.c.l.b16 %v4194
        %v4545 = vunpack.c.h.b16 %v4194
        %v4546 = vunpack.c.l.b16 %v4195
        %v4547 = vunpack.c.h.b16 %v4195
        %v4548 = vunpack.c.l.b16 %v4196
        %v4549 = vunpack.c.h.b16 %v4196
        %v4550 = vunpack.c.l.b16 %v4197
        %v4551 = vunpack.c.h.b16 %v4197
        %v4552 = vunpack.c.l.b16 %v4198
        %v4553 = vunpack.c.h.b16 %v4198
        %v4554 = vunpack.c.l.b16 %v4199
        %v4555 = vunpack.c.h.b16 %v4199
        %v4556 = vunpack.c.l.b16 %v4200
        %v4557 = vunpack.c.h.b16 %v4200
        %v4558 = vunpack.c.l.b16 %v4201
        %v4559 = vunpack.c.h.b16 %v4201
        %v4560 = vunpack.c.l.b16 %v4202
        %v4561 = vunpack.c.h.b16 %v4202
        %v4562 = vunpack.c.l.b16 %v4203
        %v4563 = vunpack.c.h.b16 %v4203
        %v4564 = vunpack.c.l.b16 %v4204
        %v4565 = vunpack.c.h.b16 %v4204
        %v4566 = vunpack.c.l.b16 %v4205
        %v4567 = vunpack.c.h.b16 %v4205
        %v4568 = vunpack.c.l.b16 %v4206
        %v4569 = vunpack.c.h.b16 %v4206
        %v4570 = vunpack.c.l.b16 %v4207
        %v4571 = vunpack.c.h.b16 %v4207
        %v4572 = vunpack.c.l.b16 %v4208
        %v4573 = vunpack.c.h.b16 %v4208
        %v4574 = vunpack.c.l.b16 %v4209
        %v4575 = vunpack.c.h.b16 %v4209
        %v4576 = vunpack.c.l.b16 %v4210
        %v4577 = vunpack.c.h.b16 %v4210
        %v4578 = vunpack.c.l.b16 %v4211
        %v4579 = vunpack.c.h.b16 %v4211
        %v4580 = vunpack.c.l.b16 %v4212
        %v4581 = vunpack.c.h.b16 %v4212
        %v4582 = vunpack.c.l.b16 %v4213
        %v4583 = vunpack.c.h.b16 %v4213
        %v4584 = vunpack.c.l.b16 %v4214
        %v4585 = vunpack.c.h.b16 %v4214
        %v4586 = vunpack.c.l.b16 %v4215
        %v4587 = vunpack.c.h.b16 %v4215
        %v4588 = vunpack.c.l.b16 %v4216
        %v4589 = vunpack.c.h.b16 %v4216
        %v4590 = vunpack.c.l.b16 %v4217
        %v4591 = vunpack.c.h.b16 %v4217
        %v4592 = vunpack.c.l.b16 %v4218
        %v4593 = vunpack.c.h.b16 %v4218
        %v4594 = vunpack.c.l.b16 %v4219
        %v4595 = vunpack.c.h.b16 %v4219
        %v4596 = vunpack.c.l.b16 %v4220
        %v4597 = vunpack.c.h.b16 %v4220
        %v4598 = vunpack.c.l.b16 %v4221
        %v4599 = vunpack.c.h.b16 %v4221
        %v4600 = vunpack.c.l.b16 %v4222
        %v4601 = vunpack.c.h.b16 %v4222
        %v4602 = vunpack.c.l.b16 %v4223
        %v4603 = vunpack.c.h.b16 %v4223
        %v4604 = vunpack.c.l.b16 %v4224
        %v4605 = vunpack.c.h.b16 %v4224
        %v4606 = vunpack.c.l.b16 %v4225
        %v4607 = vunpack.c.h.b16 %v4225
        %v4608 = vunpack.c.l.b16 %v4226
        %v4609 = vunpack.c.h.b16 %v4226
        %v4610 = vunpack.c.l.b16 %v4227
        %v4611 = vunpack.c.h.b16 %v4227
        %v4612 = vunpack.c.l.b16 %v4228
        %v4613 = vunpack.c.h.b16 %v4228
        %v4614 = vunpack.c.l.b16 %v4229
        %v4615 = vunpack.c.h.b16 %v4229
        %v4616 = vunpack.c.l.b16 %v4230
        %v4617 = vunpack.c.h.b16 %v4230
        %v4618 = vunpack.c.l.b16 %v4231
        %v4619 = vunpack.c.h.b16 %v4231
        %v4620 = vunpack.c.l.b16 %v4232
        %v4621 = vunpack.c.h.b16 %v4232
        %v4622 = vunpack.c.l.b16 %v4233
        %v4623 = vunpack.c.h.b16 %v4233
        %v4624 = vunpack.c.l.b16 %v4234
        %v4625 = vunpack.c.h.b16 %v4234
        %v4626 = vunpack.c.l.b16 %v4235
        %v4627 = vunpack.c.h.b16 %v4235
        %v4628 = vunpack.c.l.b16 %v4236
        %v4629 = vunpack.c.h.b16 %v4236
        %v4630 = vunpack.c.l.b16 %v4237
        %v4631 = vunpack.c.h.b16 %v4237
        %v4632 = vunpack.c.l.b16 %v4238
        %v4633 = vunpack.c.h.b16 %v4238
        %v4634 = vunpack.c.l.b16 %v4239
        %v4635 = vunpack.c.h.b16 %v4239
        %v4636 = vpack.c.b16 %v4382, %v4380
        %v4637 = vpack.c.b16 %v4383, %v4381
        %v4638 = vpack.c.b16 %v4386, %v4384
        %v4639 = vpack.c.b16 %v4387, %v4385
        %v4640 = vpack.c.b16 %v4390, %v4388
        %v4641 = vpack.c.b16 %v4391, %v4389
        %v4642 = vpack.c.b16 %v4394, %v4392
        %v4643 = vpack.c.b16 %v4395, %v4393
        %v4644 = vpack.c.b16 %v4398, %v4396
        %v4645 = vpack.c.b16 %v4399, %v4397
        %v4646 = vpack.c.b16 %v4402, %v4400
        %v4647 = vpack.c.b16 %v4403, %v4401
        %v4648 = vpack.c.b16 %v4406, %v4404
        %v4649 = vpack.c.b16 %v4407, %v4405
        %v4650 = vpack.c.b16 %v4410, %v4408
        %v4651 = vpack.c.b16 %v4411, %v4409
        %v4652 = vpack.c.b16 %v4414, %v4412
        %v4653 = vpack.c.b16 %v4415, %v4413
        %v4654 = vpack.c.b16 %v4418, %v4416
        %v4655 = vpack.c.b16 %v4419, %v4417
        %v4656 = vpack.c.b16 %v4422, %v4420
        %v4657 = vpack.c.b16 %v4423, %v4421
        %v4658 = vpack.c.b16 %v4426, %v4424
        %v4659 = vpack.c.b16 %v4427, %v4425
        %v4660 = vpack.c.b16 %v4430, %v4428
        %v4661 = vpack.c.b16 %v4431, %v4429
        %v4662 = vpack.c.b16 %v4434, %v4432
        %v4663 = vpack.c.b16 %v4435, %v4433
        %v4664 = vpack.c.b16 %v4438, %v4436
        %v4665 = vpack.c.b16 %v4439, %v4437
        %v4666 = vpack.c.b16 %v4442, %v4440
        %v4667 = vpack.c.b16 %v4443, %v4441
        %v4668 = vpack.c.b16 %v4446, %v4444
        %v4669 = vpack.c.b16 %v4447, %v4445
        %v4670 = vpack.c.b16 %v4450, %v4448
        %v4671 = vpack.c.b16 %v4451, %v4449
        %v4672 = vpack.c.b16 %v4454, %v4452
        %v4673 = vpack.c.b16 %v4455, %v4453
        %v4674 = vpack.c.b16 %v4458, %v4456
        %v4675 = vpack.c.b16 %v4459, %v4457
        %v4676 = vpack.c.b16 %v4462, %v4460
        %v4677 = vpack.c.b16 %v4463, %v4461
        %v4678 = vpack.c.b16 %v4466, %v4464
        %v4679 = vpack.c.b16 %v4467, %v4465
        %v4680 = vpack.c.b16 %v4470, %v4468
        %v4681 = vpack.c.b16 %v4471, %v4469
        %v4682 = vpack.c.b16 %v4474, %v4472
        %v4683 = vpack.c.b16 %v4475, %v4473
        %v4684 = vpack.c.b16 %v4478, %v4476
        %v4685 = vpack.c.b16 %v4479, %v4477
        %v4686 = vpack.c.b16 %v4482, %v4480
        %v4687 = vpack.c.b16 %v4483, %v4481
        %v4688 = vpack.c.b16 %v4486, %v4484
        %v4689 = vpack.c.b16 %v4487, %v4485
        %v4690 = vpack.c.b16 %v4490, %v4488
        %v4691 = vpack.c.b16 %v4491, %v4489
        %v4692 = vpack.c.b16 %v4494, %v4492
        %v4693 = vpack.c.b16 %v4495, %v4493
        %v4694 = vpack.c.b16 %v4498, %v4496
        %v4695 = vpack.c.b16 %v4499, %v4497
        %v4696 = vpack.c.b16 %v4502, %v4500
        %v4697 = vpack.c.b16 %v4503, %v4501
        %v4698 = vpack.c.b16 %v4506, %v4504
        %v4699 = vpack.c.b16 %v4507, %v4505
        %v4700 = vpack.c.b16 %v4510, %v4508
        %v4701 = vpack.c.b16 %v4511, %v4509
        %v4702 = vpack.c.b16 %v4514, %v4512
        %v4703 = vpack.c.b16 %v4515, %v4513
        %v4704 = vpack.c.b16 %v4518, %v4516
        %v4705 = vpack.c.b16 %v4519, %v4517
        %v4706 = vpack.c.b16 %v4522, %v4520
        %v4707 = vpack.c.b16 %v4523, %v4521
        %v4708 = vpack.c.b16 %v4526, %v4524
        %v4709 = vpack.c.b16 %v4527, %v4525
        %v4710 = vpack.c.b16 %v4530, %v4528
        %v4711 = vpack.c.b16 %v4531, %v4529
        %v4712 = vpack.c.b16 %v4534, %v4532
        %v4713 = vpack.c.b16 %v4535, %v4533
        %v4714 = vpack.c.b16 %v4538, %v4536
        %v4715 = vpack.c.b16 %v4539, %v4537
        %v4716 = vpack.c.b16 %v4542, %v4540
        %v4717 = vpack.c.b16 %v4543, %v4541
        %v4718 = vpack.c.b16 %v4546, %v4544
        %v4719 = vpack.c.b16 %v4547, %v4545
        %v4720 = vpack.c.b16 %v4550, %v4548
        %v4721 = vpack.c.b16 %v4551, %v4549
        %v4722 = vpack.c.b16 %v4554, %v4552
        %v4723 = vpack.c.b16 %v4555, %v4553
        %v4724 = vpack.c.b16 %v4558, %v4556
        %v4725 = vpack.c.b16 %v4559, %v4557
        %v4726 = vpack.c.b16 %v4562, %v4560
        %v4727 = vpack.c.b16 %v4563, %v4561
        %v4728 = vpack.c.b16 %v4566, %v4564
        %v4729 = vpack.c.b16 %v4567, %v4565
        %v4730 = vpack.c.b16 %v4570, %v4568
        %v4731 = vpack.c.b16 %v4571, %v4569
        %v4732 = vpack.c.b16 %v4574, %v4572
        %v4733 = vpack.c.b16 %v4575, %v4573
        %v4734 = vpack.c.b16 %v4578, %v4576
        %v4735 = vpack.c.b16 %v4579, %v4577
        %v4736 = vpack.c.b16 %v4582, %v4580
        %v4737 = vpack.c.b16 %v4583, %v4581
        %v4738 = vpack.c.b16 %v4586, %v4584
        %v4739 = vpack.c.b16 %v4587, %v4585
        %v4740 = vpack.c.b16 %v4590, %v4588
        %v4741 = vpack.c.b16 %v4591, %v4589
        %v4742 = vpack.c.b16 %v4594, %v4592
        %v4743 = vpack.c.b16 %v4595, %v4593
        %v4744 = vpack.c.b16 %v4598, %v4596
        %v4745 = vpack.c.b16 %v4599, %v4597
        %v4746 = vpack.c.b16 %v4602, %v4600
        %v4747 = vpack.c.b16 %v4603, %v4601
        %v4748 = vpack.c.b16 %v4606, %v4604
        %v4749 = vpack.c.b16 %v4607, %v4605
        %v4750 = vpack.c.b16 %v4610, %v4608
        %v4751 = vpack.c.b16 %v4611, %v4609
        %v4752 = vpack.c.b16 %v4614, %v4612
        %v4753 = vpack.c.b16 %v4615, %v4613
        %v4754 = vpack.c.b16 %v4618, %v4616
        %v4755 = vpack.c.b16 %v4619, %v4617
        %v4756 = vpack.c.b16 %v4622, %v4620
        %v4757 = vpack.c.b16 %v4623, %v4621
        %v4758 = vpack.c.b16 %v4626, %v4624
        %v4759 = vpack.c.b16 %v4627, %v4625
        %v4760 = vpack.c.b16 %v4630, %v4628
        %v4761 = vpack.c.b16 %v4631, %v4629
        %v4762 = vpack.c.b16 %v4634, %v4632
        %v4763 = vpack.c.b16 %v4635, %v4633
        %4892 = vmatprep.subr.bf16.mxu0 %v4651
        %4893 = vmatpush1.bf16.msra.mxu0 %v4650
        %4894 = vmatprep.subr.bf16.mxu0 %v4649
        %4895 = vmatpush1.bf16.msra.mxu0 %v4648
        %4896 = vmatprep.subr.bf16.mxu0 %v4647
        %4897 = vmatpush1.bf16.msra.mxu0 %v4646
        %4898 = vmatprep.subr.bf16.mxu0 %v4645
        %4899 = vmatpush1.bf16.msra.mxu0 %v4644
        %4900 = vmatprep.subr.bf16.mxu0 %v4643
        %4901 = vmatpush1.bf16.msra.mxu0 %v4642
        %4902 = vmatprep.subr.bf16.mxu0 %v4641
        %4903 = vmatpush1.bf16.msra.mxu0 %v4640
        %4904 = vmatprep.subr.bf16.mxu0 %v4639
        %4905 = vmatpush1.bf16.msra.mxu0 %v4638
        %4906 = vmatprep.subr.bf16.mxu0 %v4637
        %4907 = vmatpush1.bf16.msra.mxu0 %v4636
        %4908 = vmatprep.subr.bf16.mxu0 %v4667
        %4909 = vmatpush2.bf16.msra.mxu0 %v4666
        %4910 = vmatprep.subr.bf16.mxu0 %v4665
        %4911 = vmatpush2.bf16.msra.mxu0 %v4664
        %4912 = vmatprep.subr.bf16.mxu0 %v4663
        %4913 = vmatpush2.bf16.msra.mxu0 %v4662
        %4914 = vmatprep.subr.bf16.mxu0 %v4661
        %4915 = vmatpush2.bf16.msra.mxu0 %v4660
        %4916 = vmatprep.subr.bf16.mxu0 %v4659
        %4917 = vmatpush2.bf16.msra.mxu0 %v4658
        %4918 = vmatprep.subr.bf16.mxu0 %v4657
        %4919 = vmatpush2.bf16.msra.mxu0 %v4656
        %4920 = vmatprep.subr.bf16.mxu0 %v4655
        %4921 = vmatpush2.bf16.msra.mxu0 %v4654
        %4922 = vmatprep.subr.bf16.mxu0 %v4653
        %4923 = vmatpush2.bf16.msra.mxu0 %v4652
        %4924 = vmatprep.mubr.bf16.mxu0 %v4105
        %4925 = vmatmul.mubr.bf16.gmra.mxu0 %v4104
        %v4926 = vpop.f32.mrf.mxu0
        %v4927 = vadd.f32 %v4245, %v4926
        %v4928 = vpop.f32.mrf.mxu0
        %v4929 = vadd.f32 %v4249, %v4928
        %v4930 = vpop.f32.mrf.mxu0
        %v4931 = vpop.f32.mrf.mxu0
        %4932 = vdwg.mxu0
        %4933 = vmatprep.subr.bf16.mxu0 %v4683
        %4934 = vmatpush1.bf16.msra.mxu0 %v4682
        %4935 = vmatprep.subr.bf16.mxu0 %v4681
        %4936 = vmatpush1.bf16.msra.mxu0 %v4680
        %4937 = vmatprep.subr.bf16.mxu0 %v4679
        %4938 = vmatpush1.bf16.msra.mxu0 %v4678
        %4939 = vmatprep.subr.bf16.mxu0 %v4677
        %4940 = vmatpush1.bf16.msra.mxu0 %v4676
        %4941 = vmatprep.subr.bf16.mxu0 %v4675
        %4942 = vmatpush1.bf16.msra.mxu0 %v4674
        %4943 = vmatprep.subr.bf16.mxu0 %v4673
        %4944 = vmatpush1.bf16.msra.mxu0 %v4672
        %4945 = vmatprep.subr.bf16.mxu0 %v4671
        %4946 = vmatpush1.bf16.msra.mxu0 %v4670
        %4947 = vmatprep.subr.bf16.mxu0 %v4669
        %4948 = vmatpush1.bf16.msra.mxu0 %v4668
        %4949 = vmatprep.subr.bf16.mxu0 %v4699
        %4950 = vmatpush2.bf16.msra.mxu0 %v4698
        %4951 = vmatprep.subr.bf16.mxu0 %v4697
        %4952 = vmatpush2.bf16.msra.mxu0 %v4696
        %4953 = vmatprep.subr.bf16.mxu0 %v4695
        %4954 = vmatpush2.bf16.msra.mxu0 %v4694
        %4955 = vmatprep.subr.bf16.mxu0 %v4693
        %4956 = vmatpush2.bf16.msra.mxu0 %v4692
        %4957 = vmatprep.subr.bf16.mxu0 %v4691
        %4958 = vmatpush2.bf16.msra.mxu0 %v4690
        %4959 = vmatprep.subr.bf16.mxu0 %v4689
        %4960 = vmatpush2.bf16.msra.mxu0 %v4688
        %4961 = vmatprep.subr.bf16.mxu0 %v4687
        %4962 = vmatpush2.bf16.msra.mxu0 %v4686
        %4963 = vmatprep.subr.bf16.mxu0 %v4685
        %4964 = vmatpush2.bf16.msra.mxu0 %v4684
        %4965 = vmatprep.mubr.bf16.mxu0 %v4107
        %4966 = vmatmul.mubr.bf16.gmra.mxu0 %v4106
        %v4967 = vpop.f32.mrf.mxu0
        %v4968 = vadd.f32 %v4927, %v4967
        %v4969 = vpop.f32.mrf.mxu0
        %v4970 = vadd.f32 %v4929, %v4969
        %v4971 = vpop.f32.mrf.mxu0
        %v4972 = vpop.f32.mrf.mxu0
        %4973 = vdwg.mxu0
        %4974 = vmatprep.subr.bf16.mxu0 %v4715
        %4975 = vmatpush1.bf16.msra.mxu0 %v4714
        %4976 = vmatprep.subr.bf16.mxu0 %v4713
        %4977 = vmatpush1.bf16.msra.mxu0 %v4712
        %4978 = vmatprep.subr.bf16.mxu0 %v4711
        %4979 = vmatpush1.bf16.msra.mxu0 %v4710
        %4980 = vmatprep.subr.bf16.mxu0 %v4709
        %4981 = vmatpush1.bf16.msra.mxu0 %v4708
        %4982 = vmatprep.subr.bf16.mxu0 %v4707
        %4983 = vmatpush1.bf16.msra.mxu0 %v4706
        %4984 = vmatprep.subr.bf16.mxu0 %v4705
        %4985 = vmatpush1.bf16.msra.mxu0 %v4704
        %4986 = vmatprep.subr.bf16.mxu0 %v4703
        %4987 = vmatpush1.bf16.msra.mxu0 %v4702
        %4988 = vmatprep.subr.bf16.mxu0 %v4701
        %4989 = vmatpush1.bf16.msra.mxu0 %v4700
        %4990 = vmatprep.subr.bf16.mxu0 %v4731
        %4991 = vmatpush2.bf16.msra.mxu0 %v4730
        %4992 = vmatprep.subr.bf16.mxu0 %v4729
        %4993 = vmatpush2.bf16.msra.mxu0 %v4728
        %4994 = vmatprep.subr.bf16.mxu0 %v4727
        %4995 = vmatpush2.bf16.msra.mxu0 %v4726
        %4996 = vmatprep.subr.bf16.mxu0 %v4725
        %4997 = vmatpush2.bf16.msra.mxu0 %v4724
        %4998 = vmatprep.subr.bf16.mxu0 %v4723
        %4999 = vmatpush2.bf16.msra.mxu0 %v4722
        %5000 = vmatprep.subr.bf16.mxu0 %v4721
        %5001 = vmatpush2.bf16.msra.mxu0 %v4720
        %5002 = vmatprep.subr.bf16.mxu0 %v4719
        %5003 = vmatpush2.bf16.msra.mxu0 %v4718
        %5004 = vmatprep.subr.bf16.mxu0 %v4717
        %5005 = vmatpush2.bf16.msra.mxu0 %v4716
        %5006 = vmatprep.mubr.bf16.mxu0 %v4109
        %5007 = vmatmul.mubr.bf16.gmra.mxu0 %v4108
        %v5008 = vpop.f32.mrf.mxu0
        %v5009 = vadd.f32 %v4968, %v5008
        %v5010 = vpop.f32.mrf.mxu0
        %v5011 = vadd.f32 %v4970, %v5010
        %v5012 = vpop.f32.mrf.mxu0
        %v5013 = vpop.f32.mrf.mxu0
        %5014 = vdwg.mxu0
        %5015 = vmatprep.subr.bf16.mxu0 %v4747
        %5016 = vmatpush1.bf16.msra.mxu0 %v4746
        %5017 = vmatprep.subr.bf16.mxu0 %v4745
        %5018 = vmatpush1.bf16.msra.mxu0 %v4744
        %5019 = vmatprep.subr.bf16.mxu0 %v4743
        %5020 = vmatpush1.bf16.msra.mxu0 %v4742
        %5021 = vmatprep.subr.bf16.mxu0 %v4741
        %5022 = vmatpush1.bf16.msra.mxu0 %v4740
        %5023 = vmatprep.subr.bf16.mxu0 %v4739
        %5024 = vmatpush1.bf16.msra.mxu0 %v4738
        %5025 = vmatprep.subr.bf16.mxu0 %v4737
        %5026 = vmatpush1.bf16.msra.mxu0 %v4736
        %5027 = vmatprep.subr.bf16.mxu0 %v4735
        %5028 = vmatpush1.bf16.msra.mxu0 %v4734
        %5029 = vmatprep.subr.bf16.mxu0 %v4733
        %5030 = vmatpush1.bf16.msra.mxu0 %v4732
        %5031 = vmatprep.subr.bf16.mxu0 %v4763
        %5032 = vmatpush2.bf16.msra.mxu0 %v4762
        %5033 = vmatprep.subr.bf16.mxu0 %v4761
        %5034 = vmatpush2.bf16.msra.mxu0 %v4760
        %5035 = vmatprep.subr.bf16.mxu0 %v4759
        %5036 = vmatpush2.bf16.msra.mxu0 %v4758
        %5037 = vmatprep.subr.bf16.mxu0 %v4757
        %5038 = vmatpush2.bf16.msra.mxu0 %v4756
        %5039 = vmatprep.subr.bf16.mxu0 %v4755
        %5040 = vmatpush2.bf16.msra.mxu0 %v4754
        %5041 = vmatprep.subr.bf16.mxu0 %v4753
        %5042 = vmatpush2.bf16.msra.mxu0 %v4752
        %5043 = vmatprep.subr.bf16.mxu0 %v4751
        %5044 = vmatpush2.bf16.msra.mxu0 %v4750
        %5045 = vmatprep.subr.bf16.mxu0 %v4749
        %5046 = vmatpush2.bf16.msra.mxu0 %v4748
        %5047 = vmatprep.mubr.bf16.mxu0 %v4111
        %5048 = vmatmul.mubr.bf16.gmra.mxu0 %v4110
        %v5049 = vpop.f32.mrf.mxu0
        %v5050 = vadd.f32 %v5009, %v5049
        %v5051 = vpop.f32.mrf.mxu0
        %v5052 = vadd.f32 %v5011, %v5051
        %v5053 = vpop.f32.mrf.mxu0
        %v5054 = vpop.f32.mrf.mxu0
        %5055 = vdwg.mxu0
        %v5056 = vtanh.pop %v5050
        %v5057 = vtanh.pop %v5052
        %5058 = vst [vmem:[%s797] sm:$0xff] %v5056
        %5059 = vst [vmem:[%s797 + $0x8] sm:$0xff] %v5057
        %s5060 = sand.u32 %s417, 1
        %s5061 = scalar_lea.sflag [#allocation4], %s5060
        %s5062 = sand.u32 %s417, 1
        %s5063 = smul.addr %s5062, 16
        %s5064 = scalar_lea.vmem [#allocation29], %s5063
        // Predicated region
        $region157: #{tpu_custom_call.1} parent=87 // pred_check
          %p5065 = pneg %p427
        $region158: #{tpu_custom_call.1} parent=87 // pred_check_branch
          %5067 = sbr.rel (%p5065) target = $region160
        $region159: #{tpu_custom_call.1} parent=87 // pred_region
          %s5068 = smul.u32 2, %s42
          %s5070 = ssub.s32 256, 256
          %5071 = vsyncadd %s5061, %s5070
          %s5072 = smul.addr %s5068, 128
          %s5073 = scalar_lea.hbm %s17, %s5072
          %s5075 = sshll.u32 %s5064, 4
          %s5076 = int_to_ptr.vmem [resolvable:$true] %s5075
          %5078 = dma.vmem_to_hbm [thread:$0]  %s5076, 256, %s5073, %s5061
        $region160: #{tpu_custom_call.1} parent=87 // pred_fallthru
          _
      $region88: #{tpu_custom_call.1} parent=5 // pred_fallthru
        _
      %p5079 = scmp.le.s32.totalorder 2, %s37
      // Predicated region
      $region161: #{tpu_custom_call.1} parent=5 // pred_check
        %p5080 = pneg %p5079
      $region162: #{tpu_custom_call.1} parent=5 // pred_check_branch
        %5082 = sbr.rel (%p5080) target = $region164
      $region163: #{tpu_custom_call.1} parent=5 // pred_region
        %s5083 = ssub.s32 %s37, 2
        // Predicated region
        $region165: #{tpu_custom_call.1} parent=163 // pred_check
          %p5084 = pneg %p433
        $region166: #{tpu_custom_call.1} parent=163 // pred_check_branch
          %5086 = sbr.rel (%p5084) target = $region168
        $region167: #{tpu_custom_call.1} parent=163 // pred_region
          %s5087 = sand.u32 %s418, 1
          %s5088 = scalar_lea.sflag [#allocation4], %s5087
          %s5089 = sand.u32 %s418, 1
          %s5090 = smul.addr %s5089, 16
          %s5091 = scalar_lea.vmem [#allocation29], %s5090
          %5092 = dma.done %s5088, 256
        $region168: #{tpu_custom_call.1} parent=163 // pred_fallthru
          _
      $region164: #{tpu_custom_call.1} parent=5 // pred_fallthru
        _
    $region6: #{tpu_custom_call.1} parent=1 // loop_footer
      %s41 = sadd.s32 1, %s37
    $region7: #{tpu_custom_call.1} parent=1 // loop_footer_branch
      %36 = sbr.rel target = $region3
    $region8: #{tpu_custom_call.1} parent=1 // loop_exit
      _
    %5093 = vsyncpa [#allocation3], 1
    %s5094 = scalar_lea.sflag [#allocation3], 1
    %5095 = vsyncpa %s5094, 1
    %5096 = vsyncpa [#allocation6], 1
    %5097 = vsyncpa [#allocation9], 1
    %5098 = vsyncpa [#allocation12], 1
    %5099 = vsyncpa [#allocation15], 1
    %5100 = vsyncpa [#allocation18], 1
    %5101 = vsyncpa [#allocation21], 1
    %5102 = vsyncpa [#allocation24], 1
    %5103 = vsyncpa [#allocation27], 1
    %s5104 = scalar_lea.sflag [#allocation27], 1
    %5105 = vsyncpa %s5104, 1
    %5106 = vsyncpa [#allocation4], 1
    %s5107 = scalar_lea.sflag [#allocation4], 1
    %5108 = vsyncpa %s5107, 1

</llo_original>
